<compile_context>
chip_gen: v7x
topology: tpu7x:2x2x1
jax: 0.10.0
libtpu: 0.0.40
codegen_flags: <defaults>
</compile_context>

<pallas_src>
import functools

import jax
import jax.numpy as jnp
from jax.experimental import pallas as pl
from jax.experimental.pallas import tpu as pltpu

_VMEM = pl.BlockSpec(memory_space=pltpu.MemorySpace.VMEM)


# --------------------------- Pallas kernels ---------------------------------

def _fused_conv_kernel(*refs, K, stride, Lout, pre_act, post_relu,
                       add_identity, pool_ks, project_id):
    """Fused (pre BN+ReLU) -> K-tap SAME conv -> (bias/BN[+ReLU]) -> (+ residual) kernel.

    Ref order: x, w, post_scale, post_shift, [pre_scale, pre_shift],
               [identity, [id_proj]], out.
    Per-sample blocks (batch dim squeezed): x (Lp, Cin), out (Lout, Cout).
    """
    it = iter(refs)
    x_ref = next(it)
    w_ref = next(it)          # (K, Cin, Cout) bf16
    ps_ref = next(it)         # (1, Cout) f32
    pt_ref = next(it)         # (1, Cout) f32
    pa_ref = pb_ref = None
    if pre_act:
        pa_ref = next(it)     # (1, Cin) f32
        pb_ref = next(it)     # (1, Cin) f32
    id_ref = p_ref = None
    if add_identity:
        id_ref = next(it)     # (Lid, Cid) f32
        if project_id:
            p_ref = next(it)  # (Cid, Cout) f32, 0/1 channel-placement matrix
    o_ref = next(it)          # (Lout, Cout) f32

    cout = o_ref.shape[-1]
    acc = jnp.zeros((Lout, cout), dtype=jnp.float32)
    for k in range(K):
        if stride > 1:
            xk = x_ref[pl.ds(k, Lout, stride=stride), :]
        else:
            xk = x_ref[pl.ds(k, Lout), :]
        if pre_act:
            # BN1 (folded) + ReLU on the conv input, f32 VPU math.
            xk = jnp.maximum(xk * pa_ref[...] + pb_ref[...], 0.0)
        acc = acc + jnp.dot(xk.astype(jnp.bfloat16), w_ref[k],
                            preferred_element_type=jnp.float32)

    # Conv bias + folded BN (scale/shift), then optional ReLU -- all in f32.
    y = acc * ps_ref[...] + pt_ref[...]
    if post_relu:
        y = jnp.maximum(y, 0.0)

    if add_identity:
        if pool_ks > 1:
            # SAME max-pool (zero-padded, matching the reference ConstantPad1d(0)) done
            # in-kernel via strided taps -- no HBM transpose / extra pass.
            idv = id_ref[pl.ds(0, Lout, stride=pool_ks), :]
            for j in range(1, pool_ks):
                idv = jnp.maximum(idv, id_ref[pl.ds(j, Lout, stride=pool_ks), :])
        else:
            idv = id_ref[...]
        if project_id:
            # Channel-pad placement of the identity done as a tiny 0/1 matmul (exact).
            y = y + jnp.dot(idv, p_ref[...], preferred_element_type=jnp.float32)
        else:
            y = y + idv

    o_ref[...] = y.astype(o_ref.dtype)


def _head_kernel(x_ref, s_ref, t_ref, w_ref, b_ref, o_ref, *, final_act, inv_len):
    """Fused final BN+ReLU -> AdaptiveAvgPool1d(1) (as sum * 1/L) -> Linear."""
    x = x_ref[...]                                     # (N, L, C) f32
    if final_act:
        x = jnp.maximum(x * s_ref[...] + t_ref[...], 0.0)
    pooled = jnp.sum(x, axis=1) * inv_len              # (N, C)
    o_ref[...] = (jnp.dot(pooled, w_ref[...], preferred_element_type=jnp.float32)
                  + b_ref[...]).astype(o_ref.dtype)


# --------------------------- conv wrapper ------------------------------------

def fused_conv(x, w_kcc, post_scale, post_shift, *, stride, K,
               pre=None, identity=None, pool_ks=1, id_proj=None, post_relu=True):
    """SAME 1-D conv with fused epilogues.

    x: (N, L, Cin) f32;  w_kcc: (K, Cin, Cout) bf16;
    post_scale/post_shift: per-Cout f32 (BN folded with the conv bias);
    pre: optional (scale, shift) applied with ReLU to the input (BN1+ReLU);
    identity: optional residual tensor (N, Lid, Cid) to add to the output, with optional
              SAME max-pool (pool_ks) and channel placement (id_proj) fused in-kernel.
    """
    N, L, Cin = x.shape
    Cout = w_kcc.shape[-1]
    Lout = -(-L // stride)
    p = max(0, (Lout - 1) * stride + K - L)
    xp = jnp.pad(x, ((0, 0), (p // 2, p - p // 2), (0, 0)))
    Lp = xp.shape[1]

    inputs = [xp, w_kcc, post_scale.reshape(1, Cout), post_shift.reshape(1, Cout)]
    in_specs = [
        pl.BlockSpec((None, Lp, Cin), lambda n: (n, 0, 0)),
        pl.BlockSpec((K, Cin, Cout), lambda n: (0, 0, 0)),
        pl.BlockSpec((1, Cout), lambda n: (0, 0)),
        pl.BlockSpec((1, Cout), lambda n: (0, 0)),
    ]

    pre_act = pre is not None
    if pre_act:
        a, b = pre
        inputs += [a.reshape(1, Cin), b.reshape(1, Cin)]
        in_specs += [pl.BlockSpec((1, Cin), lambda n: (0, 0)),
                     pl.BlockSpec((1, Cin), lambda n: (0, 0))]

    add_identity = identity is not None
    project_id = False
    if add_identity:
        idt = identity
        if pool_ks > 1:
            pp = pool_ks - 1
            idt = jnp.pad(idt, ((0, 0), (pp // 2, pp - pp // 2), (0, 0)))
            idt = idt[:, : Lout * pool_ks, :]
        Lid, Cid = idt.shape[1], idt.shape[2]
        inputs.append(idt)
        in_specs.append(pl.BlockSpec((None, Lid, Cid), lambda n: (n, 0, 0)))
        if id_proj is not None:
            project_id = True
            inputs.append(id_proj)
            in_specs.append(pl.BlockSpec(id_proj.shape, lambda n: (0, 0)))

    kernel = functools.partial(
        _fused_conv_kernel, K=K, stride=stride, Lout=Lout, pre_act=pre_act,
        post_relu=post_relu, add_identity=add_identity, pool_ks=pool_ks,
        project_id=project_id)

    return pl.pallas_call(
        kernel,
        out_shape=jax.ShapeDtypeStruct((N, Lout, Cout), jnp.float32),
        grid=(N,),
        in_specs=in_specs,
        out_specs=pl.BlockSpec((None, Lout, Cout), lambda n: (n, 0, 0)),
        compiler_params=pltpu.CompilerParams(dimension_semantics=("parallel",)),
    )(*inputs)


# --------------------------- model forward -----------------------------------

def basic_block_forward(x, bp, bcfg):
    K = bcfg["kernel_size"]
    eff_stride = bcfg["stride"] if bcfg["downsample"] else 1
    pre = None if bcfg["is_first"] else (bp["bn1_scale"], bp["bn1_shift"])
    # conv1: (optional BN1+ReLU pre-act) + conv + BN2 + ReLU, fully fused.  Dropout = identity.
    h = fused_conv(x, bp["conv1_w"], bp["conv1_post_scale"], bp["conv1_post_shift"],
                   stride=eff_stride, K=K, pre=pre, post_relu=True)
    # conv2: conv + bias + residual add (identity max-pooled / channel-placed in-kernel).
    out = fused_conv(h, bp["conv2_w"], bp["conv2_post_scale"], bp["conv2_post_shift"],
                     stride=1, K=K, identity=x,
                     pool_ks=eff_stride if bcfg["downsample"] else 1,
                     id_proj=bp.get("id_proj"), post_relu=False)
    return out


def resnet1d_forward(x_ncl, params, blocks_cfg, cfg):
    x = jnp.transpose(x_ncl, (0, 2, 1)).astype(jnp.float32)   # (N, C, L) -> (N, L, C)
    out = fused_conv(x, params["first_conv_w"], params["first_post_scale"],
                     params["first_post_shift"], stride=1, K=cfg["kernel_size"],
                     post_relu=True)
    for bcfg, bp in zip(blocks_cfg, params["blocks"]):
        out = basic_block_forward(out, bp, bcfg)

    N, L, C = out.shape
    ncls = params["dense_w_t"].shape[1]
    head = functools.partial(_head_kernel, final_act=cfg["final_act"], inv_len=1.0 / L)
    logits = pl.pallas_call(
        head,
        out_shape=jax.ShapeDtypeStruct((N, ncls), jnp.float32),
        in_specs=[_VMEM] * 5,
        out_specs=_VMEM,
    )(out, params["final_bn_scale"].reshape(1, 1, C),
      params["final_bn_shift"].reshape(1, 1, C),
      params["dense_w_t"], params["dense_b"].reshape(1, ncls))
    return logits


# --------------------------- config & params ---------------------------------

def build_block_config(cfg):
    n_block = cfg["n_block"]
    downsample_gap = cfg["downsample_gap"]
    if downsample_gap is None:
        downsample_gap = n_block // 8
    increasefilter_gap = cfg["increasefilter_gap"]
    if increasefilter_gap is None:
        increasefilter_gap = n_block // 4
    base_filters = cfg["base_filters"]
    blocks = []
    out_channels = base_filters
    for i_block in range(n_block):
        is_first = i_block == 0
        downsample = (i_block % downsample_gap == 1)
        if is_first:
            in_ch = base_filters
            out_ch = in_ch
        else:
            in_ch = int(base_filters * 2 ** ((i_block - 1) // increasefilter_gap))
            if i_block % increasefilter_gap == 0 and i_block != 0:
                out_ch = in_ch * 2
            else:
                out_ch = in_ch
        blocks.append(dict(in_ch=in_ch, out_ch=out_ch,
                           kernel_size=cfg["kernel_size"], stride=cfg["stride"],
                           downsample=downsample, is_first=is_first))
        out_channels = out_ch
    return blocks, out_channels


def _bn_fold(key, c):
    k1, k2, k3, k4 = jax.random.split(key, 4)
    gamma = 1.0 + 0.1 * jax.random.normal(k1, (c,), jnp.float32)
    beta = 0.1 * jax.random.normal(k2, (c,), jnp.float32)
    mean = 0.1 * jax.random.normal(k3, (c,), jnp.float32)
    var = 0.5 + jnp.abs(jax.random.normal(k4, (c,), jnp.float32))
    scale = gamma * jax.lax.rsqrt(var + 1e-5)
    shift = beta - mean * scale
    return scale, shift


def _conv_init(key, cin, cout, k):
    k1, k2 = jax.random.split(key)
    w = 0.1 * jax.random.normal(k1, (cout, cin, k), jnp.float32)   # PyTorch (Cout, Cin, K)
    b = 0.1 * jax.random.normal(k2, (cout,), jnp.float32)
    return w, b


def _prep_conv_w(w):
    # (Cout, Cin, K) -> kernel layout (K, Cin, Cout), bf16 MXU operands.
    return jnp.transpose(w, (2, 1, 0)).astype(jnp.bfloat16)


def _make_id_proj(cin, cout):
    # 0/1 matrix placing `cin` identity channels into the middle of `cout` output channels
    # (matches the F.pad(ch1, ch2) channel padding of the reference BasicBlock).
    ch1 = (cout - cin) // 2
    p = jnp.zeros((cin, cout), jnp.float32)
    return p.at[jnp.arange(cin), ch1 + jnp.arange(cin)].set(1.0)


def init_params(key, cfg, blocks_cfg, final_ch):
    keys = iter(jax.random.split(key, 4 + 4 * len(blocks_cfg)))
    params = {}

    w0, b0 = _conv_init(next(keys), cfg["in_channels"], cfg["base_filters"], cfg["kernel_size"])
    s0, t0 = _bn_fold(next(keys), cfg["base_filters"])
    params["first_conv_w"] = _prep_conv_w(w0)
    params["first_post_scale"] = s0
    params["first_post_shift"] = b0 * s0 + t0          # conv bias folded into BN shift

    blocks = []
    for b in blocks_cfg:
        bp = {}
        bp["bn1_scale"], bp["bn1_shift"] = _bn_fold(next(keys), b["in_ch"])
        w1, b1 = _conv_init(next(keys), b["in_ch"], b["out_ch"], b["kernel_size"])
        s2, t2 = _bn_fold(next(keys), b["out_ch"])
        w2, b2 = _conv_init(next(keys), b["out_ch"], b["out_ch"], b["kernel_size"])
        bp["conv1_w"] = _prep_conv_w(w1)
        bp["conv1_post_scale"] = s2
        bp["conv1_post_shift"] = b1 * s2 + t2           # conv1 bias folded into BN2 shift
        bp["conv2_w"] = _prep_conv_w(w2)
        bp["conv2_post_scale"] = jnp.ones((b["out_ch"],), jnp.float32)
        bp["conv2_post_shift"] = b2                     # conv2 has bias only (no BN after)
        if b["out_ch"] != b["in_ch"]:
            bp["id_proj"] = _make_id_proj(b["in_ch"], b["out_ch"])
        blocks.append(bp)
    params["blocks"] = blocks

    params["final_bn_scale"], params["final_bn_shift"] = _bn_fold(next(keys), final_ch)
    kd1, kd2 = jax.random.split(next(keys))
    dense_w = 0.1 * jax.random.normal(kd1, (cfg["n_classes"], final_ch), jnp.float32)
    params["dense_w_t"] = dense_w.T
    params["dense_b"] = 0.1 * jax.random.normal(kd2, (cfg["n_classes"],), jnp.float32)
    return params


# --------------------------- main ---------------------------------------------

if __name__ == "__main__":
    cfg = dict(
        in_channels=4, base_filters=8, kernel_size=3, stride=2, groups=1,
        n_block=4, n_classes=3, downsample_gap=2, increasefilter_gap=2,
        use_bn=True, final_act=True,
    )
    assert cfg["groups"] == 1   # see TODO(synk) above
    assert cfg["use_bn"]        # BN folded into scale/shift (inference mode)

    blocks_cfg, final_ch = build_block_config(cfg)

    key = jax.random.PRNGKey(0)
    pkey, xkey = jax.random.split(key)
    params = init_params(pkey, cfg, blocks_cfg, final_ch)

    # PyTorch-style input: (n_samples, n_channel, n_length)
    x = jax.random.normal(xkey, (2, cfg["in_channels"], 16), jnp.float32)

    fwd = jax.jit(functools.partial(resnet1d_forward, blocks_cfg=blocks_cfg, cfg=cfg))
    out = fwd(x, params)
    jax.block_until_ready(out)

    assert out.shape == (2, cfg["n_classes"]), out.shape
    print("KERNEL_OK")
</pallas_src>

<mosaic_0001>
module attributes {stable_mosaic.version = 11 : i64} {
  func.func @_fused_conv_kernel(%arg0: i32, %arg1: memref<1x18x4xf32, #tpu.memory_space<vmem>>, %arg2: memref<3x4x8xbf16, #tpu.memory_space<vmem>>, %arg3: memref<1x8xf32, #tpu.memory_space<vmem>>, %arg4: memref<1x8xf32, #tpu.memory_space<vmem>>, %arg5: memref<1x16x8xf32, #tpu.memory_space<vmem>>) attributes {dimension_semantics = [#tpu.dimension_semantics<parallel>], iteration_bounds = array<i64: 2>, scalar_prefetch = 0 : i64, scratch_operands = 0 : i64, tpu.core_type = #tpu.core_type<tc>, window_params = [{transform_indices = @transform_0, window_bounds = array<i64: 1, 18, 4>}, {pipeline_mode = #tpu.pipeline_mode<synchronous>, transform_indices = @transform_1, window_bounds = array<i64: 3, 4, 8>}, {pipeline_mode = #tpu.pipeline_mode<synchronous>, transform_indices = @transform_2, window_bounds = array<i64: 1, 8>}, {pipeline_mode = #tpu.pipeline_mode<synchronous>, transform_indices = @transform_3, window_bounds = array<i64: 1, 8>}, {transform_indices = @transform_4, window_bounds = array<i64: 1, 16, 8>}]} {
    %cst = arith.constant 0.000000e+00 : f32
    %0 = vector.broadcast %cst : f32 to vector<16x8xf32>
    %c0 = arith.constant 0 : index
    %c0_0 = arith.constant 0 : index
    %c0_1 = arith.constant 0 : index
    %1 = vector.load %arg1[%c0, %c0_0, %c0_1] : memref<1x18x4xf32, #tpu.memory_space<vmem>>, vector<1x16x4xf32>
    %2 = vector.shape_cast %1 : vector<1x16x4xf32> to vector<16x4xf32>
    %3 = arith.truncf %2 : vector<16x4xf32> to vector<16x4xbf16>
    %c0_2 = arith.constant 0 : index
    %c0_3 = arith.constant 0 : index
    %c0_4 = arith.constant 0 : index
    %4 = vector.load %arg2[%c0_2, %c0_3, %c0_4] : memref<3x4x8xbf16, #tpu.memory_space<vmem>>, vector<1x4x8xbf16>
    %5 = vector.shape_cast %4 : vector<1x4x8xbf16> to vector<4x8xbf16>
    %cst_5 = arith.constant dense<0.000000e+00> : vector<16x8xf32>
    %6 = tpu.matmul %3, %5, %cst_5 {dimension_numbers = #tpu.dot_dimension_numbers<[1], [0], [0], [1], [0, 0, 1, 1], [], []>} : vector<16x4xbf16>, vector<4x8xbf16>, vector<16x8xf32> -> vector<16x8xf32>
    %7 = arith.addf %0, %6 : vector<16x8xf32>
    %c0_6 = arith.constant 0 : index
    %c1 = arith.constant 1 : index
    %c0_7 = arith.constant 0 : index
    %8 = vector.load %arg1[%c0_6, %c1, %c0_7] : memref<1x18x4xf32, #tpu.memory_space<vmem>>, vector<1x16x4xf32>
    %9 = vector.shape_cast %8 : vector<1x16x4xf32> to vector<16x4xf32>
    %10 = arith.truncf %9 : vector<16x4xf32> to vector<16x4xbf16>
    %c1_8 = arith.constant 1 : index
    %c0_9 = arith.constant 0 : index
    %c0_10 = arith.constant 0 : index
    %11 = vector.load %arg2[%c1_8, %c0_9, %c0_10] : memref<3x4x8xbf16, #tpu.memory_space<vmem>>, vector<1x4x8xbf16>
    %12 = vector.shape_cast %11 : vector<1x4x8xbf16> to vector<4x8xbf16>
    %cst_11 = arith.constant dense<0.000000e+00> : vector<16x8xf32>
    %13 = tpu.matmul %10, %12, %cst_11 {dimension_numbers = #tpu.dot_dimension_numbers<[1], [0], [0], [1], [0, 0, 1, 1], [], []>} : vector<16x4xbf16>, vector<4x8xbf16>, vector<16x8xf32> -> vector<16x8xf32>
    %14 = arith.addf %7, %13 : vector<16x8xf32>
    %c0_12 = arith.constant 0 : index
    %c2 = arith.constant 2 : index
    %c0_13 = arith.constant 0 : index
    %15 = vector.load %arg1[%c0_12, %c2, %c0_13] : memref<1x18x4xf32, #tpu.memory_space<vmem>>, vector<1x16x4xf32>
    %16 = vector.shape_cast %15 : vector<1x16x4xf32> to vector<16x4xf32>
    %17 = arith.truncf %16 : vector<16x4xf32> to vector<16x4xbf16>
    %c2_14 = arith.constant 2 : index
    %c0_15 = arith.constant 0 : index
    %c0_16 = arith.constant 0 : index
    %18 = vector.load %arg2[%c2_14, %c0_15, %c0_16] : memref<3x4x8xbf16, #tpu.memory_space<vmem>>, vector<1x4x8xbf16>
    %19 = vector.shape_cast %18 : vector<1x4x8xbf16> to vector<4x8xbf16>
    %cst_17 = arith.constant dense<0.000000e+00> : vector<16x8xf32>
    %20 = tpu.matmul %17, %19, %cst_17 {dimension_numbers = #tpu.dot_dimension_numbers<[1], [0], [0], [1], [0, 0, 1, 1], [], []>} : vector<16x4xbf16>, vector<4x8xbf16>, vector<16x8xf32> -> vector<16x8xf32>
    %21 = arith.addf %14, %20 : vector<16x8xf32>
    %c0_18 = arith.constant 0 : index
    %c0_19 = arith.constant 0 : index
    %22 = vector.load %arg3[%c0_18, %c0_19] : memref<1x8xf32, #tpu.memory_space<vmem>>, vector<1x8xf32>
    %23 = vector.broadcast %22 : vector<1x8xf32> to vector<16x8xf32>
    %24 = arith.mulf %21, %23 : vector<16x8xf32>
    %c0_20 = arith.constant 0 : index
    %c0_21 = arith.constant 0 : index
    %25 = vector.load %arg4[%c0_20, %c0_21] : memref<1x8xf32, #tpu.memory_space<vmem>>, vector<1x8xf32>
    %26 = vector.broadcast %25 : vector<1x8xf32> to vector<16x8xf32>
    %27 = arith.addf %24, %26 : vector<16x8xf32>
    %cst_22 = arith.constant 0.000000e+00 : f32
    %28 = vector.broadcast %cst_22 : f32 to vector<16x8xf32>
    %29 = arith.maximumf %27, %28 : vector<16x8xf32>
    %c0_23 = arith.constant 0 : index
    %c0_24 = arith.constant 0 : index
    %c0_25 = arith.constant 0 : index
    %30 = vector.load %arg5[%c0_23, %c0_24, %c0_25] : memref<1x16x8xf32, #tpu.memory_space<vmem>>, vector<1x16x8xf32>
    %31 = vector.shape_cast %30 : vector<1x16x8xf32> to vector<16x8xf32>
    %32 = vector.shape_cast %29 : vector<16x8xf32> to vector<1x16x8xf32>
    tpu.vector_store %arg5[%c0_23, %c0_24, %c0_25], %32 {strides = array<i32>} : memref<1x16x8xf32, #tpu.memory_space<vmem>>, vector<1x16x8xf32>,
    return
  }
  func.func @transform_0(%arg0: i32) -> (i32, i32, i32) {
    %c0_i32 = arith.constant 0 : i32
    %c0_i32_0 = arith.constant 0 : i32
    %c0_i32_1 = arith.constant 0 : i32
    return %arg0, %c0_i32, %c0_i32_0 : i32, i32, i32
  }
  func.func @transform_1(%arg0: i32) -> (i32, i32, i32) {
    %c0_i32 = arith.constant 0 : i32
    %c0_i32_0 = arith.constant 0 : i32
    %c0_i32_1 = arith.constant 0 : i32
    %c0_i32_2 = arith.constant 0 : i32
    return %c0_i32, %c0_i32_0, %c0_i32_1 : i32, i32, i32
  }
  func.func @transform_2(%arg0: i32) -> (i32, i32) {
    %c0_i32 = arith.constant 0 : i32
    %c0_i32_0 = arith.constant 0 : i32
    %c0_i32_1 = arith.constant 0 : i32
    return %c0_i32, %c0_i32_0 : i32, i32
  }
  func.func @transform_3(%arg0: i32) -> (i32, i32) {
    %c0_i32 = arith.constant 0 : i32
    %c0_i32_0 = arith.constant 0 : i32
    %c0_i32_1 = arith.constant 0 : i32
    return %c0_i32, %c0_i32_0 : i32, i32
  }
  func.func @transform_4(%arg0: i32) -> (i32, i32, i32) {
    %c0_i32 = arith.constant 0 : i32
    %c0_i32_0 = arith.constant 0 : i32
    %c0_i32_1 = arith.constant 0 : i32
    return %arg0, %c0_i32, %c0_i32_0 : i32, i32, i32
  }
}

module attributes {stable_mosaic.version = 11 : i64} {
  func.func @_fused_conv_kernel(%arg0: i32, %arg1: memref<1x18x8xf32, #tpu.memory_space<vmem>>, %arg2: memref<3x8x8xbf16, #tpu.memory_space<vmem>>, %arg3: memref<1x8xf32, #tpu.memory_space<vmem>>, %arg4: memref<1x8xf32, #tpu.memory_space<vmem>>, %arg5: memref<1x16x8xf32, #tpu.memory_space<vmem>>) attributes {dimension_semantics = [#tpu.dimension_semantics<parallel>], iteration_bounds = array<i64: 2>, scalar_prefetch = 0 : i64, scratch_operands = 0 : i64, tpu.core_type = #tpu.core_type<tc>, window_params = [{transform_indices = @transform_0, window_bounds = array<i64: 1, 18, 8>}, {pipeline_mode = #tpu.pipeline_mode<synchronous>, transform_indices = @transform_1, window_bounds = array<i64: 3, 8, 8>}, {pipeline_mode = #tpu.pipeline_mode<synchronous>, transform_indices = @transform_2, window_bounds = array<i64: 1, 8>}, {pipeline_mode = #tpu.pipeline_mode<synchronous>, transform_indices = @transform_3, window_bounds = array<i64: 1, 8>}, {transform_indices = @transform_4, window_bounds = array<i64: 1, 16, 8>}]} {
    %cst = arith.constant 0.000000e+00 : f32
    %0 = vector.broadcast %cst : f32 to vector<16x8xf32>
    %c0 = arith.constant 0 : index
    %c0_0 = arith.constant 0 : index
    %c0_1 = arith.constant 0 : index
    %1 = vector.load %arg1[%c0, %c0_0, %c0_1] : memref<1x18x8xf32, #tpu.memory_space<vmem>>, vector<1x16x8xf32>
    %2 = vector.shape_cast %1 : vector<1x16x8xf32> to vector<16x8xf32>
    %3 = arith.truncf %2 : vector<16x8xf32> to vector<16x8xbf16>
    %c0_2 = arith.constant 0 : index
    %c0_3 = arith.constant 0 : index
    %c0_4 = arith.constant 0 : index
    %4 = vector.load %arg2[%c0_2, %c0_3, %c0_4] : memref<3x8x8xbf16, #tpu.memory_space<vmem>>, vector<1x8x8xbf16>
    %5 = vector.shape_cast %4 : vector<1x8x8xbf16> to vector<8x8xbf16>
    %cst_5 = arith.constant dense<0.000000e+00> : vector<16x8xf32>
    %6 = tpu.matmul %3, %5, %cst_5 {dimension_numbers = #tpu.dot_dimension_numbers<[1], [0], [0], [1], [0, 0, 1, 1], [], []>} : vector<16x8xbf16>, vector<8x8xbf16>, vector<16x8xf32> -> vector<16x8xf32>
    %7 = arith.addf %0, %6 : vector<16x8xf32>
    %c0_6 = arith.constant 0 : index
    %c1 = arith.constant 1 : index
    %c0_7 = arith.constant 0 : index
    %8 = vector.load %arg1[%c0_6, %c1, %c0_7] : memref<1x18x8xf32, #tpu.memory_space<vmem>>, vector<1x16x8xf32>
    %9 = vector.shape_cast %8 : vector<1x16x8xf32> to vector<16x8xf32>
    %10 = arith.truncf %9 : vector<16x8xf32> to vector<16x8xbf16>
    %c1_8 = arith.constant 1 : index
    %c0_9 = arith.constant 0 : index
    %c0_10 = arith.constant 0 : index
    %11 = vector.load %arg2[%c1_8, %c0_9, %c0_10] : memref<3x8x8xbf16, #tpu.memory_space<vmem>>, vector<1x8x8xbf16>
    %12 = vector.shape_cast %11 : vector<1x8x8xbf16> to vector<8x8xbf16>
    %cst_11 = arith.constant dense<0.000000e+00> : vector<16x8xf32>
    %13 = tpu.matmul %10, %12, %cst_11 {dimension_numbers = #tpu.dot_dimension_numbers<[1], [0], [0], [1], [0, 0, 1, 1], [], []>} : vector<16x8xbf16>, vector<8x8xbf16>, vector<16x8xf32> -> vector<16x8xf32>
    %14 = arith.addf %7, %13 : vector<16x8xf32>
    %c0_12 = arith.constant 0 : index
    %c2 = arith.constant 2 : index
    %c0_13 = arith.constant 0 : index
    %15 = vector.load %arg1[%c0_12, %c2, %c0_13] : memref<1x18x8xf32, #tpu.memory_space<vmem>>, vector<1x16x8xf32>
    %16 = vector.shape_cast %15 : vector<1x16x8xf32> to vector<16x8xf32>
    %17 = arith.truncf %16 : vector<16x8xf32> to vector<16x8xbf16>
    %c2_14 = arith.constant 2 : index
    %c0_15 = arith.constant 0 : index
    %c0_16 = arith.constant 0 : index
    %18 = vector.load %arg2[%c2_14, %c0_15, %c0_16] : memref<3x8x8xbf16, #tpu.memory_space<vmem>>, vector<1x8x8xbf16>
    %19 = vector.shape_cast %18 : vector<1x8x8xbf16> to vector<8x8xbf16>
    %cst_17 = arith.constant dense<0.000000e+00> : vector<16x8xf32>
    %20 = tpu.matmul %17, %19, %cst_17 {dimension_numbers = #tpu.dot_dimension_numbers<[1], [0], [0], [1], [0, 0, 1, 1], [], []>} : vector<16x8xbf16>, vector<8x8xbf16>, vector<16x8xf32> -> vector<16x8xf32>
    %21 = arith.addf %14, %20 : vector<16x8xf32>
    %c0_18 = arith.constant 0 : index
    %c0_19 = arith.constant 0 : index
    %22 = vector.load %arg3[%c0_18, %c0_19] : memref<1x8xf32, #tpu.memory_space<vmem>>, vector<1x8xf32>
    %23 = vector.broadcast %22 : vector<1x8xf32> to vector<16x8xf32>
    %24 = arith.mulf %21, %23 : vector<16x8xf32>
    %c0_20 = arith.constant 0 : index
    %c0_21 = arith.constant 0 : index
    %25 = vector.load %arg4[%c0_20, %c0_21] : memref<1x8xf32, #tpu.memory_space<vmem>>, vector<1x8xf32>
    %26 = vector.broadcast %25 : vector<1x8xf32> to vector<16x8xf32>
    %27 = arith.addf %24, %26 : vector<16x8xf32>
    %cst_22 = arith.constant 0.000000e+00 : f32
    %28 = vector.broadcast %cst_22 : f32 to vector<16x8xf32>
    %29 = arith.maximumf %27, %28 : vector<16x8xf32>
    %c0_23 = arith.constant 0 : index
    %c0_24 = arith.constant 0 : index
    %c0_25 = arith.constant 0 : index
    %30 = vector.load %arg5[%c0_23, %c0_24, %c0_25] : memref<1x16x8xf32, #tpu.memory_space<vmem>>, vector<1x16x8xf32>
    %31 = vector.shape_cast %30 : vector<1x16x8xf32> to vector<16x8xf32>
    %32 = vector.shape_cast %29 : vector<16x8xf32> to vector<1x16x8xf32>
    tpu.vector_store %arg5[%c0_23, %c0_24, %c0_25], %32 {strides = array<i32>} : memref<1x16x8xf32, #tpu.memory_space<vmem>>, vector<1x16x8xf32>,
    return
  }
  func.func @transform_0(%arg0: i32) -> (i32, i32, i32) {
    %c0_i32 = arith.constant 0 : i32
    %c0_i32_0 = arith.constant 0 : i32
    %c0_i32_1 = arith.constant 0 : i32
    return %arg0, %c0_i32, %c0_i32_0 : i32, i32, i32
  }
  func.func @transform_1(%arg0: i32) -> (i32, i32, i32) {
    %c0_i32 = arith.constant 0 : i32
    %c0_i32_0 = arith.constant 0 : i32
    %c0_i32_1 = arith.constant 0 : i32
    %c0_i32_2 = arith.constant 0 : i32
    return %c0_i32, %c0_i32_0, %c0_i32_1 : i32, i32, i32
  }
  func.func @transform_2(%arg0: i32) -> (i32, i32) {
    %c0_i32 = arith.constant 0 : i32
    %c0_i32_0 = arith.constant 0 : i32
    %c0_i32_1 = arith.constant 0 : i32
    return %c0_i32, %c0_i32_0 : i32, i32
  }
  func.func @transform_3(%arg0: i32) -> (i32, i32) {
    %c0_i32 = arith.constant 0 : i32
    %c0_i32_0 = arith.constant 0 : i32
    %c0_i32_1 = arith.constant 0 : i32
    return %c0_i32, %c0_i32_0 : i32, i32
  }
  func.func @transform_4(%arg0: i32) -> (i32, i32, i32) {
    %c0_i32 = arith.constant 0 : i32
    %c0_i32_0 = arith.constant 0 : i32
    %c0_i32_1 = arith.constant 0 : i32
    return %arg0, %c0_i32, %c0_i32_0 : i32, i32, i32
  }
}

module attributes {stable_mosaic.version = 11 : i64} {
  func.func @_fused_conv_kernel(%arg0: i32, %arg1: memref<1x18x8xf32, #tpu.memory_space<vmem>>, %arg2: memref<3x8x8xbf16, #tpu.memory_space<vmem>>, %arg3: memref<1x8xf32, #tpu.memory_space<vmem>>, %arg4: memref<1x8xf32, #tpu.memory_space<vmem>>, %arg5: memref<1x16x8xf32, #tpu.memory_space<vmem>>, %arg6: memref<1x16x8xf32, #tpu.memory_space<vmem>>) attributes {dimension_semantics = [#tpu.dimension_semantics<parallel>], iteration_bounds = array<i64: 2>, scalar_prefetch = 0 : i64, scratch_operands = 0 : i64, tpu.core_type = #tpu.core_type<tc>, window_params = [{transform_indices = @transform_0, window_bounds = array<i64: 1, 18, 8>}, {pipeline_mode = #tpu.pipeline_mode<synchronous>, transform_indices = @transform_1, window_bounds = array<i64: 3, 8, 8>}, {pipeline_mode = #tpu.pipeline_mode<synchronous>, transform_indices = @transform_2, window_bounds = array<i64: 1, 8>}, {pipeline_mode = #tpu.pipeline_mode<synchronous>, transform_indices = @transform_3, window_bounds = array<i64: 1, 8>}, {transform_indices = @transform_4, window_bounds = array<i64: 1, 16, 8>}, {transform_indices = @transform_5, window_bounds = array<i64: 1, 16, 8>}]} {
    %cst = arith.constant 0.000000e+00 : f32
    %0 = vector.broadcast %cst : f32 to vector<16x8xf32>
    %c0 = arith.constant 0 : index
    %c0_0 = arith.constant 0 : index
    %c0_1 = arith.constant 0 : index
    %1 = vector.load %arg1[%c0, %c0_0, %c0_1] : memref<1x18x8xf32, #tpu.memory_space<vmem>>, vector<1x16x8xf32>
    %2 = vector.shape_cast %1 : vector<1x16x8xf32> to vector<16x8xf32>
    %3 = arith.truncf %2 : vector<16x8xf32> to vector<16x8xbf16>
    %c0_2 = arith.constant 0 : index
    %c0_3 = arith.constant 0 : index
    %c0_4 = arith.constant 0 : index
    %4 = vector.load %arg2[%c0_2, %c0_3, %c0_4] : memref<3x8x8xbf16, #tpu.memory_space<vmem>>, vector<1x8x8xbf16>
    %5 = vector.shape_cast %4 : vector<1x8x8xbf16> to vector<8x8xbf16>
    %cst_5 = arith.constant dense<0.000000e+00> : vector<16x8xf32>
    %6 = tpu.matmul %3, %5, %cst_5 {dimension_numbers = #tpu.dot_dimension_numbers<[1], [0], [0], [1], [0, 0, 1, 1], [], []>} : vector<16x8xbf16>, vector<8x8xbf16>, vector<16x8xf32> -> vector<16x8xf32>
    %7 = arith.addf %0, %6 : vector<16x8xf32>
    %c0_6 = arith.constant 0 : index
    %c1 = arith.constant 1 : index
    %c0_7 = arith.constant 0 : index
    %8 = vector.load %arg1[%c0_6, %c1, %c0_7] : memref<1x18x8xf32, #tpu.memory_space<vmem>>, vector<1x16x8xf32>
    %9 = vector.shape_cast %8 : vector<1x16x8xf32> to vector<16x8xf32>
    %10 = arith.truncf %9 : vector<16x8xf32> to vector<16x8xbf16>
    %c1_8 = arith.constant 1 : index
    %c0_9 = arith.constant 0 : index
    %c0_10 = arith.constant 0 : index
    %11 = vector.load %arg2[%c1_8, %c0_9, %c0_10] : memref<3x8x8xbf16, #tpu.memory_space<vmem>>, vector<1x8x8xbf16>
    %12 = vector.shape_cast %11 : vector<1x8x8xbf16> to vector<8x8xbf16>
    %cst_11 = arith.constant dense<0.000000e+00> : vector<16x8xf32>
    %13 = tpu.matmul %10, %12, %cst_11 {dimension_numbers = #tpu.dot_dimension_numbers<[1], [0], [0], [1], [0, 0, 1, 1], [], []>} : vector<16x8xbf16>, vector<8x8xbf16>, vector<16x8xf32> -> vector<16x8xf32>
    %14 = arith.addf %7, %13 : vector<16x8xf32>
    %c0_12 = arith.constant 0 : index
    %c2 = arith.constant 2 : index
    %c0_13 = arith.constant 0 : index
    %15 = vector.load %arg1[%c0_12, %c2, %c0_13] : memref<1x18x8xf32, #tpu.memory_space<vmem>>, vector<1x16x8xf32>
    %16 = vector.shape_cast %15 : vector<1x16x8xf32> to vector<16x8xf32>
    %17 = arith.truncf %16 : vector<16x8xf32> to vector<16x8xbf16>
    %c2_14 = arith.constant 2 : index
    %c0_15 = arith.constant 0 : index
    %c0_16 = arith.constant 0 : index
    %18 = vector.load %arg2[%c2_14, %c0_15, %c0_16] : memref<3x8x8xbf16, #tpu.memory_space<vmem>>, vector<1x8x8xbf16>
    %19 = vector.shape_cast %18 : vector<1x8x8xbf16> to vector<8x8xbf16>
    %cst_17 = arith.constant dense<0.000000e+00> : vector<16x8xf32>
    %20 = tpu.matmul %17, %19, %cst_17 {dimension_numbers = #tpu.dot_dimension_numbers<[1], [0], [0], [1], [0, 0, 1, 1], [], []>} : vector<16x8xbf16>, vector<8x8xbf16>, vector<16x8xf32> -> vector<16x8xf32>
    %21 = arith.addf %14, %20 : vector<16x8xf32>
    %c0_18 = arith.constant 0 : index
    %c0_19 = arith.constant 0 : index
    %22 = vector.load %arg3[%c0_18, %c0_19] : memref<1x8xf32, #tpu.memory_space<vmem>>, vector<1x8xf32>
    %23 = vector.broadcast %22 : vector<1x8xf32> to vector<16x8xf32>
    %24 = arith.mulf %21, %23 : vector<16x8xf32>
    %c0_20 = arith.constant 0 : index
    %c0_21 = arith.constant 0 : index
    %25 = vector.load %arg4[%c0_20, %c0_21] : memref<1x8xf32, #tpu.memory_space<vmem>>, vector<1x8xf32>
    %26 = vector.broadcast %25 : vector<1x8xf32> to vector<16x8xf32>
    %27 = arith.addf %24, %26 : vector<16x8xf32>
    %c0_22 = arith.constant 0 : index
    %c0_23 = arith.constant 0 : index
    %c0_24 = arith.constant 0 : index
    %28 = vector.load %arg5[%c0_22, %c0_23, %c0_24] : memref<1x16x8xf32, #tpu.memory_space<vmem>>, vector<1x16x8xf32>
    %29 = vector.shape_cast %28 : vector<1x16x8xf32> to vector<16x8xf32>
    %30 = arith.addf %27, %29 : vector<16x8xf32>
    %c0_25 = arith.constant 0 : index
    %c0_26 = arith.constant 0 : index
    %c0_27 = arith.constant 0 : index
    %31 = vector.load %arg6[%c0_25, %c0_26, %c0_27] : memref<1x16x8xf32, #tpu.memory_space<vmem>>, vector<1x16x8xf32>
    %32 = vector.shape_cast %31 : vector<1x16x8xf32> to vector<16x8xf32>
    %33 = vector.shape_cast %30 : vector<16x8xf32> to vector<1x16x8xf32>
    tpu.vector_store %arg6[%c0_25, %c0_26, %c0_27], %33 {strides = array<i32>} : memref<1x16x8xf32, #tpu.memory_space<vmem>>, vector<1x16x8xf32>,
    return
  }
  func.func @transform_0(%arg0: i32) -> (i32, i32, i32) {
    %c0_i32 = arith.constant 0 : i32
    %c0_i32_0 = arith.constant 0 : i32
    %c0_i32_1 = arith.constant 0 : i32
    return %arg0, %c0_i32, %c0_i32_0 : i32, i32, i32
  }
  func.func @transform_1(%arg0: i32) -> (i32, i32, i32) {
    %c0_i32 = arith.constant 0 : i32
    %c0_i32_0 = arith.constant 0 : i32
    %c0_i32_1 = arith.constant 0 : i32
    %c0_i32_2 = arith.constant 0 : i32
    return %c0_i32, %c0_i32_0, %c0_i32_1 : i32, i32, i32
  }
  func.func @transform_2(%arg0: i32) -> (i32, i32) {
    %c0_i32 = arith.constant 0 : i32
    %c0_i32_0 = arith.constant 0 : i32
    %c0_i32_1 = arith.constant 0 : i32
    return %c0_i32, %c0_i32_0 : i32, i32
  }
  func.func @transform_3(%arg0: i32) -> (i32, i32) {
    %c0_i32 = arith.constant 0 : i32
    %c0_i32_0 = arith.constant 0 : i32
    %c0_i32_1 = arith.constant 0 : i32
    return %c0_i32, %c0_i32_0 : i32, i32
  }
  func.func @transform_4(%arg0: i32) -> (i32, i32, i32) {
    %c0_i32 = arith.constant 0 : i32
    %c0_i32_0 = arith.constant 0 : i32
    %c0_i32_1 = arith.constant 0 : i32
    return %arg0, %c0_i32, %c0_i32_0 : i32, i32, i32
  }
  func.func @transform_5(%arg0: i32) -> (i32, i32, i32) {
    %c0_i32 = arith.constant 0 : i32
    %c0_i32_0 = arith.constant 0 : i32
    %c0_i32_1 = arith.constant 0 : i32
    return %arg0, %c0_i32, %c0_i32_0 : i32, i32, i32
  }
}

module attributes {stable_mosaic.version = 11 : i64} {
  func.func @_fused_conv_kernel(%arg0: i32, %arg1: memref<1x17x8xf32, #tpu.memory_space<vmem>>, %arg2: memref<3x8x8xbf16, #tpu.memory_space<vmem>>, %arg3: memref<1x8xf32, #tpu.memory_space<vmem>>, %arg4: memref<1x8xf32, #tpu.memory_space<vmem>>, %arg5: memref<1x8xf32, #tpu.memory_space<vmem>>, %arg6: memref<1x8xf32, #tpu.memory_space<vmem>>, %arg7: memref<1x8x8xf32, #tpu.memory_space<vmem>>) attributes {dimension_semantics = [#tpu.dimension_semantics<parallel>], iteration_bounds = array<i64: 2>, scalar_prefetch = 0 : i64, scratch_operands = 0 : i64, tpu.core_type = #tpu.core_type<tc>, window_params = [{transform_indices = @transform_0, window_bounds = array<i64: 1, 17, 8>}, {pipeline_mode = #tpu.pipeline_mode<synchronous>, transform_indices = @transform_1, window_bounds = array<i64: 3, 8, 8>}, {pipeline_mode = #tpu.pipeline_mode<synchronous>, transform_indices = @transform_2, window_bounds = array<i64: 1, 8>}, {pipeline_mode = #tpu.pipeline_mode<synchronous>, transform_indices = @transform_3, window_bounds = array<i64: 1, 8>}, {pipeline_mode = #tpu.pipeline_mode<synchronous>, transform_indices = @transform_4, window_bounds = array<i64: 1, 8>}, {pipeline_mode = #tpu.pipeline_mode<synchronous>, transform_indices = @transform_5, window_bounds = array<i64: 1, 8>}, {transform_indices = @transform_6, window_bounds = array<i64: 1, 8, 8>}]} {
    %cst = arith.constant 0.000000e+00 : f32
    %0 = vector.broadcast %cst : f32 to vector<8x8xf32>
    %c0 = arith.constant 0 : index
    %c0_0 = arith.constant 0 : index
    %c0_1 = arith.constant 0 : index
    %1 = tpu.strided_load %arg1[%c0, %c0_0, %c0_1] {strides = array<i32: 1, 2, 1>} : memref<1x17x8xf32, #tpu.memory_space<vmem>>, vector<1x8x8xf32>
    %2 = vector.shape_cast %1 : vector<1x8x8xf32> to vector<8x8xf32>
    %c0_2 = arith.constant 0 : index
    %c0_3 = arith.constant 0 : index
    %3 = vector.load %arg5[%c0_2, %c0_3] : memref<1x8xf32, #tpu.memory_space<vmem>>, vector<1x8xf32>
    %4 = vector.broadcast %3 : vector<1x8xf32> to vector<8x8xf32>
    %5 = arith.mulf %2, %4 : vector<8x8xf32>
    %c0_4 = arith.constant 0 : index
    %c0_5 = arith.constant 0 : index
    %6 = vector.load %arg6[%c0_4, %c0_5] : memref<1x8xf32, #tpu.memory_space<vmem>>, vector<1x8xf32>
    %7 = vector.broadcast %6 : vector<1x8xf32> to vector<8x8xf32>
    %8 = arith.addf %5, %7 : vector<8x8xf32>
    %cst_6 = arith.constant 0.000000e+00 : f32
    %9 = vector.broadcast %cst_6 : f32 to vector<8x8xf32>
    %10 = arith.maximumf %8, %9 : vector<8x8xf32>
    %11 = arith.truncf %10 : vector<8x8xf32> to vector<8x8xbf16>
    %c0_7 = arith.constant 0 : index
    %c0_8 = arith.constant 0 : index
    %c0_9 = arith.constant 0 : index
    %12 = vector.load %arg2[%c0_7, %c0_8, %c0_9] : memref<3x8x8xbf16, #tpu.memory_space<vmem>>, vector<1x8x8xbf16>
    %13 = vector.shape_cast %12 : vector<1x8x8xbf16> to vector<8x8xbf16>
    %cst_10 = arith.constant dense<0.000000e+00> : vector<8x8xf32>
    %14 = tpu.matmul %11, %13, %cst_10 {dimension_numbers = #tpu.dot_dimension_numbers<[1], [0], [0], [1], [0, 0, 1, 1], [], []>} : vector<8x8xbf16>, vector<8x8xbf16>, vector<8x8xf32> -> vector<8x8xf32>
    %15 = arith.addf %0, %14 : vector<8x8xf32>
    %c0_11 = arith.constant 0 : index
    %c1 = arith.constant 1 : index
    %c0_12 = arith.constant 0 : index
    %16 = tpu.strided_load %arg1[%c0_11, %c1, %c0_12] {strides = array<i32: 1, 2, 1>} : memref<1x17x8xf32, #tpu.memory_space<vmem>>, vector<1x8x8xf32>
    %17 = vector.shape_cast %16 : vector<1x8x8xf32> to vector<8x8xf32>
    %c0_13 = arith.constant 0 : index
    %c0_14 = arith.constant 0 : index
    %18 = vector.load %arg5[%c0_13, %c0_14] : memref<1x8xf32, #tpu.memory_space<vmem>>, vector<1x8xf32>
    %19 = vector.broadcast %18 : vector<1x8xf32> to vector<8x8xf32>
    %20 = arith.mulf %17, %19 : vector<8x8xf32>
    %c0_15 = arith.constant 0 : index
    %c0_16 = arith.constant 0 : index
    %21 = vector.load %arg6[%c0_15, %c0_16] : memref<1x8xf32, #tpu.memory_space<vmem>>, vector<1x8xf32>
    %22 = vector.broadcast %21 : vector<1x8xf32> to vector<8x8xf32>
    %23 = arith.addf %20, %22 : vector<8x8xf32>
    %cst_17 = arith.constant 0.000000e+00 : f32
    %24 = vector.broadcast %cst_17 : f32 to vector<8x8xf32>
    %25 = arith.maximumf %23, %24 : vector<8x8xf32>
    %26 = arith.truncf %25 : vector<8x8xf32> to vector<8x8xbf16>
    %c1_18 = arith.constant 1 : index
    %c0_19 = arith.constant 0 : index
    %c0_20 = arith.constant 0 : index
    %27 = vector.load %arg2[%c1_18, %c0_19, %c0_20] : memref<3x8x8xbf16, #tpu.memory_space<vmem>>, vector<1x8x8xbf16>
    %28 = vector.shape_cast %27 : vector<1x8x8xbf16> to vector<8x8xbf16>
    %cst_21 = arith.constant dense<0.000000e+00> : vector<8x8xf32>
    %29 = tpu.matmul %26, %28, %cst_21 {dimension_numbers = #tpu.dot_dimension_numbers<[1], [0], [0], [1], [0, 0, 1, 1], [], []>} : vector<8x8xbf16>, vector<8x8xbf16>, vector<8x8xf32> -> vector<8x8xf32>
    %30 = arith.addf %15, %29 : vector<8x8xf32>
    %c0_22 = arith.constant 0 : index
    %c2 = arith.constant 2 : index
    %c0_23 = arith.constant 0 : index
    %31 = tpu.strided_load %arg1[%c0_22, %c2, %c0_23] {strides = array<i32: 1, 2, 1>} : memref<1x17x8xf32, #tpu.memory_space<vmem>>, vector<1x8x8xf32>
    %32 = vector.shape_cast %31 : vector<1x8x8xf32> to vector<8x8xf32>
    %c0_24 = arith.constant 0 : index
    %c0_25 = arith.constant 0 : index
    %33 = vector.load %arg5[%c0_24, %c0_25] : memref<1x8xf32, #tpu.memory_space<vmem>>, vector<1x8xf32>
    %34 = vector.broadcast %33 : vector<1x8xf32> to vector<8x8xf32>
    %35 = arith.mulf %32, %34 : vector<8x8xf32>
    %c0_26 = arith.constant 0 : index
    %c0_27 = arith.constant 0 : index
    %36 = vector.load %arg6[%c0_26, %c0_27] : memref<1x8xf32, #tpu.memory_space<vmem>>, vector<1x8xf32>
    %37 = vector.broadcast %36 : vector<1x8xf32> to vector<8x8xf32>
    %38 = arith.addf %35, %37 : vector<8x8xf32>
    %cst_28 = arith.constant 0.000000e+00 : f32
    %39 = vector.broadcast %cst_28 : f32 to vector<8x8xf32>
    %40 = arith.maximumf %38, %39 : vector<8x8xf32>
    %41 = arith.truncf %40 : vector<8x8xf32> to vector<8x8xbf16>
    %c2_29 = arith.constant 2 : index
    %c0_30 = arith.constant 0 : index
    %c0_31 = arith.constant 0 : index
    %42 = vector.load %arg2[%c2_29, %c0_30, %c0_31] : memref<3x8x8xbf16, #tpu.memory_space<vmem>>, vector<1x8x8xbf16>
    %43 = vector.shape_cast %42 : vector<1x8x8xbf16> to vector<8x8xbf16>
    %cst_32 = arith.constant dense<0.000000e+00> : vector<8x8xf32>
    %44 = tpu.matmul %41, %43, %cst_32 {dimension_numbers = #tpu.dot_dimension_numbers<[1], [0], [0], [1], [0, 0, 1, 1], [], []>} : vector<8x8xbf16>, vector<8x8xbf16>, vector<8x8xf32> -> vector<8x8xf32>
    %45 = arith.addf %30, %44 : vector<8x8xf32>
    %c0_33 = arith.constant 0 : index
    %c0_34 = arith.constant 0 : index
    %46 = vector.load %arg3[%c0_33, %c0_34] : memref<1x8xf32, #tpu.memory_space<vmem>>, vector<1x8xf32>
    %47 = vector.broadcast %46 : vector<1x8xf32> to vector<8x8xf32>
    %48 = arith.mulf %45, %47 : vector<8x8xf32>
    %c0_35 = arith.constant 0 : index
    %c0_36 = arith.constant 0 : index
    %49 = vector.load %arg4[%c0_35, %c0_36] : memref<1x8xf32, #tpu.memory_space<vmem>>, vector<1x8xf32>
    %50 = vector.broadcast %49 : vector<1x8xf32> to vector<8x8xf32>
    %51 = arith.addf %48, %50 : vector<8x8xf32>
    %cst_37 = arith.constant 0.000000e+00 : f32
    %52 = vector.broadcast %cst_37 : f32 to vector<8x8xf32>
    %53 = arith.maximumf %51, %52 : vector<8x8xf32>
    %c0_38 = arith.constant 0 : index
    %c0_39 = arith.constant 0 : index
    %c0_40 = arith.constant 0 : index
    %54 = vector.load %arg7[%c0_38, %c0_39, %c0_40] : memref<1x8x8xf32, #tpu.memory_space<vmem>>, vector<1x8x8xf32>
    %55 = vector.shape_cast %54 : vector<1x8x8xf32> to vector<8x8xf32>
    %56 = vector.shape_cast %53 : vector<8x8xf32> to vector<1x8x8xf32>
    tpu.vector_store %arg7[%c0_38, %c0_39, %c0_40], %56 {strides = array<i32>} : memref<1x8x8xf32, #tpu.memory_space<vmem>>, vector<1x8x8xf32>,
    return
  }
  func.func @transform_0(%arg0: i32) -> (i32, i32, i32) {
    %c0_i32 = arith.constant 0 : i32
    %c0_i32_0 = arith.constant 0 : i32
    %c0_i32_1 = arith.constant 0 : i32
    return %arg0, %c0_i32, %c0_i32_0 : i32, i32, i32
  }
  func.func @transform_1(%arg0: i32) -> (i32, i32, i32) {
    %c0_i32 = arith.constant 0 : i32
    %c0_i32_0 = arith.constant 0 : i32
    %c0_i32_1 = arith.constant 0 : i32
    %c0_i32_2 = arith.constant 0 : i32
    return %c0_i32, %c0_i32_0, %c0_i32_1 : i32, i32, i32
  }
  func.func @transform_2(%arg0: i32) -> (i32, i32) {
    %c0_i32 = arith.constant 0 : i32
    %c0_i32_0 = arith.constant 0 : i32
    %c0_i32_1 = arith.constant 0 : i32
    return %c0_i32, %c0_i32_0 : i32, i32
  }
  func.func @transform_3(%arg0: i32) -> (i32, i32) {
    %c0_i32 = arith.constant 0 : i32
    %c0_i32_0 = arith.constant 0 : i32
    %c0_i32_1 = arith.constant 0 : i32
    return %c0_i32, %c0_i32_0 : i32, i32
  }
  func.func @transform_4(%arg0: i32) -> (i32, i32) {
    %c0_i32 = arith.constant 0 : i32
    %c0_i32_0 = arith.constant 0 : i32
    %c0_i32_1 = arith.constant 0 : i32
    return %c0_i32, %c0_i32_0 : i32, i32
  }
  func.func @transform_5(%arg0: i32) -> (i32, i32) {
    %c0_i32 = arith.constant 0 : i32
    %c0_i32_0 = arith.constant 0 : i32
    %c0_i32_1 = arith.constant 0 : i32
    return %c0_i32, %c0_i32_0 : i32, i32
  }
  func.func @transform_6(%arg0: i32) -> (i32, i32, i32) {
    %c0_i32 = arith.constant 0 : i32
    %c0_i32_0 = arith.constant 0 : i32
    %c0_i32_1 = arith.constant 0 : i32
    return %arg0, %c0_i32, %c0_i32_0 : i32, i32, i32
  }
}

module attributes {stable_mosaic.version = 11 : i64} {
  func.func @_fused_conv_kernel(%arg0: i32, %arg1: memref<1x10x8xf32, #tpu.memory_space<vmem>>, %arg2: memref<3x8x8xbf16, #tpu.memory_space<vmem>>, %arg3: memref<1x8xf32, #tpu.memory_space<vmem>>, %arg4: memref<1x8xf32, #tpu.memory_space<vmem>>, %arg5: memref<1x16x8xf32, #tpu.memory_space<vmem>>, %arg6: memref<1x8x8xf32, #tpu.memory_space<vmem>>) attributes {dimension_semantics = [#tpu.dimension_semantics<parallel>], iteration_bounds = array<i64: 2>, scalar_prefetch = 0 : i64, scratch_operands = 0 : i64, tpu.core_type = #tpu.core_type<tc>, window_params = [{transform_indices = @transform_0, window_bounds = array<i64: 1, 10, 8>}, {pipeline_mode = #tpu.pipeline_mode<synchronous>, transform_indices = @transform_1, window_bounds = array<i64: 3, 8, 8>}, {pipeline_mode = #tpu.pipeline_mode<synchronous>, transform_indices = @transform_2, window_bounds = array<i64: 1, 8>}, {pipeline_mode = #tpu.pipeline_mode<synchronous>, transform_indices = @transform_3, window_bounds = array<i64: 1, 8>}, {transform_indices = @transform_4, window_bounds = array<i64: 1, 16, 8>}, {transform_indices = @transform_5, window_bounds = array<i64: 1, 8, 8>}]} {
    %cst = arith.constant 0.000000e+00 : f32
    %0 = vector.broadcast %cst : f32 to vector<8x8xf32>
    %c0 = arith.constant 0 : index
    %c0_0 = arith.constant 0 : index
    %c0_1 = arith.constant 0 : index
    %1 = vector.load %arg1[%c0, %c0_0, %c0_1] : memref<1x10x8xf32, #tpu.memory_space<vmem>>, vector<1x8x8xf32>
    %2 = vector.shape_cast %1 : vector<1x8x8xf32> to vector<8x8xf32>
    %3 = arith.truncf %2 : vector<8x8xf32> to vector<8x8xbf16>
    %c0_2 = arith.constant 0 : index
    %c0_3 = arith.constant 0 : index
    %c0_4 = arith.constant 0 : index
    %4 = vector.load %arg2[%c0_2, %c0_3, %c0_4] : memref<3x8x8xbf16, #tpu.memory_space<vmem>>, vector<1x8x8xbf16>
    %5 = vector.shape_cast %4 : vector<1x8x8xbf16> to vector<8x8xbf16>
    %cst_5 = arith.constant dense<0.000000e+00> : vector<8x8xf32>
    %6 = tpu.matmul %3, %5, %cst_5 {dimension_numbers = #tpu.dot_dimension_numbers<[1], [0], [0], [1], [0, 0, 1, 1], [], []>} : vector<8x8xbf16>, vector<8x8xbf16>, vector<8x8xf32> -> vector<8x8xf32>
    %7 = arith.addf %0, %6 : vector<8x8xf32>
    %c0_6 = arith.constant 0 : index
    %c1 = arith.constant 1 : index
    %c0_7 = arith.constant 0 : index
    %8 = vector.load %arg1[%c0_6, %c1, %c0_7] : memref<1x10x8xf32, #tpu.memory_space<vmem>>, vector<1x8x8xf32>
    %9 = vector.shape_cast %8 : vector<1x8x8xf32> to vector<8x8xf32>
    %10 = arith.truncf %9 : vector<8x8xf32> to vector<8x8xbf16>
    %c1_8 = arith.constant 1 : index
    %c0_9 = arith.constant 0 : index
    %c0_10 = arith.constant 0 : index
    %11 = vector.load %arg2[%c1_8, %c0_9, %c0_10] : memref<3x8x8xbf16, #tpu.memory_space<vmem>>, vector<1x8x8xbf16>
    %12 = vector.shape_cast %11 : vector<1x8x8xbf16> to vector<8x8xbf16>
    %cst_11 = arith.constant dense<0.000000e+00> : vector<8x8xf32>
    %13 = tpu.matmul %10, %12, %cst_11 {dimension_numbers = #tpu.dot_dimension_numbers<[1], [0], [0], [1], [0, 0, 1, 1], [], []>} : vector<8x8xbf16>, vector<8x8xbf16>, vector<8x8xf32> -> vector<8x8xf32>
    %14 = arith.addf %7, %13 : vector<8x8xf32>
    %c0_12 = arith.constant 0 : index
    %c2 = arith.constant 2 : index
    %c0_13 = arith.constant 0 : index
    %15 = vector.load %arg1[%c0_12, %c2, %c0_13] : memref<1x10x8xf32, #tpu.memory_space<vmem>>, vector<1x8x8xf32>
    %16 = vector.shape_cast %15 : vector<1x8x8xf32> to vector<8x8xf32>
    %17 = arith.truncf %16 : vector<8x8xf32> to vector<8x8xbf16>
    %c2_14 = arith.constant 2 : index
    %c0_15 = arith.constant 0 : index
    %c0_16 = arith.constant 0 : index
    %18 = vector.load %arg2[%c2_14, %c0_15, %c0_16] : memref<3x8x8xbf16, #tpu.memory_space<vmem>>, vector<1x8x8xbf16>
    %19 = vector.shape_cast %18 : vector<1x8x8xbf16> to vector<8x8xbf16>
    %cst_17 = arith.constant dense<0.000000e+00> : vector<8x8xf32>
    %20 = tpu.matmul %17, %19, %cst_17 {dimension_numbers = #tpu.dot_dimension_numbers<[1], [0], [0], [1], [0, 0, 1, 1], [], []>} : vector<8x8xbf16>, vector<8x8xbf16>, vector<8x8xf32> -> vector<8x8xf32>
    %21 = arith.addf %14, %20 : vector<8x8xf32>
    %c0_18 = arith.constant 0 : index
    %c0_19 = arith.constant 0 : index
    %22 = vector.load %arg3[%c0_18, %c0_19] : memref<1x8xf32, #tpu.memory_space<vmem>>, vector<1x8xf32>
    %23 = vector.broadcast %22 : vector<1x8xf32> to vector<8x8xf32>
    %24 = arith.mulf %21, %23 : vector<8x8xf32>
    %c0_20 = arith.constant 0 : index
    %c0_21 = arith.constant 0 : index
    %25 = vector.load %arg4[%c0_20, %c0_21] : memref<1x8xf32, #tpu.memory_space<vmem>>, vector<1x8xf32>
    %26 = vector.broadcast %25 : vector<1x8xf32> to vector<8x8xf32>
    %27 = arith.addf %24, %26 : vector<8x8xf32>
    %c0_22 = arith.constant 0 : index
    %c0_23 = arith.constant 0 : index
    %c0_24 = arith.constant 0 : index
    %28 = tpu.strided_load %arg5[%c0_22, %c0_23, %c0_24] {strides = array<i32: 1, 2, 1>} : memref<1x16x8xf32, #tpu.memory_space<vmem>>, vector<1x8x8xf32>
    %29 = vector.shape_cast %28 : vector<1x8x8xf32> to vector<8x8xf32>
    %c0_25 = arith.constant 0 : index
    %c1_26 = arith.constant 1 : index
    %c0_27 = arith.constant 0 : index
    %30 = tpu.strided_load %arg5[%c0_25, %c1_26, %c0_27] {strides = array<i32: 1, 2, 1>} : memref<1x16x8xf32, #tpu.memory_space<vmem>>, vector<1x8x8xf32>
    %31 = vector.shape_cast %30 : vector<1x8x8xf32> to vector<8x8xf32>
    %32 = arith.maximumf %29, %31 : vector<8x8xf32>
    %33 = arith.addf %27, %32 : vector<8x8xf32>
    %c0_28 = arith.constant 0 : index
    %c0_29 = arith.constant 0 : index
    %c0_30 = arith.constant 0 : index
    %34 = vector.load %arg6[%c0_28, %c0_29, %c0_30] : memref<1x8x8xf32, #tpu.memory_space<vmem>>, vector<1x8x8xf32>
    %35 = vector.shape_cast %34 : vector<1x8x8xf32> to vector<8x8xf32>
    %36 = vector.shape_cast %33 : vector<8x8xf32> to vector<1x8x8xf32>
    tpu.vector_store %arg6[%c0_28, %c0_29, %c0_30], %36 {strides = array<i32>} : memref<1x8x8xf32, #tpu.memory_space<vmem>>, vector<1x8x8xf32>,
    return
  }
  func.func @transform_0(%arg0: i32) -> (i32, i32, i32) {
    %c0_i32 = arith.constant 0 : i32
    %c0_i32_0 = arith.constant 0 : i32
    %c0_i32_1 = arith.constant 0 : i32
    return %arg0, %c0_i32, %c0_i32_0 : i32, i32, i32
  }
  func.func @transform_1(%arg0: i32) -> (i32, i32, i32) {
    %c0_i32 = arith.constant 0 : i32
    %c0_i32_0 = arith.constant 0 : i32
    %c0_i32_1 = arith.constant 0 : i32
    %c0_i32_2 = arith.constant 0 : i32
    return %c0_i32, %c0_i32_0, %c0_i32_1 : i32, i32, i32
  }
  func.func @transform_2(%arg0: i32) -> (i32, i32) {
    %c0_i32 = arith.constant 0 : i32
    %c0_i32_0 = arith.constant 0 : i32
    %c0_i32_1 = arith.constant 0 : i32
    return %c0_i32, %c0_i32_0 : i32, i32
  }
  func.func @transform_3(%arg0: i32) -> (i32, i32) {
    %c0_i32 = arith.constant 0 : i32
    %c0_i32_0 = arith.constant 0 : i32
    %c0_i32_1 = arith.constant 0 : i32
    return %c0_i32, %c0_i32_0 : i32, i32
  }
  func.func @transform_4(%arg0: i32) -> (i32, i32, i32) {
    %c0_i32 = arith.constant 0 : i32
    %c0_i32_0 = arith.constant 0 : i32
    %c0_i32_1 = arith.constant 0 : i32
    return %arg0, %c0_i32, %c0_i32_0 : i32, i32, i32
  }
  func.func @transform_5(%arg0: i32) -> (i32, i32, i32) {
    %c0_i32 = arith.constant 0 : i32
    %c0_i32_0 = arith.constant 0 : i32
    %c0_i32_1 = arith.constant 0 : i32
    return %arg0, %c0_i32, %c0_i32_0 : i32, i32, i32
  }
}

module attributes {stable_mosaic.version = 11 : i64} {
  func.func @_fused_conv_kernel(%arg0: i32, %arg1: memref<1x10x8xf32, #tpu.memory_space<vmem>>, %arg2: memref<3x8x16xbf16, #tpu.memory_space<vmem>>, %arg3: memref<1x16xf32, #tpu.memory_space<vmem>>, %arg4: memref<1x16xf32, #tpu.memory_space<vmem>>, %arg5: memref<1x8xf32, #tpu.memory_space<vmem>>, %arg6: memref<1x8xf32, #tpu.memory_space<vmem>>, %arg7: memref<1x8x16xf32, #tpu.memory_space<vmem>>) attributes {dimension_semantics = [#tpu.dimension_semantics<parallel>], iteration_bounds = array<i64: 2>, scalar_prefetch = 0 : i64, scratch_operands = 0 : i64, tpu.core_type = #tpu.core_type<tc>, window_params = [{transform_indices = @transform_0, window_bounds = array<i64: 1, 10, 8>}, {pipeline_mode = #tpu.pipeline_mode<synchronous>, transform_indices = @transform_1, window_bounds = array<i64: 3, 8, 16>}, {pipeline_mode = #tpu.pipeline_mode<synchronous>, transform_indices = @transform_2, window_bounds = array<i64: 1, 16>}, {pipeline_mode = #tpu.pipeline_mode<synchronous>, transform_indices = @transform_3, window_bounds = array<i64: 1, 16>}, {pipeline_mode = #tpu.pipeline_mode<synchronous>, transform_indices = @transform_4, window_bounds = array<i64: 1, 8>}, {pipeline_mode = #tpu.pipeline_mode<synchronous>, transform_indices = @transform_5, window_bounds = array<i64: 1, 8>}, {transform_indices = @transform_6, window_bounds = array<i64: 1, 8, 16>}]} {
    %cst = arith.constant 0.000000e+00 : f32
    %0 = vector.broadcast %cst : f32 to vector<8x16xf32>
    %c0 = arith.constant 0 : index
    %c0_0 = arith.constant 0 : index
    %c0_1 = arith.constant 0 : index
    %1 = vector.load %arg1[%c0, %c0_0, %c0_1] : memref<1x10x8xf32, #tpu.memory_space<vmem>>, vector<1x8x8xf32>
    %2 = vector.shape_cast %1 : vector<1x8x8xf32> to vector<8x8xf32>
    %c0_2 = arith.constant 0 : index
    %c0_3 = arith.constant 0 : index
    %3 = vector.load %arg5[%c0_2, %c0_3] : memref<1x8xf32, #tpu.memory_space<vmem>>, vector<1x8xf32>
    %4 = vector.broadcast %3 : vector<1x8xf32> to vector<8x8xf32>
    %5 = arith.mulf %2, %4 : vector<8x8xf32>
    %c0_4 = arith.constant 0 : index
    %c0_5 = arith.constant 0 : index
    %6 = vector.load %arg6[%c0_4, %c0_5] : memref<1x8xf32, #tpu.memory_space<vmem>>, vector<1x8xf32>
    %7 = vector.broadcast %6 : vector<1x8xf32> to vector<8x8xf32>
    %8 = arith.addf %5, %7 : vector<8x8xf32>
    %cst_6 = arith.constant 0.000000e+00 : f32
    %9 = vector.broadcast %cst_6 : f32 to vector<8x8xf32>
    %10 = arith.maximumf %8, %9 : vector<8x8xf32>
    %11 = arith.truncf %10 : vector<8x8xf32> to vector<8x8xbf16>
    %c0_7 = arith.constant 0 : index
    %c0_8 = arith.constant 0 : index
    %c0_9 = arith.constant 0 : index
    %12 = vector.load %arg2[%c0_7, %c0_8, %c0_9] : memref<3x8x16xbf16, #tpu.memory_space<vmem>>, vector<1x8x16xbf16>
    %13 = vector.shape_cast %12 : vector<1x8x16xbf16> to vector<8x16xbf16>
    %cst_10 = arith.constant dense<0.000000e+00> : vector<8x16xf32>
    %14 = tpu.matmul %11, %13, %cst_10 {dimension_numbers = #tpu.dot_dimension_numbers<[1], [0], [0], [1], [0, 0, 1, 1], [], []>} : vector<8x8xbf16>, vector<8x16xbf16>, vector<8x16xf32> -> vector<8x16xf32>
    %15 = arith.addf %0, %14 : vector<8x16xf32>
    %c0_11 = arith.constant 0 : index
    %c1 = arith.constant 1 : index
    %c0_12 = arith.constant 0 : index
    %16 = vector.load %arg1[%c0_11, %c1, %c0_12] : memref<1x10x8xf32, #tpu.memory_space<vmem>>, vector<1x8x8xf32>
    %17 = vector.shape_cast %16 : vector<1x8x8xf32> to vector<8x8xf32>
    %c0_13 = arith.constant 0 : index
    %c0_14 = arith.constant 0 : index
    %18 = vector.load %arg5[%c0_13, %c0_14] : memref<1x8xf32, #tpu.memory_space<vmem>>, vector<1x8xf32>
    %19 = vector.broadcast %18 : vector<1x8xf32> to vector<8x8xf32>
    %20 = arith.mulf %17, %19 : vector<8x8xf32>
    %c0_15 = arith.constant 0 : index
    %c0_16 = arith.constant 0 : index
    %21 = vector.load %arg6[%c0_15, %c0_16] : memref<1x8xf32, #tpu.memory_space<vmem>>, vector<1x8xf32>
    %22 = vector.broadcast %21 : vector<1x8xf32> to vector<8x8xf32>
    %23 = arith.addf %20, %22 : vector<8x8xf32>
    %cst_17 = arith.constant 0.000000e+00 : f32
    %24 = vector.broadcast %cst_17 : f32 to vector<8x8xf32>
    %25 = arith.maximumf %23, %24 : vector<8x8xf32>
    %26 = arith.truncf %25 : vector<8x8xf32> to vector<8x8xbf16>
    %c1_18 = arith.constant 1 : index
    %c0_19 = arith.constant 0 : index
    %c0_20 = arith.constant 0 : index
    %27 = vector.load %arg2[%c1_18, %c0_19, %c0_20] : memref<3x8x16xbf16, #tpu.memory_space<vmem>>, vector<1x8x16xbf16>
    %28 = vector.shape_cast %27 : vector<1x8x16xbf16> to vector<8x16xbf16>
    %cst_21 = arith.constant dense<0.000000e+00> : vector<8x16xf32>
    %29 = tpu.matmul %26, %28, %cst_21 {dimension_numbers = #tpu.dot_dimension_numbers<[1], [0], [0], [1], [0, 0, 1, 1], [], []>} : vector<8x8xbf16>, vector<8x16xbf16>, vector<8x16xf32> -> vector<8x16xf32>
    %30 = arith.addf %15, %29 : vector<8x16xf32>
    %c0_22 = arith.constant 0 : index
    %c2 = arith.constant 2 : index
    %c0_23 = arith.constant 0 : index
    %31 = vector.load %arg1[%c0_22, %c2, %c0_23] : memref<1x10x8xf32, #tpu.memory_space<vmem>>, vector<1x8x8xf32>
    %32 = vector.shape_cast %31 : vector<1x8x8xf32> to vector<8x8xf32>
    %c0_24 = arith.constant 0 : index
    %c0_25 = arith.constant 0 : index
    %33 = vector.load %arg5[%c0_24, %c0_25] : memref<1x8xf32, #tpu.memory_space<vmem>>, vector<1x8xf32>
    %34 = vector.broadcast %33 : vector<1x8xf32> to vector<8x8xf32>
    %35 = arith.mulf %32, %34 : vector<8x8xf32>
    %c0_26 = arith.constant 0 : index
    %c0_27 = arith.constant 0 : index
    %36 = vector.load %arg6[%c0_26, %c0_27] : memref<1x8xf32, #tpu.memory_space<vmem>>, vector<1x8xf32>
    %37 = vector.broadcast %36 : vector<1x8xf32> to vector<8x8xf32>
    %38 = arith.addf %35, %37 : vector<8x8xf32>
    %cst_28 = arith.constant 0.000000e+00 : f32
    %39 = vector.broadcast %cst_28 : f32 to vector<8x8xf32>
    %40 = arith.maximumf %38, %39 : vector<8x8xf32>
    %41 = arith.truncf %40 : vector<8x8xf32> to vector<8x8xbf16>
    %c2_29 = arith.constant 2 : index
    %c0_30 = arith.constant 0 : index
    %c0_31 = arith.constant 0 : index
    %42 = vector.load %arg2[%c2_29, %c0_30, %c0_31] : memref<3x8x16xbf16, #tpu.memory_space<vmem>>, vector<1x8x16xbf16>
    %43 = vector.shape_cast %42 : vector<1x8x16xbf16> to vector<8x16xbf16>
    %cst_32 = arith.constant dense<0.000000e+00> : vector<8x16xf32>
    %44 = tpu.matmul %41, %43, %cst_32 {dimension_numbers = #tpu.dot_dimension_numbers<[1], [0], [0], [1], [0, 0, 1, 1], [], []>} : vector<8x8xbf16>, vector<8x16xbf16>, vector<8x16xf32> -> vector<8x16xf32>
    %45 = arith.addf %30, %44 : vector<8x16xf32>
    %c0_33 = arith.constant 0 : index
    %c0_34 = arith.constant 0 : index
    %46 = vector.load %arg3[%c0_33, %c0_34] : memref<1x16xf32, #tpu.memory_space<vmem>>, vector<1x16xf32>
    %47 = vector.broadcast %46 : vector<1x16xf32> to vector<8x16xf32>
    %48 = arith.mulf %45, %47 : vector<8x16xf32>
    %c0_35 = arith.constant 0 : index
    %c0_36 = arith.constant 0 : index
    %49 = vector.load %arg4[%c0_35, %c0_36] : memref<1x16xf32, #tpu.memory_space<vmem>>, vector<1x16xf32>
    %50 = vector.broadcast %49 : vector<1x16xf32> to vector<8x16xf32>
    %51 = arith.addf %48, %50 : vector<8x16xf32>
    %cst_37 = arith.constant 0.000000e+00 : f32
    %52 = vector.broadcast %cst_37 : f32 to vector<8x16xf32>
    %53 = arith.maximumf %51, %52 : vector<8x16xf32>
    %c0_38 = arith.constant 0 : index
    %c0_39 = arith.constant 0 : index
    %c0_40 = arith.constant 0 : index
    %54 = vector.load %arg7[%c0_38, %c0_39, %c0_40] : memref<1x8x16xf32, #tpu.memory_space<vmem>>, vector<1x8x16xf32>
    %55 = vector.shape_cast %54 : vector<1x8x16xf32> to vector<8x16xf32>
    %56 = vector.shape_cast %53 : vector<8x16xf32> to vector<1x8x16xf32>
    tpu.vector_store %arg7[%c0_38, %c0_39, %c0_40], %56 {strides = array<i32>} : memref<1x8x16xf32, #tpu.memory_space<vmem>>, vector<1x8x16xf32>,
    return
  }
  func.func @transform_0(%arg0: i32) -> (i32, i32, i32) {
    %c0_i32 = arith.constant 0 : i32
    %c0_i32_0 = arith.constant 0 : i32
    %c0_i32_1 = arith.constant 0 : i32
    return %arg0, %c0_i32, %c0_i32_0 : i32, i32, i32
  }
  func.func @transform_1(%arg0: i32) -> (i32, i32, i32) {
    %c0_i32 = arith.constant 0 : i32
    %c0_i32_0 = arith.constant 0 : i32
    %c0_i32_1 = arith.constant 0 : i32
    %c0_i32_2 = arith.constant 0 : i32
    return %c0_i32, %c0_i32_0, %c0_i32_1 : i32, i32, i32
  }
  func.func @transform_2(%arg0: i32) -> (i32, i32) {
    %c0_i32 = arith.constant 0 : i32
    %c0_i32_0 = arith.constant 0 : i32
    %c0_i32_1 = arith.constant 0 : i32
    return %c0_i32, %c0_i32_0 : i32, i32
  }
  func.func @transform_3(%arg0: i32) -> (i32, i32) {
    %c0_i32 = arith.constant 0 : i32
    %c0_i32_0 = arith.constant 0 : i32
    %c0_i32_1 = arith.constant 0 : i32
    return %c0_i32, %c0_i32_0 : i32, i32
  }
  func.func @transform_4(%arg0: i32) -> (i32, i32) {
    %c0_i32 = arith.constant 0 : i32
    %c0_i32_0 = arith.constant 0 : i32
    %c0_i32_1 = arith.constant 0 : i32
    return %c0_i32, %c0_i32_0 : i32, i32
  }
  func.func @transform_5(%arg0: i32) -> (i32, i32) {
    %c0_i32 = arith.constant 0 : i32
    %c0_i32_0 = arith.constant 0 : i32
    %c0_i32_1 = arith.constant 0 : i32
    return %c0_i32, %c0_i32_0 : i32, i32
  }
  func.func @transform_6(%arg0: i32) -> (i32, i32, i32) {
    %c0_i32 = arith.constant 0 : i32
    %c0_i32_0 = arith.constant 0 : i32
    %c0_i32_1 = arith.constant 0 : i32
    return %arg0, %c0_i32, %c0_i32_0 : i32, i32, i32
  }
}

module attributes {stable_mosaic.version = 11 : i64} {
  func.func @_fused_conv_kernel(%arg0: i32, %arg1: memref<1x10x16xf32, #tpu.memory_space<vmem>>, %arg2: memref<3x16x16xbf16, #tpu.memory_space<vmem>>, %arg3: memref<1x16xf32, #tpu.memory_space<vmem>>, %arg4: memref<1x16xf32, #tpu.memory_space<vmem>>, %arg5: memref<1x8x8xf32, #tpu.memory_space<vmem>>, %arg6: memref<8x16xf32, #tpu.memory_space<vmem>>, %arg7: memref<1x8x16xf32, #tpu.memory_space<vmem>>) attributes {dimension_semantics = [#tpu.dimension_semantics<parallel>], iteration_bounds = array<i64: 2>, scalar_prefetch = 0 : i64, scratch_operands = 0 : i64, tpu.core_type = #tpu.core_type<tc>, window_params = [{transform_indices = @transform_0, window_bounds = array<i64: 1, 10, 16>}, {pipeline_mode = #tpu.pipeline_mode<synchronous>, transform_indices = @transform_1, window_bounds = array<i64: 3, 16, 16>}, {pipeline_mode = #tpu.pipeline_mode<synchronous>, transform_indices = @transform_2, window_bounds = array<i64: 1, 16>}, {pipeline_mode = #tpu.pipeline_mode<synchronous>, transform_indices = @transform_3, window_bounds = array<i64: 1, 16>}, {transform_indices = @transform_4, window_bounds = array<i64: 1, 8, 8>}, {pipeline_mode = #tpu.pipeline_mode<synchronous>, transform_indices = @transform_5, window_bounds = array<i64: 8, 16>}, {transform_indices = @transform_6, window_bounds = array<i64: 1, 8, 16>}]} {
    %cst = arith.constant 0.000000e+00 : f32
    %0 = vector.broadcast %cst : f32 to vector<8x16xf32>
    %c0 = arith.constant 0 : index
    %c0_0 = arith.constant 0 : index
    %c0_1 = arith.constant 0 : index
    %1 = vector.load %arg1[%c0, %c0_0, %c0_1] : memref<1x10x16xf32, #tpu.memory_space<vmem>>, vector<1x8x16xf32>
    %2 = vector.shape_cast %1 : vector<1x8x16xf32> to vector<8x16xf32>
    %3 = arith.truncf %2 : vector<8x16xf32> to vector<8x16xbf16>
    %c0_2 = arith.constant 0 : index
    %c0_3 = arith.constant 0 : index
    %c0_4 = arith.constant 0 : index
    %4 = vector.load %arg2[%c0_2, %c0_3, %c0_4] : memref<3x16x16xbf16, #tpu.memory_space<vmem>>, vector<1x16x16xbf16>
    %5 = vector.shape_cast %4 : vector<1x16x16xbf16> to vector<16x16xbf16>
    %cst_5 = arith.constant dense<0.000000e+00> : vector<8x16xf32>
    %6 = tpu.matmul %3, %5, %cst_5 {dimension_numbers = #tpu.dot_dimension_numbers<[1], [0], [0], [1], [0, 0, 1, 1], [], []>} : vector<8x16xbf16>, vector<16x16xbf16>, vector<8x16xf32> -> vector<8x16xf32>
    %7 = arith.addf %0, %6 : vector<8x16xf32>
    %c0_6 = arith.constant 0 : index
    %c1 = arith.constant 1 : index
    %c0_7 = arith.constant 0 : index
    %8 = vector.load %arg1[%c0_6, %c1, %c0_7] : memref<1x10x16xf32, #tpu.memory_space<vmem>>, vector<1x8x16xf32>
    %9 = vector.shape_cast %8 : vector<1x8x16xf32> to vector<8x16xf32>
    %10 = arith.truncf %9 : vector<8x16xf32> to vector<8x16xbf16>
    %c1_8 = arith.constant 1 : index
    %c0_9 = arith.constant 0 : index
    %c0_10 = arith.constant 0 : index
    %11 = vector.load %arg2[%c1_8, %c0_9, %c0_10] : memref<3x16x16xbf16, #tpu.memory_space<vmem>>, vector<1x16x16xbf16>
    %12 = vector.shape_cast %11 : vector<1x16x16xbf16> to vector<16x16xbf16>
    %cst_11 = arith.constant dense<0.000000e+00> : vector<8x16xf32>
    %13 = tpu.matmul %10, %12, %cst_11 {dimension_numbers = #tpu.dot_dimension_numbers<[1], [0], [0], [1], [0, 0, 1, 1], [], []>} : vector<8x16xbf16>, vector<16x16xbf16>, vector<8x16xf32> -> vector<8x16xf32>
    %14 = arith.addf %7, %13 : vector<8x16xf32>
    %c0_12 = arith.constant 0 : index
    %c2 = arith.constant 2 : index
    %c0_13 = arith.constant 0 : index
    %15 = vector.load %arg1[%c0_12, %c2, %c0_13] : memref<1x10x16xf32, #tpu.memory_space<vmem>>, vector<1x8x16xf32>
    %16 = vector.shape_cast %15 : vector<1x8x16xf32> to vector<8x16xf32>
    %17 = arith.truncf %16 : vector<8x16xf32> to vector<8x16xbf16>
    %c2_14 = arith.constant 2 : index
    %c0_15 = arith.constant 0 : index
    %c0_16 = arith.constant 0 : index
    %18 = vector.load %arg2[%c2_14, %c0_15, %c0_16] : memref<3x16x16xbf16, #tpu.memory_space<vmem>>, vector<1x16x16xbf16>
    %19 = vector.shape_cast %18 : vector<1x16x16xbf16> to vector<16x16xbf16>
    %cst_17 = arith.constant dense<0.000000e+00> : vector<8x16xf32>
    %20 = tpu.matmul %17, %19, %cst_17 {dimension_numbers = #tpu.dot_dimension_numbers<[1], [0], [0], [1], [0, 0, 1, 1], [], []>} : vector<8x16xbf16>, vector<16x16xbf16>, vector<8x16xf32> -> vector<8x16xf32>
    %21 = arith.addf %14, %20 : vector<8x16xf32>
    %c0_18 = arith.constant 0 : index
    %c0_19 = arith.constant 0 : index
    %22 = vector.load %arg3[%c0_18, %c0_19] : memref<1x16xf32, #tpu.memory_space<vmem>>, vector<1x16xf32>
    %23 = vector.broadcast %22 : vector<1x16xf32> to vector<8x16xf32>
    %24 = arith.mulf %21, %23 : vector<8x16xf32>
    %c0_20 = arith.constant 0 : index
    %c0_21 = arith.constant 0 : index
    %25 = vector.load %arg4[%c0_20, %c0_21] : memref<1x16xf32, #tpu.memory_space<vmem>>, vector<1x16xf32>
    %26 = vector.broadcast %25 : vector<1x16xf32> to vector<8x16xf32>
    %27 = arith.addf %24, %26 : vector<8x16xf32>
    %c0_22 = arith.constant 0 : index
    %c0_23 = arith.constant 0 : index
    %c0_24 = arith.constant 0 : index
    %28 = vector.load %arg5[%c0_22, %c0_23, %c0_24] : memref<1x8x8xf32, #tpu.memory_space<vmem>>, vector<1x8x8xf32>
    %29 = vector.shape_cast %28 : vector<1x8x8xf32> to vector<8x8xf32>
    %c0_25 = arith.constant 0 : index
    %c0_26 = arith.constant 0 : index
    %30 = vector.load %arg6[%c0_25, %c0_26] : memref<8x16xf32, #tpu.memory_space<vmem>>, vector<8x16xf32>
    %cst_27 = arith.constant dense<0.000000e+00> : vector<8x16xf32>
    %31 = tpu.matmul %29, %30, %cst_27 {dimension_numbers = #tpu.dot_dimension_numbers<[1], [0], [0], [1], [0, 0, 1, 1], [], []>} : vector<8x8xf32>, vector<8x16xf32>, vector<8x16xf32> -> vector<8x16xf32>
    %32 = arith.addf %27, %31 : vector<8x16xf32>
    %c0_28 = arith.constant 0 : index
    %c0_29 = arith.constant 0 : index
    %c0_30 = arith.constant 0 : index
    %33 = vector.load %arg7[%c0_28, %c0_29, %c0_30] : memref<1x8x16xf32, #tpu.memory_space<vmem>>, vector<1x8x16xf32>
    %34 = vector.shape_cast %33 : vector<1x8x16xf32> to vector<8x16xf32>
    %35 = vector.shape_cast %32 : vector<8x16xf32> to vector<1x8x16xf32>
    tpu.vector_store %arg7[%c0_28, %c0_29, %c0_30], %35 {strides = array<i32>} : memref<1x8x16xf32, #tpu.memory_space<vmem>>, vector<1x8x16xf32>,
    return
  }
  func.func @transform_0(%arg0: i32) -> (i32, i32, i32) {
    %c0_i32 = arith.constant 0 : i32
    %c0_i32_0 = arith.constant 0 : i32
    %c0_i32_1 = arith.constant 0 : i32
    return %arg0, %c0_i32, %c0_i32_0 : i32, i32, i32
  }
  func.func @transform_1(%arg0: i32) -> (i32, i32, i32) {
    %c0_i32 = arith.constant 0 : i32
    %c0_i32_0 = arith.constant 0 : i32
    %c0_i32_1 = arith.constant 0 : i32
    %c0_i32_2 = arith.constant 0 : i32
    return %c0_i32, %c0_i32_0, %c0_i32_1 : i32, i32, i32
  }
  func.func @transform_2(%arg0: i32) -> (i32, i32) {
    %c0_i32 = arith.constant 0 : i32
    %c0_i32_0 = arith.constant 0 : i32
    %c0_i32_1 = arith.constant 0 : i32
    return %c0_i32, %c0_i32_0 : i32, i32
  }
  func.func @transform_3(%arg0: i32) -> (i32, i32) {
    %c0_i32 = arith.constant 0 : i32
    %c0_i32_0 = arith.constant 0 : i32
    %c0_i32_1 = arith.constant 0 : i32
    return %c0_i32, %c0_i32_0 : i32, i32
  }
  func.func @transform_4(%arg0: i32) -> (i32, i32, i32) {
    %c0_i32 = arith.constant 0 : i32
    %c0_i32_0 = arith.constant 0 : i32
    %c0_i32_1 = arith.constant 0 : i32
    return %arg0, %c0_i32, %c0_i32_0 : i32, i32, i32
  }
  func.func @transform_5(%arg0: i32) -> (i32, i32) {
    %c0_i32 = arith.constant 0 : i32
    %c0_i32_0 = arith.constant 0 : i32
    %c0_i32_1 = arith.constant 0 : i32
    return %c0_i32, %c0_i32_0 : i32, i32
  }
  func.func @transform_6(%arg0: i32) -> (i32, i32, i32) {
    %c0_i32 = arith.constant 0 : i32
    %c0_i32_0 = arith.constant 0 : i32
    %c0_i32_1 = arith.constant 0 : i32
    return %arg0, %c0_i32, %c0_i32_0 : i32, i32, i32
  }
}

module attributes {stable_mosaic.version = 11 : i64} {
  func.func @_fused_conv_kernel(%arg0: i32, %arg1: memref<1x6x16xf32, #tpu.memory_space<vmem>>, %arg2: memref<3x16x16xbf16, #tpu.memory_space<vmem>>, %arg3: memref<1x16xf32, #tpu.memory_space<vmem>>, %arg4: memref<1x16xf32, #tpu.memory_space<vmem>>, %arg5: memref<1x8x16xf32, #tpu.memory_space<vmem>>, %arg6: memref<1x4x16xf32, #tpu.memory_space<vmem>>) attributes {dimension_semantics = [#tpu.dimension_semantics<parallel>], iteration_bounds = array<i64: 2>, scalar_prefetch = 0 : i64, scratch_operands = 0 : i64, tpu.core_type = #tpu.core_type<tc>, window_params = [{transform_indices = @transform_0, window_bounds = array<i64: 1, 6, 16>}, {pipeline_mode = #tpu.pipeline_mode<synchronous>, transform_indices = @transform_1, window_bounds = array<i64: 3, 16, 16>}, {pipeline_mode = #tpu.pipeline_mode<synchronous>, transform_indices = @transform_2, window_bounds = array<i64: 1, 16>}, {pipeline_mode = #tpu.pipeline_mode<synchronous>, transform_indices = @transform_3, window_bounds = array<i64: 1, 16>}, {transform_indices = @transform_4, window_bounds = array<i64: 1, 8, 16>}, {transform_indices = @transform_5, window_bounds = array<i64: 1, 4, 16>}]} {
    %cst = arith.constant 0.000000e+00 : f32
    %0 = vector.broadcast %cst : f32 to vector<4x16xf32>
    %c0 = arith.constant 0 : index
    %c0_0 = arith.constant 0 : index
    %c0_1 = arith.constant 0 : index
    %1 = vector.load %arg1[%c0, %c0_0, %c0_1] : memref<1x6x16xf32, #tpu.memory_space<vmem>>, vector<1x4x16xf32>
    %2 = vector.shape_cast %1 : vector<1x4x16xf32> to vector<4x16xf32>
    %3 = arith.truncf %2 : vector<4x16xf32> to vector<4x16xbf16>
    %c0_2 = arith.constant 0 : index
    %c0_3 = arith.constant 0 : index
    %c0_4 = arith.constant 0 : index
    %4 = vector.load %arg2[%c0_2, %c0_3, %c0_4] : memref<3x16x16xbf16, #tpu.memory_space<vmem>>, vector<1x16x16xbf16>
    %5 = vector.shape_cast %4 : vector<1x16x16xbf16> to vector<16x16xbf16>
    %cst_5 = arith.constant dense<0.000000e+00> : vector<4x16xf32>
    %6 = tpu.matmul %3, %5, %cst_5 {dimension_numbers = #tpu.dot_dimension_numbers<[1], [0], [0], [1], [0, 0, 1, 1], [], []>} : vector<4x16xbf16>, vector<16x16xbf16>, vector<4x16xf32> -> vector<4x16xf32>
    %7 = arith.addf %0, %6 : vector<4x16xf32>
    %c0_6 = arith.constant 0 : index
    %c1 = arith.constant 1 : index
    %c0_7 = arith.constant 0 : index
    %8 = vector.load %arg1[%c0_6, %c1, %c0_7] : memref<1x6x16xf32, #tpu.memory_space<vmem>>, vector<1x4x16xf32>
    %9 = vector.shape_cast %8 : vector<1x4x16xf32> to vector<4x16xf32>
    %10 = arith.truncf %9 : vector<4x16xf32> to vector<4x16xbf16>
    %c1_8 = arith.constant 1 : index
    %c0_9 = arith.constant 0 : index
    %c0_10 = arith.constant 0 : index
    %11 = vector.load %arg2[%c1_8, %c0_9, %c0_10] : memref<3x16x16xbf16, #tpu.memory_space<vmem>>, vector<1x16x16xbf16>
    %12 = vector.shape_cast %11 : vector<1x16x16xbf16> to vector<16x16xbf16>
    %cst_11 = arith.constant dense<0.000000e+00> : vector<4x16xf32>
    %13 = tpu.matmul %10, %12, %cst_11 {dimension_numbers = #tpu.dot_dimension_numbers<[1], [0], [0], [1], [0, 0, 1, 1], [], []>} : vector<4x16xbf16>, vector<16x16xbf16>, vector<4x16xf32> -> vector<4x16xf32>
    %14 = arith.addf %7, %13 : vector<4x16xf32>
    %c0_12 = arith.constant 0 : index
    %c2 = arith.constant 2 : index
    %c0_13 = arith.constant 0 : index
    %15 = vector.load %arg1[%c0_12, %c2, %c0_13] : memref<1x6x16xf32, #tpu.memory_space<vmem>>, vector<1x4x16xf32>
    %16 = vector.shape_cast %15 : vector<1x4x16xf32> to vector<4x16xf32>
    %17 = arith.truncf %16 : vector<4x16xf32> to vector<4x16xbf16>
    %c2_14 = arith.constant 2 : index
    %c0_15 = arith.constant 0 : index
    %c0_16 = arith.constant 0 : index
    %18 = vector.load %arg2[%c2_14, %c0_15, %c0_16] : memref<3x16x16xbf16, #tpu.memory_space<vmem>>, vector<1x16x16xbf16>
    %19 = vector.shape_cast %18 : vector<1x16x16xbf16> to vector<16x16xbf16>
    %cst_17 = arith.constant dense<0.000000e+00> : vector<4x16xf32>
    %20 = tpu.matmul %17, %19, %cst_17 {dimension_numbers = #tpu.dot_dimension_numbers<[1], [0], [0], [1], [0, 0, 1, 1], [], []>} : vector<4x16xbf16>, vector<16x16xbf16>, vector<4x16xf32> -> vector<4x16xf32>
    %21 = arith.addf %14, %20 : vector<4x16xf32>
    %c0_18 = arith.constant 0 : index
    %c0_19 = arith.constant 0 : index
    %22 = vector.load %arg3[%c0_18, %c0_19] : memref<1x16xf32, #tpu.memory_space<vmem>>, vector<1x16xf32>
    %23 = vector.broadcast %22 : vector<1x16xf32> to vector<4x16xf32>
    %24 = arith.mulf %21, %23 : vector<4x16xf32>
    %c0_20 = arith.constant 0 : index
    %c0_21 = arith.constant 0 : index
    %25 = vector.load %arg4[%c0_20, %c0_21] : memref<1x16xf32, #tpu.memory_space<vmem>>, vector<1x16xf32>
    %26 = vector.broadcast %25 : vector<1x16xf32> to vector<4x16xf32>
    %27 = arith.addf %24, %26 : vector<4x16xf32>
    %c0_22 = arith.constant 0 : index
    %c0_23 = arith.constant 0 : index
    %c0_24 = arith.constant 0 : index
    %28 = tpu.strided_load %arg5[%c0_22, %c0_23, %c0_24] {strides = array<i32: 1, 2, 1>} : memref<1x8x16xf32, #tpu.memory_space<vmem>>, vector<1x4x16xf32>
    %29 = vector.shape_cast %28 : vector<1x4x16xf32> to vector<4x16xf32>
    %c0_25 = arith.constant 0 : index
    %c1_26 = arith.constant 1 : index
    %c0_27 = arith.constant 0 : index
    %30 = tpu.strided_load %arg5[%c0_25, %c1_26, %c0_27] {strides = array<i32: 1, 2, 1>} : memref<1x8x16xf32, #tpu.memory_space<vmem>>, vector<1x4x16xf32>
    %31 = vector.shape_cast %30 : vector<1x4x16xf32> to vector<4x16xf32>
    %32 = arith.maximumf %29, %31 : vector<4x16xf32>
    %33 = arith.addf %27, %32 : vector<4x16xf32>
    %c0_28 = arith.constant 0 : index
    %c0_29 = arith.constant 0 : index
    %c0_30 = arith.constant 0 : index
    %34 = vector.load %arg6[%c0_28, %c0_29, %c0_30] : memref<1x4x16xf32, #tpu.memory_space<vmem>>, vector<1x4x16xf32>
    %35 = vector.shape_cast %34 : vector<1x4x16xf32> to vector<4x16xf32>
    %36 = vector.shape_cast %33 : vector<4x16xf32> to vector<1x4x16xf32>
    tpu.vector_store %arg6[%c0_28, %c0_29, %c0_30], %36 {strides = array<i32>} : memref<1x4x16xf32, #tpu.memory_space<vmem>>, vector<1x4x16xf32>,
    return
  }
  func.func @transform_0(%arg0: i32) -> (i32, i32, i32) {
    %c0_i32 = arith.constant 0 : i32
    %c0_i32_0 = arith.constant 0 : i32
    %c0_i32_1 = arith.constant 0 : i32
    return %arg0, %c0_i32, %c0_i32_0 : i32, i32, i32
  }
  func.func @transform_1(%arg0: i32) -> (i32, i32, i32) {
    %c0_i32 = arith.constant 0 : i32
    %c0_i32_0 = arith.constant 0 : i32
    %c0_i32_1 = arith.constant 0 : i32
    %c0_i32_2 = arith.constant 0 : i32
    return %c0_i32, %c0_i32_0, %c0_i32_1 : i32, i32, i32
  }
  func.func @transform_2(%arg0: i32) -> (i32, i32) {
    %c0_i32 = arith.constant 0 : i32
    %c0_i32_0 = arith.constant 0 : i32
    %c0_i32_1 = arith.constant 0 : i32
    return %c0_i32, %c0_i32_0 : i32, i32
  }
  func.func @transform_3(%arg0: i32) -> (i32, i32) {
    %c0_i32 = arith.constant 0 : i32
    %c0_i32_0 = arith.constant 0 : i32
    %c0_i32_1 = arith.constant 0 : i32
    return %c0_i32, %c0_i32_0 : i32, i32
  }
  func.func @transform_4(%arg0: i32) -> (i32, i32, i32) {
    %c0_i32 = arith.constant 0 : i32
    %c0_i32_0 = arith.constant 0 : i32
    %c0_i32_1 = arith.constant 0 : i32
    return %arg0, %c0_i32, %c0_i32_0 : i32, i32, i32
  }
  func.func @transform_5(%arg0: i32) -> (i32, i32, i32) {
    %c0_i32 = arith.constant 0 : i32
    %c0_i32_0 = arith.constant 0 : i32
    %c0_i32_1 = arith.constant 0 : i32
    return %arg0, %c0_i32, %c0_i32_0 : i32, i32, i32
  }
}

module attributes {stable_mosaic.version = 11 : i64} {
  func.func @_head_kernel(%arg0: memref<2x4x16xf32, #tpu.memory_space<vmem>>, %arg1: memref<1x1x16xf32, #tpu.memory_space<vmem>>, %arg2: memref<1x1x16xf32, #tpu.memory_space<vmem>>, %arg3: memref<16x3xf32, #tpu.memory_space<vmem>>, %arg4: memref<1x3xf32, #tpu.memory_space<vmem>>, %arg5: memref<2x3xf32, #tpu.memory_space<vmem>>) attributes {dimension_semantics = [], scalar_prefetch = 0 : i64, scratch_operands = 0 : i64, tpu.core_type = #tpu.core_type<tc>} {
    %c0 = arith.constant 0 : index
    %c0_0 = arith.constant 0 : index
    %c0_1 = arith.constant 0 : index
    %0 = vector.load %arg0[%c0, %c0_0, %c0_1] : memref<2x4x16xf32, #tpu.memory_space<vmem>>, vector<2x4x16xf32>
    %c0_2 = arith.constant 0 : index
    %c0_3 = arith.constant 0 : index
    %c0_4 = arith.constant 0 : index
    %1 = vector.load %arg1[%c0_2, %c0_3, %c0_4] : memref<1x1x16xf32, #tpu.memory_space<vmem>>, vector<1x1x16xf32>
    %2 = vector.broadcast %1 : vector<1x1x16xf32> to vector<2x4x16xf32>
    %3 = arith.mulf %0, %2 : vector<2x4x16xf32>
    %c0_5 = arith.constant 0 : index
    %c0_6 = arith.constant 0 : index
    %c0_7 = arith.constant 0 : index
    %4 = vector.load %arg2[%c0_5, %c0_6, %c0_7] : memref<1x1x16xf32, #tpu.memory_space<vmem>>, vector<1x1x16xf32>
    %5 = vector.broadcast %4 : vector<1x1x16xf32> to vector<2x4x16xf32>
    %6 = arith.addf %3, %5 : vector<2x4x16xf32>
    %cst = arith.constant 0.000000e+00 : f32
    %7 = vector.broadcast %cst : f32 to vector<2x4x16xf32>
    %8 = arith.maximumf %6, %7 : vector<2x4x16xf32>
    %cst_8 = arith.constant dense<0.000000e+00> : vector<2x16xf32>
    %9 = vector.multi_reduction <add>, %8, %cst_8 [1] : vector<2x4x16xf32> to vector<2x16xf32>
    %cst_9 = arith.constant 2.500000e-01 : f32
    %10 = vector.broadcast %cst_9 : f32 to vector<2x16xf32>
    %11 = arith.mulf %9, %10 : vector<2x16xf32>
    %c0_10 = arith.constant 0 : index
    %c0_11 = arith.constant 0 : index
    %12 = vector.load %arg3[%c0_10, %c0_11] : memref<16x3xf32, #tpu.memory_space<vmem>>, vector<16x3xf32>
    %cst_12 = arith.constant dense<0.000000e+00> : vector<2x3xf32>
    %13 = tpu.matmul %11, %12, %cst_12 {dimension_numbers = #tpu.dot_dimension_numbers<[1], [0], [0], [1], [0, 0, 1, 1], [], []>} : vector<2x16xf32>, vector<16x3xf32>, vector<2x3xf32> -> vector<2x3xf32>
    %c0_13 = arith.constant 0 : index
    %c0_14 = arith.constant 0 : index
    %14 = vector.load %arg4[%c0_13, %c0_14] : memref<1x3xf32, #tpu.memory_space<vmem>>, vector<1x3xf32>
    %15 = vector.broadcast %14 : vector<1x3xf32> to vector<2x3xf32>
    %16 = arith.addf %13, %15 : vector<2x3xf32>
    %c0_15 = arith.constant 0 : index
    %c0_16 = arith.constant 0 : index
    %17 = vector.load %arg5[%c0_15, %c0_16] : memref<2x3xf32, #tpu.memory_space<vmem>>, vector<2x3xf32>
    tpu.vector_store %arg5[%c0_15, %c0_16], %16 {strides = array<i32>} : memref<2x3xf32, #tpu.memory_space<vmem>>, vector<2x3xf32>,
    return
  }
}

module attributes {stable_mosaic.version = 11 : i64} {
  func.func @_fused_conv_kernel(%arg0: i32, %arg1: memref<1x9x16xf32, #tpu.memory_space<vmem>>, %arg2: memref<3x16x16xbf16, #tpu.memory_space<vmem>>, %arg3: memref<1x16xf32, #tpu.memory_space<vmem>>, %arg4: memref<1x16xf32, #tpu.memory_space<vmem>>, %arg5: memref<1x16xf32, #tpu.memory_space<vmem>>, %arg6: memref<1x16xf32, #tpu.memory_space<vmem>>, %arg7: memref<1x4x16xf32, #tpu.memory_space<vmem>>) attributes {dimension_semantics = [#tpu.dimension_semantics<parallel>], iteration_bounds = array<i64: 2>, scalar_prefetch = 0 : i64, scratch_operands = 0 : i64, tpu.core_type = #tpu.core_type<tc>, window_params = [{transform_indices = @transform_0, window_bounds = array<i64: 1, 9, 16>}, {pipeline_mode = #tpu.pipeline_mode<synchronous>, transform_indices = @transform_1, window_bounds = array<i64: 3, 16, 16>}, {pipeline_mode = #tpu.pipeline_mode<synchronous>, transform_indices = @transform_2, window_bounds = array<i64: 1, 16>}, {pipeline_mode = #tpu.pipeline_mode<synchronous>, transform_indices = @transform_3, window_bounds = array<i64: 1, 16>}, {pipeline_mode = #tpu.pipeline_mode<synchronous>, transform_indices = @transform_4, window_bounds = array<i64: 1, 16>}, {pipeline_mode = #tpu.pipeline_mode<synchronous>, transform_indices = @transform_5, window_bounds = array<i64: 1, 16>}, {transform_indices = @transform_6, window_bounds = array<i64: 1, 4, 16>}]} {
    %cst = arith.constant 0.000000e+00 : f32
    %0 = vector.broadcast %cst : f32 to vector<4x16xf32>
    %c0 = arith.constant 0 : index
    %c0_0 = arith.constant 0 : index
    %c0_1 = arith.constant 0 : index
    %1 = tpu.strided_load %arg1[%c0, %c0_0, %c0_1] {strides = array<i32: 1, 2, 1>} : memref<1x9x16xf32, #tpu.memory_space<vmem>>, vector<1x4x16xf32>
    %2 = vector.shape_cast %1 : vector<1x4x16xf32> to vector<4x16xf32>
    %c0_2 = arith.constant 0 : index
    %c0_3 = arith.constant 0 : index
    %3 = vector.load %arg5[%c0_2, %c0_3] : memref<1x16xf32, #tpu.memory_space<vmem>>, vector<1x16xf32>
    %4 = vector.broadcast %3 : vector<1x16xf32> to vector<4x16xf32>
    %5 = arith.mulf %2, %4 : vector<4x16xf32>
    %c0_4 = arith.constant 0 : index
    %c0_5 = arith.constant 0 : index
    %6 = vector.load %arg6[%c0_4, %c0_5] : memref<1x16xf32, #tpu.memory_space<vmem>>, vector<1x16xf32>
    %7 = vector.broadcast %6 : vector<1x16xf32> to vector<4x16xf32>
    %8 = arith.addf %5, %7 : vector<4x16xf32>
    %cst_6 = arith.constant 0.000000e+00 : f32
    %9 = vector.broadcast %cst_6 : f32 to vector<4x16xf32>
    %10 = arith.maximumf %8, %9 : vector<4x16xf32>
    %11 = arith.truncf %10 : vector<4x16xf32> to vector<4x16xbf16>
    %c0_7 = arith.constant 0 : index
    %c0_8 = arith.constant 0 : index
    %c0_9 = arith.constant 0 : index
    %12 = vector.load %arg2[%c0_7, %c0_8, %c0_9] : memref<3x16x16xbf16, #tpu.memory_space<vmem>>, vector<1x16x16xbf16>
    %13 = vector.shape_cast %12 : vector<1x16x16xbf16> to vector<16x16xbf16>
    %cst_10 = arith.constant dense<0.000000e+00> : vector<4x16xf32>
    %14 = tpu.matmul %11, %13, %cst_10 {dimension_numbers = #tpu.dot_dimension_numbers<[1], [0], [0], [1], [0, 0, 1, 1], [], []>} : vector<4x16xbf16>, vector<16x16xbf16>, vector<4x16xf32> -> vector<4x16xf32>
    %15 = arith.addf %0, %14 : vector<4x16xf32>
    %c0_11 = arith.constant 0 : index
    %c1 = arith.constant 1 : index
    %c0_12 = arith.constant 0 : index
    %16 = tpu.strided_load %arg1[%c0_11, %c1, %c0_12] {strides = array<i32: 1, 2, 1>} : memref<1x9x16xf32, #tpu.memory_space<vmem>>, vector<1x4x16xf32>
    %17 = vector.shape_cast %16 : vector<1x4x16xf32> to vector<4x16xf32>
    %c0_13 = arith.constant 0 : index
    %c0_14 = arith.constant 0 : index
    %18 = vector.load %arg5[%c0_13, %c0_14] : memref<1x16xf32, #tpu.memory_space<vmem>>, vector<1x16xf32>
    %19 = vector.broadcast %18 : vector<1x16xf32> to vector<4x16xf32>
    %20 = arith.mulf %17, %19 : vector<4x16xf32>
    %c0_15 = arith.constant 0 : index
    %c0_16 = arith.constant 0 : index
    %21 = vector.load %arg6[%c0_15, %c0_16] : memref<1x16xf32, #tpu.memory_space<vmem>>, vector<1x16xf32>
    %22 = vector.broadcast %21 : vector<1x16xf32> to vector<4x16xf32>
    %23 = arith.addf %20, %22 : vector<4x16xf32>
    %cst_17 = arith.constant 0.000000e+00 : f32
    %24 = vector.broadcast %cst_17 : f32 to vector<4x16xf32>
    %25 = arith.maximumf %23, %24 : vector<4x16xf32>
    %26 = arith.truncf %25 : vector<4x16xf32> to vector<4x16xbf16>
    %c1_18 = arith.constant 1 : index
    %c0_19 = arith.constant 0 : index
    %c0_20 = arith.constant 0 : index
    %27 = vector.load %arg2[%c1_18, %c0_19, %c0_20] : memref<3x16x16xbf16, #tpu.memory_space<vmem>>, vector<1x16x16xbf16>
    %28 = vector.shape_cast %27 : vector<1x16x16xbf16> to vector<16x16xbf16>
    %cst_21 = arith.constant dense<0.000000e+00> : vector<4x16xf32>
    %29 = tpu.matmul %26, %28, %cst_21 {dimension_numbers = #tpu.dot_dimension_numbers<[1], [0], [0], [1], [0, 0, 1, 1], [], []>} : vector<4x16xbf16>, vector<16x16xbf16>, vector<4x16xf32> -> vector<4x16xf32>
    %30 = arith.addf %15, %29 : vector<4x16xf32>
    %c0_22 = arith.constant 0 : index
    %c2 = arith.constant 2 : index
    %c0_23 = arith.constant 0 : index
    %31 = tpu.strided_load %arg1[%c0_22, %c2, %c0_23] {strides = array<i32: 1, 2, 1>} : memref<1x9x16xf32, #tpu.memory_space<vmem>>, vector<1x4x16xf32>
    %32 = vector.shape_cast %31 : vector<1x4x16xf32> to vector<4x16xf32>
    %c0_24 = arith.constant 0 : index
    %c0_25 = arith.constant 0 : index
    %33 = vector.load %arg5[%c0_24, %c0_25] : memref<1x16xf32, #tpu.memory_space<vmem>>, vector<1x16xf32>
    %34 = vector.broadcast %33 : vector<1x16xf32> to vector<4x16xf32>
    %35 = arith.mulf %32, %34 : vector<4x16xf32>
    %c0_26 = arith.constant 0 : index
    %c0_27 = arith.constant 0 : index
    %36 = vector.load %arg6[%c0_26, %c0_27] : memref<1x16xf32, #tpu.memory_space<vmem>>, vector<1x16xf32>
    %37 = vector.broadcast %36 : vector<1x16xf32> to vector<4x16xf32>
    %38 = arith.addf %35, %37 : vector<4x16xf32>
    %cst_28 = arith.constant 0.000000e+00 : f32
    %39 = vector.broadcast %cst_28 : f32 to vector<4x16xf32>
    %40 = arith.maximumf %38, %39 : vector<4x16xf32>
    %41 = arith.truncf %40 : vector<4x16xf32> to vector<4x16xbf16>
    %c2_29 = arith.constant 2 : index
    %c0_30 = arith.constant 0 : index
    %c0_31 = arith.constant 0 : index
    %42 = vector.load %arg2[%c2_29, %c0_30, %c0_31] : memref<3x16x16xbf16, #tpu.memory_space<vmem>>, vector<1x16x16xbf16>
    %43 = vector.shape_cast %42 : vector<1x16x16xbf16> to vector<16x16xbf16>
    %cst_32 = arith.constant dense<0.000000e+00> : vector<4x16xf32>
    %44 = tpu.matmul %41, %43, %cst_32 {dimension_numbers = #tpu.dot_dimension_numbers<[1], [0], [0], [1], [0, 0, 1, 1], [], []>} : vector<4x16xbf16>, vector<16x16xbf16>, vector<4x16xf32> -> vector<4x16xf32>
    %45 = arith.addf %30, %44 : vector<4x16xf32>
    %c0_33 = arith.constant 0 : index
    %c0_34 = arith.constant 0 : index
    %46 = vector.load %arg3[%c0_33, %c0_34] : memref<1x16xf32, #tpu.memory_space<vmem>>, vector<1x16xf32>
    %47 = vector.broadcast %46 : vector<1x16xf32> to vector<4x16xf32>
    %48 = arith.mulf %45, %47 : vector<4x16xf32>
    %c0_35 = arith.constant 0 : index
    %c0_36 = arith.constant 0 : index
    %49 = vector.load %arg4[%c0_35, %c0_36] : memref<1x16xf32, #tpu.memory_space<vmem>>, vector<1x16xf32>
    %50 = vector.broadcast %49 : vector<1x16xf32> to vector<4x16xf32>
    %51 = arith.addf %48, %50 : vector<4x16xf32>
    %cst_37 = arith.constant 0.000000e+00 : f32
    %52 = vector.broadcast %cst_37 : f32 to vector<4x16xf32>
    %53 = arith.maximumf %51, %52 : vector<4x16xf32>
    %c0_38 = arith.constant 0 : index
    %c0_39 = arith.constant 0 : index
    %c0_40 = arith.constant 0 : index
    %54 = vector.load %arg7[%c0_38, %c0_39, %c0_40] : memref<1x4x16xf32, #tpu.memory_space<vmem>>, vector<1x4x16xf32>
    %55 = vector.shape_cast %54 : vector<1x4x16xf32> to vector<4x16xf32>
    %56 = vector.shape_cast %53 : vector<4x16xf32> to vector<1x4x16xf32>
    tpu.vector_store %arg7[%c0_38, %c0_39, %c0_40], %56 {strides = array<i32>} : memref<1x4x16xf32, #tpu.memory_space<vmem>>, vector<1x4x16xf32>,
    return
  }
  func.func @transform_0(%arg0: i32) -> (i32, i32, i32) {
    %c0_i32 = arith.constant 0 : i32
    %c0_i32_0 = arith.constant 0 : i32
    %c0_i32_1 = arith.constant 0 : i32
    return %arg0, %c0_i32, %c0_i32_0 : i32, i32, i32
  }
  func.func @transform_1(%arg0: i32) -> (i32, i32, i32) {
    %c0_i32 = arith.constant 0 : i32
    %c0_i32_0 = arith.constant 0 : i32
    %c0_i32_1 = arith.constant 0 : i32
    %c0_i32_2 = arith.constant 0 : i32
    return %c0_i32, %c0_i32_0, %c0_i32_1 : i32, i32, i32
  }
  func.func @transform_2(%arg0: i32) -> (i32, i32) {
    %c0_i32 = arith.constant 0 : i32
    %c0_i32_0 = arith.constant 0 : i32
    %c0_i32_1 = arith.constant 0 : i32
    return %c0_i32, %c0_i32_0 : i32, i32
  }
  func.func @transform_3(%arg0: i32) -> (i32, i32) {
    %c0_i32 = arith.constant 0 : i32
    %c0_i32_0 = arith.constant 0 : i32
    %c0_i32_1 = arith.constant 0 : i32
    return %c0_i32, %c0_i32_0 : i32, i32
  }
  func.func @transform_4(%arg0: i32) -> (i32, i32) {
    %c0_i32 = arith.constant 0 : i32
    %c0_i32_0 = arith.constant 0 : i32
    %c0_i32_1 = arith.constant 0 : i32
    return %c0_i32, %c0_i32_0 : i32, i32
  }
  func.func @transform_5(%arg0: i32) -> (i32, i32) {
    %c0_i32 = arith.constant 0 : i32
    %c0_i32_0 = arith.constant 0 : i32
    %c0_i32_1 = arith.constant 0 : i32
    return %c0_i32, %c0_i32_0 : i32, i32
  }
  func.func @transform_6(%arg0: i32) -> (i32, i32, i32) {
    %c0_i32 = arith.constant 0 : i32
    %c0_i32_0 = arith.constant 0 : i32
    %c0_i32_1 = arith.constant 0 : i32
    return %arg0, %c0_i32, %c0_i32_0 : i32, i32, i32
  }
}

</mosaic_0001>

<llo_original>
// kernel: resnet1d_forward.11
$region0: #{resnet1d_forward.11}
  #allocation0 [shape = 'u32[]', space=smem, size = 0x4, offset = 0x4, fixed_abs, tag = 'smem constant byte address 0x4 - core index']
  #allocation1 [shape = 'u32[144,128]{1,0:T(1,128)}', space=vmem, size = 0x12000, scoped, tag = 'internal scratch']
  %s0 = inlined_call_operand.vmem [shape: f32[2,18,8], index: 0, kind: input, shape index: {}]
  %s1 = inlined_call_operand.vmem [shape: bf16[3,8,8], index: 1, kind: input, shape index: {}]
  %s2 = inlined_call_operand.vmem [shape: f32[1,8], index: 2, kind: input, shape index: {}]
  %s3 = inlined_call_operand.vmem [shape: f32[1,8], index: 3, kind: input, shape index: {}]
  %s4 = inlined_call_operand.vmem [shape: f32[2,16,8], index: 4, kind: output, shape index: {}]
  %s5 = sld [smem:[#allocation0]]
  $region49: #{resnet1d_forward.11} parent=0
    _
  %s7 = ssub.s32 1, %s5
  %s8 = scalar_select 0, %s7, %s5
  loop: start=0, step=1, limit=4
  $region2: #{resnet1d_forward.11} parent=0 // loop_pre_header
    _
  $region3: #{resnet1d_forward.11} parent=0 // loop_header
    %s10 = sphi 0, %s14
    %p11 = scmp.ge.s32.totalorder %s10, 4
    %s20 = sphi 0, %s22
    %s23 = sphi 0, %s20
    %s24 = sphi 0, %s23
    %s40 = sphi 0, %s24
    %s44 = sphi 0, %s44
    %s46 = sphi 0, %s44
    %s47 = sphi 0, %s46
    %s61 = sphi 0, %s47
    %s65 = sphi 0, %s65
    %s67 = sphi 0, %s65
    %s68 = sphi 0, %s67
    %s82 = sphi 0, %s68
    %s86 = sphi 0, %s86
    %s88 = sphi 0, %s86
    %s89 = sphi 0, %s88
    %s103 = sphi 0, %s89
    %s109 = sphi 0, %s111
    %s112 = sphi 0, %s109
    %s113 = sphi 0, %s112
    %s129 = sphi 0, %s113
  $region4: #{resnet1d_forward.11} parent=0 // loop_header_branch
    %13 = sbr.rel (%p11) target = $region8
  $region5: #{resnet1d_forward.11} parent=0 // loop_body
    %s15 = ssub.s32 %s10, 1
    %s16 = ssub.s32 %s10, 2
    %s17 = sadd.s32 %s10, 1
    %s18 = ssub.s32 %s10, %s17
    %p19 = scmp.eq.s32.totalorder %s18, 0
    %s21 = sadd.s32 %s20, 1
    %s22 = scalar_select %p19, %s20, %s21
    %p25 = pneg %p19
    %p26 = scmp.eq.s32.totalorder %s10, 1
    %p27 = por %p25, %p26
    %p28 = scmp.ne.s32.totalorder %s20, %s23
    %p29 = scmp.eq.s32.totalorder %s10, 0
    %p30 = por %p28, %p29
    %p31 = scmp.ne.s32.totalorder %s20, %s23
    %p32 = scmp.eq.s32.totalorder %s15, 1
    %p33 = por %p31, %p32
    %p34 = scmp.ne.s32.totalorder %s23, %s24
    %p35 = scmp.eq.s32.totalorder %s15, 0
    %p36 = por %p34, %p35
    %p37 = scmp.ne.s32.totalorder %s23, %s24
    %p38 = scmp.eq.s32.totalorder %s16, 1
    %p39 = por %p37, %p38
    %p41 = scmp.ne.s32.totalorder %s24, %s40
    %p42 = scmp.eq.s32.totalorder %s16, 0
    %p43 = por %p41, %p42
    %s45 = sadd.s32 %s44, 1
    %p48 = scmp.eq.s32.totalorder %s10, 1
    %p49 = scmp.ne.s32.totalorder %s44, %s46
    %p50 = scmp.eq.s32.totalorder %s10, 0
    %p51 = por %p49, %p50
    %p52 = scmp.ne.s32.totalorder %s44, %s46
    %p53 = scmp.eq.s32.totalorder %s15, 1
    %p54 = por %p52, %p53
    %p55 = scmp.ne.s32.totalorder %s46, %s47
    %p56 = scmp.eq.s32.totalorder %s15, 0
    %p57 = por %p55, %p56
    %p58 = scmp.ne.s32.totalorder %s46, %s47
    %p59 = scmp.eq.s32.totalorder %s16, 1
    %p60 = por %p58, %p59
    %p62 = scmp.ne.s32.totalorder %s47, %s61
    %p63 = scmp.eq.s32.totalorder %s16, 0
    %p64 = por %p62, %p63
    %s66 = sadd.s32 %s65, 1
    %p69 = scmp.eq.s32.totalorder %s10, 1
    %p70 = scmp.ne.s32.totalorder %s65, %s67
    %p71 = scmp.eq.s32.totalorder %s10, 0
    %p72 = por %p70, %p71
    %p73 = scmp.ne.s32.totalorder %s65, %s67
    %p74 = scmp.eq.s32.totalorder %s15, 1
    %p75 = por %p73, %p74
    %p76 = scmp.ne.s32.totalorder %s67, %s68
    %p77 = scmp.eq.s32.totalorder %s15, 0
    %p78 = por %p76, %p77
    %p79 = scmp.ne.s32.totalorder %s67, %s68
    %p80 = scmp.eq.s32.totalorder %s16, 1
    %p81 = por %p79, %p80
    %p83 = scmp.ne.s32.totalorder %s68, %s82
    %p84 = scmp.eq.s32.totalorder %s16, 0
    %p85 = por %p83, %p84
    %s87 = sadd.s32 %s86, 1
    %p90 = scmp.eq.s32.totalorder %s10, 1
    %p91 = scmp.ne.s32.totalorder %s86, %s88
    %p92 = scmp.eq.s32.totalorder %s10, 0
    %p93 = por %p91, %p92
    %p94 = scmp.ne.s32.totalorder %s86, %s88
    %p95 = scmp.eq.s32.totalorder %s15, 1
    %p96 = por %p94, %p95
    %p97 = scmp.ne.s32.totalorder %s88, %s89
    %p98 = scmp.eq.s32.totalorder %s15, 0
    %p99 = por %p97, %p98
    %p100 = scmp.ne.s32.totalorder %s88, %s89
    %p101 = scmp.eq.s32.totalorder %s16, 1
    %p102 = por %p100, %p101
    %p104 = scmp.ne.s32.totalorder %s89, %s103
    %p105 = scmp.eq.s32.totalorder %s16, 0
    %p106 = por %p104, %p105
    %s107 = ssub.s32 %s10, %s17
    %p108 = scmp.eq.s32.totalorder %s107, 0
    %s110 = sadd.s32 %s109, 1
    %s111 = scalar_select %p108, %s109, %s110
    %p114 = pneg %p108
    %p115 = scmp.eq.s32.totalorder %s10, 1
    %p116 = por %p114, %p115
    %p117 = scmp.ne.s32.totalorder %s109, %s112
    %p118 = scmp.eq.s32.totalorder %s10, 0
    %p119 = por %p117, %p118
    %p120 = scmp.ne.s32.totalorder %s109, %s112
    %p121 = scmp.eq.s32.totalorder %s15, 1
    %p122 = por %p120, %p121
    %p123 = scmp.ne.s32.totalorder %s112, %s113
    %p124 = scmp.eq.s32.totalorder %s15, 0
    %p125 = por %p123, %p124
    %p126 = scmp.ne.s32.totalorder %s112, %s113
    %p127 = scmp.eq.s32.totalorder %s16, 1
    %p128 = por %p126, %p127
    %p130 = scmp.ne.s32.totalorder %s113, %s129
    %p131 = scmp.eq.s32.totalorder %s16, 0
    %p132 = por %p130, %p131
    %p133 = scmp.le.s32.totalorder 1, %s10
    %p134 = scmp.lt.s32.totalorder %s10, 3
    %p135 = pnand %p133, %p134
    %p136 = pneg %p135
    // Predicated region
    $region9: #{resnet1d_forward.11} parent=5 // pred_check
      _
    $region10: #{resnet1d_forward.11} parent=5 // pred_check_branch
      %138 = sbr.rel (%p135) target = $region12
    $region11: #{resnet1d_forward.11} parent=5 // pred_region
      %s139 = ssub.s32 %s10, 1
      // Predicated region
      $region13: #{resnet1d_forward.11} parent=11 // pred_check
        %p140 = pneg %p57
      $region14: #{resnet1d_forward.11} parent=11 // pred_check_branch
        %142 = sbr.rel (%p140) target = $region16
      $region15: #{resnet1d_forward.11} parent=11 // pred_region
        _
      $region16: #{resnet1d_forward.11} parent=11 // pred_fallthru
        _
      // Predicated region
      $region17: #{resnet1d_forward.11} parent=11 // pred_check
        %p143 = pneg %p78
      $region18: #{resnet1d_forward.11} parent=11 // pred_check_branch
        %145 = sbr.rel (%p143) target = $region20
      $region19: #{resnet1d_forward.11} parent=11 // pred_region
        _
      $region20: #{resnet1d_forward.11} parent=11 // pred_fallthru
        _
      // Predicated region
      $region21: #{resnet1d_forward.11} parent=11 // pred_check
        %p146 = pneg %p99
      $region22: #{resnet1d_forward.11} parent=11 // pred_check_branch
        %148 = sbr.rel (%p146) target = $region24
      $region23: #{resnet1d_forward.11} parent=11 // pred_region
        _
      $region24: #{resnet1d_forward.11} parent=11 // pred_fallthru
        _
    $region12: #{resnet1d_forward.11} parent=5 // pred_fallthru
      _
    %p149 = scmp.lt.s32.totalorder %s10, 2
    // Predicated region
    $region25: #{resnet1d_forward.11} parent=5 // pred_check
      %p150 = pneg %p149
    $region26: #{resnet1d_forward.11} parent=5 // pred_check_branch
      %152 = sbr.rel (%p150) target = $region28
    $region27: #{resnet1d_forward.11} parent=5 // pred_region
      // Predicated region
      $region29: #{resnet1d_forward.11} parent=27 // pred_check
        %p153 = pneg %p30
      $region30: #{resnet1d_forward.11} parent=27 // pred_check_branch
        %155 = sbr.rel (%p153) target = $region32
      $region31: #{resnet1d_forward.11} parent=27 // pred_region
        %p156 = scmp.lt.s32.totalorder %s10, 1
        %s157 = scalar_select %p156, %s10, 1
        %s158 = smul.addr %s157, 3
        %s159 = smul.addr %s158, 8
        %s160 = scalar_lea.vmem %s0, %s159
      $region32: #{resnet1d_forward.11} parent=27 // pred_fallthru
        _
    $region28: #{resnet1d_forward.11} parent=5 // pred_fallthru
      _
    %p161 = scmp.le.s32.totalorder 1, %s10
    %p162 = scmp.lt.s32.totalorder %s10, 3
    %p163 = pnand %p161, %p162
    %p164 = pneg %p163
    // Predicated region
    $region33: #{resnet1d_forward.11} parent=5 // pred_check
      _
    $region34: #{resnet1d_forward.11} parent=5 // pred_check_branch
      %166 = sbr.rel (%p163) target = $region36
    $region35: #{resnet1d_forward.11} parent=5 // pred_region
      %s167 = ssub.s32 %s10, 1
      %p168 = scmp.lt.s32.totalorder %s15, 1
      %s169 = scalar_select %p168, %s15, 1
      %s170 = smul.addr %s169, 3
      %s171 = smul.addr %s170, 8
      %s172 = scalar_lea.vmem %s0, %s171
      %p173 = pneg %p36
      %p174 = pneg %p33
      %p175 = pneg %p57
      %p176 = pneg %p54
      %p177 = pneg %p78
      %p178 = pneg %p75
      %p179 = pneg %p99
      %p180 = pneg %p96
      %p181 = pneg %p125
      %p182 = pneg %p122
      %p183 = scmp.lt.s32.totalorder %s15, 1
      %s184 = scalar_select %p183, %s15, 1
      %s185 = smul.addr %s184, 2
      %s186 = smul.addr %s185, 8
      %s187 = scalar_lea.vmem %s4, %s186
      %p188 = scmp.lt.s32.totalorder %s15, 1
      %s189 = scalar_select %p188, %s15, 1
      %s190 = smul.addr %s189, 3
      %s191 = smul.addr %s190, 8
      %s192 = scalar_lea.vmem %s0, %s191
      %p193 = scmp.lt.s32.totalorder %s15, 1
      %s194 = scalar_select %p193, %s15, 1
      %s195 = smul.addr %s194, 2
      %s196 = smul.addr %s195, 8
      %s197 = scalar_lea.vmem %s4, %s196
      %v199 = vld [vmem:[%s192] sm:$0xff]
      %v200 = vld [vmem:[%s192 + $0x8] sm:$0xff]
      %v201 = vpack.c.bf16 %v200, %v199
      %v202 = vld [vmem:[%s1] sm:$0xf]
      %v203 = vld [vmem:[%s192 + $0x1] sm:$0xff]
      %v204 = vld [vmem:[%s192 + $0x9] sm:$0xff]
      %v205 = vpack.c.bf16 %v204, %v203
      %s206 = scalar_lea.vmem %s1, 4
      %v207 = vld [vmem:[%s206] sm:$0xf]
      %vm208 = vcmask 64512
      %v210 = vsel %vm208, %v205, 0
      %vm212 = vcmask 1043456
      %v214 = vsel %vm212, %v207, 0
      %216 = vmatprep.subr.bf16.mxu0 0
      %217 = vmatpush1.bf16.msra.mxu0 %v214
      %218 = vmatprep.subr.bf16.mxu0 0
      %219 = vmatpush1.bf16.msra.mxu0 0
      %220 = vmatprep.subr.bf16.mxu0 0
      %221 = vmatpush1.bf16.msra.mxu0 0
      %222 = vmatprep.subr.bf16.mxu0 0
      %223 = vmatpush1.bf16.msra.mxu0 0
      %224 = vmatprep.subr.bf16.mxu0 0
      %225 = vmatpush1.bf16.msra.mxu0 0
      %226 = vmatprep.subr.bf16.mxu0 0
      %227 = vmatpush1.bf16.msra.mxu0 0
      %228 = vmatprep.subr.bf16.mxu0 0
      %229 = vmatpush1.bf16.msra.mxu0 0
      %230 = vmatprep.subr.bf16.mxu0 0
      %231 = vmatpush1.bf16.msra.mxu0 0
      %232 = vmatprep.subr.bf16.mxu0 0
      %233 = vmatpush1.bf16.msra.mxu0 0
      %234 = vmatprep.subr.bf16.mxu0 0
      %235 = vmatpush1.bf16.msra.mxu0 0
      %236 = vmatprep.subr.bf16.mxu0 0
      %237 = vmatpush1.bf16.msra.mxu0 0
      %238 = vmatprep.subr.bf16.mxu0 0
      %239 = vmatpush1.bf16.msra.mxu0 0
      %240 = vmatprep.subr.bf16.mxu0 0
      %241 = vmatpush1.bf16.msra.mxu0 0
      %242 = vmatprep.subr.bf16.mxu0 0
      %243 = vmatpush1.bf16.msra.mxu0 0
      %244 = vmatprep.subr.bf16.mxu0 0
      %245 = vmatpush1.bf16.msra.mxu0 0
      %246 = vmatprep.subr.bf16.mxu0 0
      %247 = vmatpush1.bf16.msra.mxu0 0
      %248 = vmatprep.mubr.bf16.mxu0 0
      %249 = vmatmul.mubr.bf16.gmra.mrb[0].mxu0 %v210
      %v250 = vpop.f32.mrb[0].mxu0
      %v251 = vadd.f32 0.0, %v250
      %v252 = vpop.f32.mrb[0].mxu0
      %v253 = vpop.f32.mrb[0].mxu0
      %v254 = vadd.f32 0.0, %v253
      %v255 = vpop.f32.mrb[0].mxu0
      %256 = vdwg.mxu0
      %v258 = vsel %vm208, %v201, 0
      %v261 = vsel %vm212, %v202, 0
      %263 = vmatprep.subr.bf16.mxu0 0
      %264 = vmatpush1.bf16.msra.mxu0 %v261
      %265 = vmatprep.subr.bf16.mxu0 0
      %266 = vmatpush1.bf16.msra.mxu0 0
      %267 = vmatprep.subr.bf16.mxu0 0
      %268 = vmatpush1.bf16.msra.mxu0 0
      %269 = vmatprep.subr.bf16.mxu0 0
      %270 = vmatpush1.bf16.msra.mxu0 0
      %271 = vmatprep.subr.bf16.mxu0 0
      %272 = vmatpush1.bf16.msra.mxu0 0
      %273 = vmatprep.subr.bf16.mxu0 0
      %274 = vmatpush1.bf16.msra.mxu0 0
      %275 = vmatprep.subr.bf16.mxu0 0
      %276 = vmatpush1.bf16.msra.mxu0 0
      %277 = vmatprep.subr.bf16.mxu0 0
      %278 = vmatpush1.bf16.msra.mxu0 0
      %279 = vmatprep.subr.bf16.mxu0 0
      %280 = vmatpush1.bf16.msra.mxu0 0
      %281 = vmatprep.subr.bf16.mxu0 0
      %282 = vmatpush1.bf16.msra.mxu0 0
      %283 = vmatprep.subr.bf16.mxu0 0
      %284 = vmatpush1.bf16.msra.mxu0 0
      %285 = vmatprep.subr.bf16.mxu0 0
      %286 = vmatpush1.bf16.msra.mxu0 0
      %287 = vmatprep.subr.bf16.mxu0 0
      %288 = vmatpush1.bf16.msra.mxu0 0
      %289 = vmatprep.subr.bf16.mxu0 0
      %290 = vmatpush1.bf16.msra.mxu0 0
      %291 = vmatprep.subr.bf16.mxu0 0
      %292 = vmatpush1.bf16.msra.mxu0 0
      %293 = vmatprep.subr.bf16.mxu0 0
      %294 = vmatpush1.bf16.msra.mxu0 0
      %295 = vmatprep.mubr.bf16.mxu0 0
      %296 = vmatmul.mubr.bf16.gmra.mrb[0].mxu0 %v258
      %v297 = vpop.f32.mrb[0].mxu0
      %v298 = vadd.f32 %v251, %v297
      %v299 = vpop.f32.mrb[0].mxu0
      %v300 = vpop.f32.mrb[0].mxu0
      %v301 = vadd.f32 %v254, %v300
      %v302 = vpop.f32.mrb[0].mxu0
      %303 = vdwg.mxu0
      %v304 = vld [vmem:[%s192 + $0x2] sm:$0xff]
      %v305 = vld [vmem:[%s192 + $0xa] sm:$0xff]
      %v306 = vpack.c.bf16 %v305, %v304
      %s307 = scalar_lea.vmem %s1, 8
      %v308 = vld [vmem:[%s307] sm:$0xf]
      %v310 = vsel %vm208, %v306, 0
      %v313 = vsel %vm212, %v308, 0
      %315 = vmatprep.subr.bf16.mxu0 0
      %316 = vmatpush1.bf16.msra.mxu0 %v313
      %317 = vmatprep.subr.bf16.mxu0 0
      %318 = vmatpush1.bf16.msra.mxu0 0
      %319 = vmatprep.subr.bf16.mxu0 0
      %320 = vmatpush1.bf16.msra.mxu0 0
      %321 = vmatprep.subr.bf16.mxu0 0
      %322 = vmatpush1.bf16.msra.mxu0 0
      %323 = vmatprep.subr.bf16.mxu0 0
      %324 = vmatpush1.bf16.msra.mxu0 0
      %325 = vmatprep.subr.bf16.mxu0 0
      %326 = vmatpush1.bf16.msra.mxu0 0
      %327 = vmatprep.subr.bf16.mxu0 0
      %328 = vmatpush1.bf16.msra.mxu0 0
      %329 = vmatprep.subr.bf16.mxu0 0
      %330 = vmatpush1.bf16.msra.mxu0 0
      %331 = vmatprep.subr.bf16.mxu0 0
      %332 = vmatpush1.bf16.msra.mxu0 0
      %333 = vmatprep.subr.bf16.mxu0 0
      %334 = vmatpush1.bf16.msra.mxu0 0
      %335 = vmatprep.subr.bf16.mxu0 0
      %336 = vmatpush1.bf16.msra.mxu0 0
      %337 = vmatprep.subr.bf16.mxu0 0
      %338 = vmatpush1.bf16.msra.mxu0 0
      %339 = vmatprep.subr.bf16.mxu0 0
      %340 = vmatpush1.bf16.msra.mxu0 0
      %341 = vmatprep.subr.bf16.mxu0 0
      %342 = vmatpush1.bf16.msra.mxu0 0
      %343 = vmatprep.subr.bf16.mxu0 0
      %344 = vmatpush1.bf16.msra.mxu0 0
      %345 = vmatprep.subr.bf16.mxu0 0
      %346 = vmatpush1.bf16.msra.mxu0 0
      %347 = vmatprep.mubr.bf16.mxu0 0
      %348 = vmatmul.mubr.bf16.gmra.mrb[0].mxu0 %v310
      %v349 = vpop.f32.mrb[0].mxu0
      %v350 = vadd.f32 0.0, %v349
      %v351 = vpop.f32.mrb[0].mxu0
      %v352 = vpop.f32.mrb[0].mxu0
      %v353 = vadd.f32 0.0, %v352
      %v354 = vpop.f32.mrb[0].mxu0
      %355 = vdwg.mxu0
      %v356 = vadd.f32 %v298, %v350
      %v357 = vadd.f32 %v301, %v353
      %v358 = vld [vmem:[%s2] sm:$0x1]
      %v360 = vlaneseq
      %v361 = vshrl.u32 %v360, 7
      %v362 = vsub.s32 0, %v361
      %v363 = vrot.slane %v358, %v362
      %v365 = vmul.f32 %v356, %v363
      %v366 = vmul.f32 %v357, %v363
      %v367 = vld [vmem:[%s3] sm:$0x1]
      %v369 = vlaneseq
      %v370 = vshrl.u32 %v369, 7
      %v371 = vsub.s32 0, %v370
      %v372 = vrot.slane %v367, %v371
      %v374 = vadd.f32 %v365, %v372
      %v375 = vadd.f32 %v366, %v372
      %v376 = vmax.f32 %v374, 0.0
      %v377 = vmax.f32 %v375, 0.0
      %378 = vst.msk [vmem:[%s197] sm:$0xff] %vm208, %v376
      %379 = vst.msk [vmem:[%s197 + $0x8] sm:$0xff] %vm208, %v377
      %p380 = scmp.lt.s32.totalorder %s15, 1
      %s381 = scalar_select %p380, %s15, 1
      %s382 = smul.addr %s381, 2
      %s383 = smul.addr %s382, 8
      %s384 = scalar_lea.vmem %s4, %s383
      // Predicated region
      $region37: #{resnet1d_forward.11} parent=35 // pred_check
        %p385 = pneg %p122
      $region38: #{resnet1d_forward.11} parent=35 // pred_check_branch
        %387 = sbr.rel (%p385) target = $region40
      $region39: #{resnet1d_forward.11} parent=35 // pred_region
        _
      $region40: #{resnet1d_forward.11} parent=35 // pred_fallthru
        _
    $region36: #{resnet1d_forward.11} parent=5 // pred_fallthru
      _
    %p388 = scmp.le.s32.totalorder 2, %s10
    // Predicated region
    $region41: #{resnet1d_forward.11} parent=5 // pred_check
      %p389 = pneg %p388
    $region42: #{resnet1d_forward.11} parent=5 // pred_check_branch
      %391 = sbr.rel (%p389) target = $region44
    $region43: #{resnet1d_forward.11} parent=5 // pred_region
      %s392 = ssub.s32 %s10, 2
      // Predicated region
      $region45: #{resnet1d_forward.11} parent=43 // pred_check
        %p393 = pneg %p128
      $region46: #{resnet1d_forward.11} parent=43 // pred_check_branch
        %395 = sbr.rel (%p393) target = $region48
      $region47: #{resnet1d_forward.11} parent=43 // pred_region
        %p396 = scmp.lt.s32.totalorder %s16, 1
        %s397 = scalar_select %p396, %s16, 1
        %s398 = smul.addr %s397, 2
        %s399 = smul.addr %s398, 8
        %s400 = scalar_lea.vmem %s4, %s399
      $region48: #{resnet1d_forward.11} parent=43 // pred_fallthru
        _
    $region44: #{resnet1d_forward.11} parent=5 // pred_fallthru
      _
  $region6: #{resnet1d_forward.11} parent=0 // loop_footer
    %s14 = sadd.s32 1, %s10
  $region7: #{resnet1d_forward.11} parent=0 // loop_footer_branch
    %9 = sbr.rel target = $region3
  $region8: #{resnet1d_forward.11} parent=0 // loop_exit
    _

// kernel: resnet1d_forward.12
$region0: #{resnet1d_forward.12}
  #allocation0 [shape = 'u32[]', space=smem, size = 0x4, offset = 0x4, fixed_abs, tag = 'smem constant byte address 0x4 - core index']
  #allocation1 [shape = 'u32[144,128]{1,0:T(1,128)}', space=vmem, size = 0x12000, scoped, tag = 'internal scratch']
  %s0 = inlined_call_operand.vmem [shape: f32[2,18,8], index: 0, kind: input, shape index: {}]
  %s1 = inlined_call_operand.vmem [shape: bf16[3,8,8], index: 1, kind: input, shape index: {}]
  %s2 = inlined_call_operand.vmem [shape: f32[1,8], index: 2, kind: input, shape index: {}]
  %s3 = inlined_call_operand.vmem [shape: f32[1,8], index: 3, kind: input, shape index: {}]
  %s4 = inlined_call_operand.vmem [shape: f32[2,16,8], index: 4, kind: input, shape index: {}]
  %s5 = inlined_call_operand.vmem [shape: f32[2,16,8], index: 5, kind: output, shape index: {}]
  %s6 = sld [smem:[#allocation0]]
  $region53: #{resnet1d_forward.12} parent=0
    _
  %s8 = ssub.s32 1, %s6
  %s9 = scalar_select 0, %s8, %s6
  loop: start=0, step=1, limit=4
  $region2: #{resnet1d_forward.12} parent=0 // loop_pre_header
    _
  $region3: #{resnet1d_forward.12} parent=0 // loop_header
    %s11 = sphi 0, %s15
    %p12 = scmp.ge.s32.totalorder %s11, 4
    %s21 = sphi 0, %s23
    %s24 = sphi 0, %s21
    %s25 = sphi 0, %s24
    %s41 = sphi 0, %s25
    %s45 = sphi 0, %s45
    %s47 = sphi 0, %s45
    %s48 = sphi 0, %s47
    %s62 = sphi 0, %s48
    %s66 = sphi 0, %s66
    %s68 = sphi 0, %s66
    %s69 = sphi 0, %s68
    %s83 = sphi 0, %s69
    %s87 = sphi 0, %s87
    %s89 = sphi 0, %s87
    %s90 = sphi 0, %s89
    %s104 = sphi 0, %s90
    %s110 = sphi 0, %s112
    %s113 = sphi 0, %s110
    %s114 = sphi 0, %s113
    %s130 = sphi 0, %s114
    %s136 = sphi 0, %s138
    %s139 = sphi 0, %s136
    %s140 = sphi 0, %s139
    %s156 = sphi 0, %s140
  $region4: #{resnet1d_forward.12} parent=0 // loop_header_branch
    %14 = sbr.rel (%p12) target = $region8
  $region5: #{resnet1d_forward.12} parent=0 // loop_body
    %s16 = ssub.s32 %s11, 1
    %s17 = ssub.s32 %s11, 2
    %s18 = sadd.s32 %s11, 1
    %s19 = ssub.s32 %s11, %s18
    %p20 = scmp.eq.s32.totalorder %s19, 0
    %s22 = sadd.s32 %s21, 1
    %s23 = scalar_select %p20, %s21, %s22
    %p26 = pneg %p20
    %p27 = scmp.eq.s32.totalorder %s11, 1
    %p28 = por %p26, %p27
    %p29 = scmp.ne.s32.totalorder %s21, %s24
    %p30 = scmp.eq.s32.totalorder %s11, 0
    %p31 = por %p29, %p30
    %p32 = scmp.ne.s32.totalorder %s21, %s24
    %p33 = scmp.eq.s32.totalorder %s16, 1
    %p34 = por %p32, %p33
    %p35 = scmp.ne.s32.totalorder %s24, %s25
    %p36 = scmp.eq.s32.totalorder %s16, 0
    %p37 = por %p35, %p36
    %p38 = scmp.ne.s32.totalorder %s24, %s25
    %p39 = scmp.eq.s32.totalorder %s17, 1
    %p40 = por %p38, %p39
    %p42 = scmp.ne.s32.totalorder %s25, %s41
    %p43 = scmp.eq.s32.totalorder %s17, 0
    %p44 = por %p42, %p43
    %s46 = sadd.s32 %s45, 1
    %p49 = scmp.eq.s32.totalorder %s11, 1
    %p50 = scmp.ne.s32.totalorder %s45, %s47
    %p51 = scmp.eq.s32.totalorder %s11, 0
    %p52 = por %p50, %p51
    %p53 = scmp.ne.s32.totalorder %s45, %s47
    %p54 = scmp.eq.s32.totalorder %s16, 1
    %p55 = por %p53, %p54
    %p56 = scmp.ne.s32.totalorder %s47, %s48
    %p57 = scmp.eq.s32.totalorder %s16, 0
    %p58 = por %p56, %p57
    %p59 = scmp.ne.s32.totalorder %s47, %s48
    %p60 = scmp.eq.s32.totalorder %s17, 1
    %p61 = por %p59, %p60
    %p63 = scmp.ne.s32.totalorder %s48, %s62
    %p64 = scmp.eq.s32.totalorder %s17, 0
    %p65 = por %p63, %p64
    %s67 = sadd.s32 %s66, 1
    %p70 = scmp.eq.s32.totalorder %s11, 1
    %p71 = scmp.ne.s32.totalorder %s66, %s68
    %p72 = scmp.eq.s32.totalorder %s11, 0
    %p73 = por %p71, %p72
    %p74 = scmp.ne.s32.totalorder %s66, %s68
    %p75 = scmp.eq.s32.totalorder %s16, 1
    %p76 = por %p74, %p75
    %p77 = scmp.ne.s32.totalorder %s68, %s69
    %p78 = scmp.eq.s32.totalorder %s16, 0
    %p79 = por %p77, %p78
    %p80 = scmp.ne.s32.totalorder %s68, %s69
    %p81 = scmp.eq.s32.totalorder %s17, 1
    %p82 = por %p80, %p81
    %p84 = scmp.ne.s32.totalorder %s69, %s83
    %p85 = scmp.eq.s32.totalorder %s17, 0
    %p86 = por %p84, %p85
    %s88 = sadd.s32 %s87, 1
    %p91 = scmp.eq.s32.totalorder %s11, 1
    %p92 = scmp.ne.s32.totalorder %s87, %s89
    %p93 = scmp.eq.s32.totalorder %s11, 0
    %p94 = por %p92, %p93
    %p95 = scmp.ne.s32.totalorder %s87, %s89
    %p96 = scmp.eq.s32.totalorder %s16, 1
    %p97 = por %p95, %p96
    %p98 = scmp.ne.s32.totalorder %s89, %s90
    %p99 = scmp.eq.s32.totalorder %s16, 0
    %p100 = por %p98, %p99
    %p101 = scmp.ne.s32.totalorder %s89, %s90
    %p102 = scmp.eq.s32.totalorder %s17, 1
    %p103 = por %p101, %p102
    %p105 = scmp.ne.s32.totalorder %s90, %s104
    %p106 = scmp.eq.s32.totalorder %s17, 0
    %p107 = por %p105, %p106
    %s108 = ssub.s32 %s11, %s18
    %p109 = scmp.eq.s32.totalorder %s108, 0
    %s111 = sadd.s32 %s110, 1
    %s112 = scalar_select %p109, %s110, %s111
    %p115 = pneg %p109
    %p116 = scmp.eq.s32.totalorder %s11, 1
    %p117 = por %p115, %p116
    %p118 = scmp.ne.s32.totalorder %s110, %s113
    %p119 = scmp.eq.s32.totalorder %s11, 0
    %p120 = por %p118, %p119
    %p121 = scmp.ne.s32.totalorder %s110, %s113
    %p122 = scmp.eq.s32.totalorder %s16, 1
    %p123 = por %p121, %p122
    %p124 = scmp.ne.s32.totalorder %s113, %s114
    %p125 = scmp.eq.s32.totalorder %s16, 0
    %p126 = por %p124, %p125
    %p127 = scmp.ne.s32.totalorder %s113, %s114
    %p128 = scmp.eq.s32.totalorder %s17, 1
    %p129 = por %p127, %p128
    %p131 = scmp.ne.s32.totalorder %s114, %s130
    %p132 = scmp.eq.s32.totalorder %s17, 0
    %p133 = por %p131, %p132
    %s134 = ssub.s32 %s11, %s18
    %p135 = scmp.eq.s32.totalorder %s134, 0
    %s137 = sadd.s32 %s136, 1
    %s138 = scalar_select %p135, %s136, %s137
    %p141 = pneg %p135
    %p142 = scmp.eq.s32.totalorder %s11, 1
    %p143 = por %p141, %p142
    %p144 = scmp.ne.s32.totalorder %s136, %s139
    %p145 = scmp.eq.s32.totalorder %s11, 0
    %p146 = por %p144, %p145
    %p147 = scmp.ne.s32.totalorder %s136, %s139
    %p148 = scmp.eq.s32.totalorder %s16, 1
    %p149 = por %p147, %p148
    %p150 = scmp.ne.s32.totalorder %s139, %s140
    %p151 = scmp.eq.s32.totalorder %s16, 0
    %p152 = por %p150, %p151
    %p153 = scmp.ne.s32.totalorder %s139, %s140
    %p154 = scmp.eq.s32.totalorder %s17, 1
    %p155 = por %p153, %p154
    %p157 = scmp.ne.s32.totalorder %s140, %s156
    %p158 = scmp.eq.s32.totalorder %s17, 0
    %p159 = por %p157, %p158
    %p160 = scmp.le.s32.totalorder 1, %s11
    %p161 = scmp.lt.s32.totalorder %s11, 3
    %p162 = pnand %p160, %p161
    %p163 = pneg %p162
    // Predicated region
    $region9: #{resnet1d_forward.12} parent=5 // pred_check
      _
    $region10: #{resnet1d_forward.12} parent=5 // pred_check_branch
      %165 = sbr.rel (%p162) target = $region12
    $region11: #{resnet1d_forward.12} parent=5 // pred_region
      %s166 = ssub.s32 %s11, 1
      // Predicated region
      $region13: #{resnet1d_forward.12} parent=11 // pred_check
        %p167 = pneg %p58
      $region14: #{resnet1d_forward.12} parent=11 // pred_check_branch
        %169 = sbr.rel (%p167) target = $region16
      $region15: #{resnet1d_forward.12} parent=11 // pred_region
        _
      $region16: #{resnet1d_forward.12} parent=11 // pred_fallthru
        _
      // Predicated region
      $region17: #{resnet1d_forward.12} parent=11 // pred_check
        %p170 = pneg %p79
      $region18: #{resnet1d_forward.12} parent=11 // pred_check_branch
        %172 = sbr.rel (%p170) target = $region20
      $region19: #{resnet1d_forward.12} parent=11 // pred_region
        _
      $region20: #{resnet1d_forward.12} parent=11 // pred_fallthru
        _
      // Predicated region
      $region21: #{resnet1d_forward.12} parent=11 // pred_check
        %p173 = pneg %p100
      $region22: #{resnet1d_forward.12} parent=11 // pred_check_branch
        %175 = sbr.rel (%p173) target = $region24
      $region23: #{resnet1d_forward.12} parent=11 // pred_region
        _
      $region24: #{resnet1d_forward.12} parent=11 // pred_fallthru
        _
    $region12: #{resnet1d_forward.12} parent=5 // pred_fallthru
      _
    %p176 = scmp.lt.s32.totalorder %s11, 2
    // Predicated region
    $region25: #{resnet1d_forward.12} parent=5 // pred_check
      %p177 = pneg %p176
    $region26: #{resnet1d_forward.12} parent=5 // pred_check_branch
      %179 = sbr.rel (%p177) target = $region28
    $region27: #{resnet1d_forward.12} parent=5 // pred_region
      // Predicated region
      $region29: #{resnet1d_forward.12} parent=27 // pred_check
        %p180 = pneg %p31
      $region30: #{resnet1d_forward.12} parent=27 // pred_check_branch
        %182 = sbr.rel (%p180) target = $region32
      $region31: #{resnet1d_forward.12} parent=27 // pred_region
        %p183 = scmp.lt.s32.totalorder %s11, 1
        %s184 = scalar_select %p183, %s11, 1
        %s185 = smul.addr %s184, 3
        %s186 = smul.addr %s185, 8
        %s187 = scalar_lea.vmem %s0, %s186
      $region32: #{resnet1d_forward.12} parent=27 // pred_fallthru
        _
      // Predicated region
      $region33: #{resnet1d_forward.12} parent=27 // pred_check
        %p188 = pneg %p120
      $region34: #{resnet1d_forward.12} parent=27 // pred_check_branch
        %190 = sbr.rel (%p188) target = $region36
      $region35: #{resnet1d_forward.12} parent=27 // pred_region
        %p191 = scmp.lt.s32.totalorder %s11, 1
        %s192 = scalar_select %p191, %s11, 1
        %s193 = smul.addr %s192, 2
        %s194 = smul.addr %s193, 8
        %s195 = scalar_lea.vmem %s4, %s194
      $region36: #{resnet1d_forward.12} parent=27 // pred_fallthru
        _
    $region28: #{resnet1d_forward.12} parent=5 // pred_fallthru
      _
    %p196 = scmp.le.s32.totalorder 1, %s11
    %p197 = scmp.lt.s32.totalorder %s11, 3
    %p198 = pnand %p196, %p197
    %p199 = pneg %p198
    // Predicated region
    $region37: #{resnet1d_forward.12} parent=5 // pred_check
      _
    $region38: #{resnet1d_forward.12} parent=5 // pred_check_branch
      %201 = sbr.rel (%p198) target = $region40
    $region39: #{resnet1d_forward.12} parent=5 // pred_region
      %s202 = ssub.s32 %s11, 1
      %p203 = scmp.lt.s32.totalorder %s16, 1
      %s204 = scalar_select %p203, %s16, 1
      %s205 = smul.addr %s204, 3
      %s206 = smul.addr %s205, 8
      %s207 = scalar_lea.vmem %s0, %s206
      %p208 = pneg %p37
      %p209 = pneg %p34
      %p210 = pneg %p58
      %p211 = pneg %p55
      %p212 = pneg %p79
      %p213 = pneg %p76
      %p214 = pneg %p100
      %p215 = pneg %p97
      %p216 = scmp.lt.s32.totalorder %s16, 1
      %s217 = scalar_select %p216, %s16, 1
      %s218 = smul.addr %s217, 2
      %s219 = smul.addr %s218, 8
      %s220 = scalar_lea.vmem %s4, %s219
      %p221 = pneg %p126
      %p222 = pneg %p123
      %p223 = pneg %p152
      %p224 = pneg %p149
      %p225 = scmp.lt.s32.totalorder %s16, 1
      %s226 = scalar_select %p225, %s16, 1
      %s227 = smul.addr %s226, 2
      %s228 = smul.addr %s227, 8
      %s229 = scalar_lea.vmem %s5, %s228
      %p230 = scmp.lt.s32.totalorder %s16, 1
      %s231 = scalar_select %p230, %s16, 1
      %s232 = smul.addr %s231, 3
      %s233 = smul.addr %s232, 8
      %s234 = scalar_lea.vmem %s0, %s233
      %p235 = scmp.lt.s32.totalorder %s16, 1
      %s236 = scalar_select %p235, %s16, 1
      %s237 = smul.addr %s236, 2
      %s238 = smul.addr %s237, 8
      %s239 = scalar_lea.vmem %s4, %s238
      %p240 = scmp.lt.s32.totalorder %s16, 1
      %s241 = scalar_select %p240, %s16, 1
      %s242 = smul.addr %s241, 2
      %s243 = smul.addr %s242, 8
      %s244 = scalar_lea.vmem %s5, %s243
      %v246 = vld [vmem:[%s234] sm:$0xff]
      %v247 = vld [vmem:[%s234 + $0x8] sm:$0xff]
      %v248 = vpack.c.bf16 %v247, %v246
      %v249 = vld [vmem:[%s1] sm:$0xf]
      %v250 = vld [vmem:[%s234 + $0x1] sm:$0xff]
      %v251 = vld [vmem:[%s234 + $0x9] sm:$0xff]
      %v252 = vpack.c.bf16 %v251, %v250
      %s253 = scalar_lea.vmem %s1, 4
      %v254 = vld [vmem:[%s253] sm:$0xf]
      %vm255 = vcmask 64512
      %v257 = vsel %vm255, %v252, 0
      %vm259 = vcmask 1043456
      %v261 = vsel %vm259, %v254, 0
      %263 = vmatprep.subr.bf16.mxu0 0
      %264 = vmatpush1.bf16.msra.mxu0 %v261
      %265 = vmatprep.subr.bf16.mxu0 0
      %266 = vmatpush1.bf16.msra.mxu0 0
      %267 = vmatprep.subr.bf16.mxu0 0
      %268 = vmatpush1.bf16.msra.mxu0 0
      %269 = vmatprep.subr.bf16.mxu0 0
      %270 = vmatpush1.bf16.msra.mxu0 0
      %271 = vmatprep.subr.bf16.mxu0 0
      %272 = vmatpush1.bf16.msra.mxu0 0
      %273 = vmatprep.subr.bf16.mxu0 0
      %274 = vmatpush1.bf16.msra.mxu0 0
      %275 = vmatprep.subr.bf16.mxu0 0
      %276 = vmatpush1.bf16.msra.mxu0 0
      %277 = vmatprep.subr.bf16.mxu0 0
      %278 = vmatpush1.bf16.msra.mxu0 0
      %279 = vmatprep.subr.bf16.mxu0 0
      %280 = vmatpush1.bf16.msra.mxu0 0
      %281 = vmatprep.subr.bf16.mxu0 0
      %282 = vmatpush1.bf16.msra.mxu0 0
      %283 = vmatprep.subr.bf16.mxu0 0
      %284 = vmatpush1.bf16.msra.mxu0 0
      %285 = vmatprep.subr.bf16.mxu0 0
      %286 = vmatpush1.bf16.msra.mxu0 0
      %287 = vmatprep.subr.bf16.mxu0 0
      %288 = vmatpush1.bf16.msra.mxu0 0
      %289 = vmatprep.subr.bf16.mxu0 0
      %290 = vmatpush1.bf16.msra.mxu0 0
      %291 = vmatprep.subr.bf16.mxu0 0
      %292 = vmatpush1.bf16.msra.mxu0 0
      %293 = vmatprep.subr.bf16.mxu0 0
      %294 = vmatpush1.bf16.msra.mxu0 0
      %295 = vmatprep.mubr.bf16.mxu0 0
      %296 = vmatmul.mubr.bf16.gmra.mrb[0].mxu0 %v257
      %v297 = vpop.f32.mrb[0].mxu0
      %v298 = vadd.f32 0.0, %v297
      %v299 = vpop.f32.mrb[0].mxu0
      %v300 = vpop.f32.mrb[0].mxu0
      %v301 = vadd.f32 0.0, %v300
      %v302 = vpop.f32.mrb[0].mxu0
      %303 = vdwg.mxu0
      %v305 = vsel %vm255, %v248, 0
      %v308 = vsel %vm259, %v249, 0
      %310 = vmatprep.subr.bf16.mxu0 0
      %311 = vmatpush1.bf16.msra.mxu0 %v308
      %312 = vmatprep.subr.bf16.mxu0 0
      %313 = vmatpush1.bf16.msra.mxu0 0
      %314 = vmatprep.subr.bf16.mxu0 0
      %315 = vmatpush1.bf16.msra.mxu0 0
      %316 = vmatprep.subr.bf16.mxu0 0
      %317 = vmatpush1.bf16.msra.mxu0 0
      %318 = vmatprep.subr.bf16.mxu0 0
      %319 = vmatpush1.bf16.msra.mxu0 0
      %320 = vmatprep.subr.bf16.mxu0 0
      %321 = vmatpush1.bf16.msra.mxu0 0
      %322 = vmatprep.subr.bf16.mxu0 0
      %323 = vmatpush1.bf16.msra.mxu0 0
      %324 = vmatprep.subr.bf16.mxu0 0
      %325 = vmatpush1.bf16.msra.mxu0 0
      %326 = vmatprep.subr.bf16.mxu0 0
      %327 = vmatpush1.bf16.msra.mxu0 0
      %328 = vmatprep.subr.bf16.mxu0 0
      %329 = vmatpush1.bf16.msra.mxu0 0
      %330 = vmatprep.subr.bf16.mxu0 0
      %331 = vmatpush1.bf16.msra.mxu0 0
      %332 = vmatprep.subr.bf16.mxu0 0
      %333 = vmatpush1.bf16.msra.mxu0 0
      %334 = vmatprep.subr.bf16.mxu0 0
      %335 = vmatpush1.bf16.msra.mxu0 0
      %336 = vmatprep.subr.bf16.mxu0 0
      %337 = vmatpush1.bf16.msra.mxu0 0
      %338 = vmatprep.subr.bf16.mxu0 0
      %339 = vmatpush1.bf16.msra.mxu0 0
      %340 = vmatprep.subr.bf16.mxu0 0
      %341 = vmatpush1.bf16.msra.mxu0 0
      %342 = vmatprep.mubr.bf16.mxu0 0
      %343 = vmatmul.mubr.bf16.gmra.mrb[0].mxu0 %v305
      %v344 = vpop.f32.mrb[0].mxu0
      %v345 = vadd.f32 %v298, %v344
      %v346 = vpop.f32.mrb[0].mxu0
      %v347 = vpop.f32.mrb[0].mxu0
      %v348 = vadd.f32 %v301, %v347
      %v349 = vpop.f32.mrb[0].mxu0
      %350 = vdwg.mxu0
      %v351 = vld [vmem:[%s234 + $0x2] sm:$0xff]
      %v352 = vld [vmem:[%s234 + $0xa] sm:$0xff]
      %v353 = vpack.c.bf16 %v352, %v351
      %s354 = scalar_lea.vmem %s1, 8
      %v355 = vld [vmem:[%s354] sm:$0xf]
      %v357 = vsel %vm255, %v353, 0
      %v360 = vsel %vm259, %v355, 0
      %362 = vmatprep.subr.bf16.mxu0 0
      %363 = vmatpush1.bf16.msra.mxu0 %v360
      %364 = vmatprep.subr.bf16.mxu0 0
      %365 = vmatpush1.bf16.msra.mxu0 0
      %366 = vmatprep.subr.bf16.mxu0 0
      %367 = vmatpush1.bf16.msra.mxu0 0
      %368 = vmatprep.subr.bf16.mxu0 0
      %369 = vmatpush1.bf16.msra.mxu0 0
      %370 = vmatprep.subr.bf16.mxu0 0
      %371 = vmatpush1.bf16.msra.mxu0 0
      %372 = vmatprep.subr.bf16.mxu0 0
      %373 = vmatpush1.bf16.msra.mxu0 0
      %374 = vmatprep.subr.bf16.mxu0 0
      %375 = vmatpush1.bf16.msra.mxu0 0
      %376 = vmatprep.subr.bf16.mxu0 0
      %377 = vmatpush1.bf16.msra.mxu0 0
      %378 = vmatprep.subr.bf16.mxu0 0
      %379 = vmatpush1.bf16.msra.mxu0 0
      %380 = vmatprep.subr.bf16.mxu0 0
      %381 = vmatpush1.bf16.msra.mxu0 0
      %382 = vmatprep.subr.bf16.mxu0 0
      %383 = vmatpush1.bf16.msra.mxu0 0
      %384 = vmatprep.subr.bf16.mxu0 0
      %385 = vmatpush1.bf16.msra.mxu0 0
      %386 = vmatprep.subr.bf16.mxu0 0
      %387 = vmatpush1.bf16.msra.mxu0 0
      %388 = vmatprep.subr.bf16.mxu0 0
      %389 = vmatpush1.bf16.msra.mxu0 0
      %390 = vmatprep.subr.bf16.mxu0 0
      %391 = vmatpush1.bf16.msra.mxu0 0
      %392 = vmatprep.subr.bf16.mxu0 0
      %393 = vmatpush1.bf16.msra.mxu0 0
      %394 = vmatprep.mubr.bf16.mxu0 0
      %395 = vmatmul.mubr.bf16.gmra.mrb[0].mxu0 %v357
      %v396 = vpop.f32.mrb[0].mxu0
      %v397 = vadd.f32 0.0, %v396
      %v398 = vpop.f32.mrb[0].mxu0
      %v399 = vpop.f32.mrb[0].mxu0
      %v400 = vadd.f32 0.0, %v399
      %v401 = vpop.f32.mrb[0].mxu0
      %402 = vdwg.mxu0
      %v403 = vadd.f32 %v345, %v397
      %v404 = vadd.f32 %v348, %v400
      %v405 = vld [vmem:[%s2] sm:$0x1]
      %v407 = vlaneseq
      %v408 = vshrl.u32 %v407, 7
      %v409 = vsub.s32 0, %v408
      %v410 = vrot.slane %v405, %v409
      %v412 = vmul.f32 %v403, %v410
      %v413 = vmul.f32 %v404, %v410
      %v414 = vld [vmem:[%s3] sm:$0x1]
      %v416 = vlaneseq
      %v417 = vshrl.u32 %v416, 7
      %v418 = vsub.s32 0, %v417
      %v419 = vrot.slane %v414, %v418
      %v421 = vadd.f32 %v412, %v419
      %v422 = vadd.f32 %v413, %v419
      %v423 = vld [vmem:[%s239] sm:$0xff]
      %v424 = vld [vmem:[%s239 + $0x8] sm:$0xff]
      %v425 = vadd.f32 %v421, %v423
      %v426 = vadd.f32 %v422, %v424
      %427 = vst.msk [vmem:[%s244] sm:$0xff] %vm255, %v425
      %428 = vst.msk [vmem:[%s244 + $0x8] sm:$0xff] %vm255, %v426
      %p429 = scmp.lt.s32.totalorder %s16, 1
      %s430 = scalar_select %p429, %s16, 1
      %s431 = smul.addr %s430, 2
      %s432 = smul.addr %s431, 8
      %s433 = scalar_lea.vmem %s5, %s432
      // Predicated region
      $region41: #{resnet1d_forward.12} parent=39 // pred_check
        %p434 = pneg %p149
      $region42: #{resnet1d_forward.12} parent=39 // pred_check_branch
        %436 = sbr.rel (%p434) target = $region44
      $region43: #{resnet1d_forward.12} parent=39 // pred_region
        _
      $region44: #{resnet1d_forward.12} parent=39 // pred_fallthru
        _
    $region40: #{resnet1d_forward.12} parent=5 // pred_fallthru
      _
    %p437 = scmp.le.s32.totalorder 2, %s11
    // Predicated region
    $region45: #{resnet1d_forward.12} parent=5 // pred_check
      %p438 = pneg %p437
    $region46: #{resnet1d_forward.12} parent=5 // pred_check_branch
      %440 = sbr.rel (%p438) target = $region48
    $region47: #{resnet1d_forward.12} parent=5 // pred_region
      %s441 = ssub.s32 %s11, 2
      // Predicated region
      $region49: #{resnet1d_forward.12} parent=47 // pred_check
        %p442 = pneg %p155
      $region50: #{resnet1d_forward.12} parent=47 // pred_check_branch
        %444 = sbr.rel (%p442) target = $region52
      $region51: #{resnet1d_forward.12} parent=47 // pred_region
        %p445 = scmp.lt.s32.totalorder %s17, 1
        %s446 = scalar_select %p445, %s17, 1
        %s447 = smul.addr %s446, 2
        %s448 = smul.addr %s447, 8
        %s449 = scalar_lea.vmem %s5, %s448
      $region52: #{resnet1d_forward.12} parent=47 // pred_fallthru
        _
    $region48: #{resnet1d_forward.12} parent=5 // pred_fallthru
      _
  $region6: #{resnet1d_forward.12} parent=0 // loop_footer
    %s15 = sadd.s32 1, %s11
  $region7: #{resnet1d_forward.12} parent=0 // loop_footer_branch
    %10 = sbr.rel target = $region3
  $region8: #{resnet1d_forward.12} parent=0 // loop_exit
    _

// kernel: resnet1d_forward.10
$region0: #{resnet1d_forward.10}
  #allocation0 [shape = 'u32[]', space=smem, size = 0x4, offset = 0x4, fixed_abs, tag = 'smem constant byte address 0x4 - core index']
  #allocation1 [shape = 'u32[144,128]{1,0:T(1,128)}', space=vmem, size = 0x12000, scoped, tag = 'internal scratch']
  %s0 = inlined_call_operand.vmem [shape: f32[2,18,4], index: 0, kind: input, shape index: {}]
  %s1 = inlined_call_operand.vmem [shape: bf16[3,4,8], index: 1, kind: input, shape index: {}]
  %s2 = inlined_call_operand.vmem [shape: f32[1,8], index: 2, kind: input, shape index: {}]
  %s3 = inlined_call_operand.vmem [shape: f32[1,8], index: 3, kind: input, shape index: {}]
  %s4 = inlined_call_operand.vmem [shape: f32[2,16,8], index: 4, kind: output, shape index: {}]
  %s5 = sld [smem:[#allocation0]]
  $region49: #{resnet1d_forward.10} parent=0
    _
  %s7 = ssub.s32 1, %s5
  %s8 = scalar_select 0, %s7, %s5
  loop: start=0, step=1, limit=4
  $region2: #{resnet1d_forward.10} parent=0 // loop_pre_header
    _
  $region3: #{resnet1d_forward.10} parent=0 // loop_header
    %s10 = sphi 0, %s14
    %p11 = scmp.ge.s32.totalorder %s10, 4
    %s20 = sphi 0, %s22
    %s23 = sphi 0, %s20
    %s24 = sphi 0, %s23
    %s40 = sphi 0, %s24
    %s44 = sphi 0, %s44
    %s46 = sphi 0, %s44
    %s47 = sphi 0, %s46
    %s61 = sphi 0, %s47
    %s65 = sphi 0, %s65
    %s67 = sphi 0, %s65
    %s68 = sphi 0, %s67
    %s82 = sphi 0, %s68
    %s86 = sphi 0, %s86
    %s88 = sphi 0, %s86
    %s89 = sphi 0, %s88
    %s103 = sphi 0, %s89
    %s109 = sphi 0, %s111
    %s112 = sphi 0, %s109
    %s113 = sphi 0, %s112
    %s129 = sphi 0, %s113
  $region4: #{resnet1d_forward.10} parent=0 // loop_header_branch
    %13 = sbr.rel (%p11) target = $region8
  $region5: #{resnet1d_forward.10} parent=0 // loop_body
    %s15 = ssub.s32 %s10, 1
    %s16 = ssub.s32 %s10, 2
    %s17 = sadd.s32 %s10, 1
    %s18 = ssub.s32 %s10, %s17
    %p19 = scmp.eq.s32.totalorder %s18, 0
    %s21 = sadd.s32 %s20, 1
    %s22 = scalar_select %p19, %s20, %s21
    %p25 = pneg %p19
    %p26 = scmp.eq.s32.totalorder %s10, 1
    %p27 = por %p25, %p26
    %p28 = scmp.ne.s32.totalorder %s20, %s23
    %p29 = scmp.eq.s32.totalorder %s10, 0
    %p30 = por %p28, %p29
    %p31 = scmp.ne.s32.totalorder %s20, %s23
    %p32 = scmp.eq.s32.totalorder %s15, 1
    %p33 = por %p31, %p32
    %p34 = scmp.ne.s32.totalorder %s23, %s24
    %p35 = scmp.eq.s32.totalorder %s15, 0
    %p36 = por %p34, %p35
    %p37 = scmp.ne.s32.totalorder %s23, %s24
    %p38 = scmp.eq.s32.totalorder %s16, 1
    %p39 = por %p37, %p38
    %p41 = scmp.ne.s32.totalorder %s24, %s40
    %p42 = scmp.eq.s32.totalorder %s16, 0
    %p43 = por %p41, %p42
    %s45 = sadd.s32 %s44, 1
    %p48 = scmp.eq.s32.totalorder %s10, 1
    %p49 = scmp.ne.s32.totalorder %s44, %s46
    %p50 = scmp.eq.s32.totalorder %s10, 0
    %p51 = por %p49, %p50
    %p52 = scmp.ne.s32.totalorder %s44, %s46
    %p53 = scmp.eq.s32.totalorder %s15, 1
    %p54 = por %p52, %p53
    %p55 = scmp.ne.s32.totalorder %s46, %s47
    %p56 = scmp.eq.s32.totalorder %s15, 0
    %p57 = por %p55, %p56
    %p58 = scmp.ne.s32.totalorder %s46, %s47
    %p59 = scmp.eq.s32.totalorder %s16, 1
    %p60 = por %p58, %p59
    %p62 = scmp.ne.s32.totalorder %s47, %s61
    %p63 = scmp.eq.s32.totalorder %s16, 0
    %p64 = por %p62, %p63
    %s66 = sadd.s32 %s65, 1
    %p69 = scmp.eq.s32.totalorder %s10, 1
    %p70 = scmp.ne.s32.totalorder %s65, %s67
    %p71 = scmp.eq.s32.totalorder %s10, 0
    %p72 = por %p70, %p71
    %p73 = scmp.ne.s32.totalorder %s65, %s67
    %p74 = scmp.eq.s32.totalorder %s15, 1
    %p75 = por %p73, %p74
    %p76 = scmp.ne.s32.totalorder %s67, %s68
    %p77 = scmp.eq.s32.totalorder %s15, 0
    %p78 = por %p76, %p77
    %p79 = scmp.ne.s32.totalorder %s67, %s68
    %p80 = scmp.eq.s32.totalorder %s16, 1
    %p81 = por %p79, %p80
    %p83 = scmp.ne.s32.totalorder %s68, %s82
    %p84 = scmp.eq.s32.totalorder %s16, 0
    %p85 = por %p83, %p84
    %s87 = sadd.s32 %s86, 1
    %p90 = scmp.eq.s32.totalorder %s10, 1
    %p91 = scmp.ne.s32.totalorder %s86, %s88
    %p92 = scmp.eq.s32.totalorder %s10, 0
    %p93 = por %p91, %p92
    %p94 = scmp.ne.s32.totalorder %s86, %s88
    %p95 = scmp.eq.s32.totalorder %s15, 1
    %p96 = por %p94, %p95
    %p97 = scmp.ne.s32.totalorder %s88, %s89
    %p98 = scmp.eq.s32.totalorder %s15, 0
    %p99 = por %p97, %p98
    %p100 = scmp.ne.s32.totalorder %s88, %s89
    %p101 = scmp.eq.s32.totalorder %s16, 1
    %p102 = por %p100, %p101
    %p104 = scmp.ne.s32.totalorder %s89, %s103
    %p105 = scmp.eq.s32.totalorder %s16, 0
    %p106 = por %p104, %p105
    %s107 = ssub.s32 %s10, %s17
    %p108 = scmp.eq.s32.totalorder %s107, 0
    %s110 = sadd.s32 %s109, 1
    %s111 = scalar_select %p108, %s109, %s110
    %p114 = pneg %p108
    %p115 = scmp.eq.s32.totalorder %s10, 1
    %p116 = por %p114, %p115
    %p117 = scmp.ne.s32.totalorder %s109, %s112
    %p118 = scmp.eq.s32.totalorder %s10, 0
    %p119 = por %p117, %p118
    %p120 = scmp.ne.s32.totalorder %s109, %s112
    %p121 = scmp.eq.s32.totalorder %s15, 1
    %p122 = por %p120, %p121
    %p123 = scmp.ne.s32.totalorder %s112, %s113
    %p124 = scmp.eq.s32.totalorder %s15, 0
    %p125 = por %p123, %p124
    %p126 = scmp.ne.s32.totalorder %s112, %s113
    %p127 = scmp.eq.s32.totalorder %s16, 1
    %p128 = por %p126, %p127
    %p130 = scmp.ne.s32.totalorder %s113, %s129
    %p131 = scmp.eq.s32.totalorder %s16, 0
    %p132 = por %p130, %p131
    %p133 = scmp.le.s32.totalorder 1, %s10
    %p134 = scmp.lt.s32.totalorder %s10, 3
    %p135 = pnand %p133, %p134
    %p136 = pneg %p135
    // Predicated region
    $region9: #{resnet1d_forward.10} parent=5 // pred_check
      _
    $region10: #{resnet1d_forward.10} parent=5 // pred_check_branch
      %138 = sbr.rel (%p135) target = $region12
    $region11: #{resnet1d_forward.10} parent=5 // pred_region
      %s139 = ssub.s32 %s10, 1
      // Predicated region
      $region13: #{resnet1d_forward.10} parent=11 // pred_check
        %p140 = pneg %p57
      $region14: #{resnet1d_forward.10} parent=11 // pred_check_branch
        %142 = sbr.rel (%p140) target = $region16
      $region15: #{resnet1d_forward.10} parent=11 // pred_region
        _
      $region16: #{resnet1d_forward.10} parent=11 // pred_fallthru
        _
      // Predicated region
      $region17: #{resnet1d_forward.10} parent=11 // pred_check
        %p143 = pneg %p78
      $region18: #{resnet1d_forward.10} parent=11 // pred_check_branch
        %145 = sbr.rel (%p143) target = $region20
      $region19: #{resnet1d_forward.10} parent=11 // pred_region
        _
      $region20: #{resnet1d_forward.10} parent=11 // pred_fallthru
        _
      // Predicated region
      $region21: #{resnet1d_forward.10} parent=11 // pred_check
        %p146 = pneg %p99
      $region22: #{resnet1d_forward.10} parent=11 // pred_check_branch
        %148 = sbr.rel (%p146) target = $region24
      $region23: #{resnet1d_forward.10} parent=11 // pred_region
        _
      $region24: #{resnet1d_forward.10} parent=11 // pred_fallthru
        _
    $region12: #{resnet1d_forward.10} parent=5 // pred_fallthru
      _
    %p149 = scmp.lt.s32.totalorder %s10, 2
    // Predicated region
    $region25: #{resnet1d_forward.10} parent=5 // pred_check
      %p150 = pneg %p149
    $region26: #{resnet1d_forward.10} parent=5 // pred_check_branch
      %152 = sbr.rel (%p150) target = $region28
    $region27: #{resnet1d_forward.10} parent=5 // pred_region
      // Predicated region
      $region29: #{resnet1d_forward.10} parent=27 // pred_check
        %p153 = pneg %p30
      $region30: #{resnet1d_forward.10} parent=27 // pred_check_branch
        %155 = sbr.rel (%p153) target = $region32
      $region31: #{resnet1d_forward.10} parent=27 // pred_region
        %p156 = scmp.lt.s32.totalorder %s10, 1
        %s157 = scalar_select %p156, %s10, 1
        %s158 = smul.addr %s157, 3
        %s159 = smul.addr %s158, 8
        %s160 = scalar_lea.vmem %s0, %s159
      $region32: #{resnet1d_forward.10} parent=27 // pred_fallthru
        _
    $region28: #{resnet1d_forward.10} parent=5 // pred_fallthru
      _
    %p161 = scmp.le.s32.totalorder 1, %s10
    %p162 = scmp.lt.s32.totalorder %s10, 3
    %p163 = pnand %p161, %p162
    %p164 = pneg %p163
    // Predicated region
    $region33: #{resnet1d_forward.10} parent=5 // pred_check
      _
    $region34: #{resnet1d_forward.10} parent=5 // pred_check_branch
      %166 = sbr.rel (%p163) target = $region36
    $region35: #{resnet1d_forward.10} parent=5 // pred_region
      %s167 = ssub.s32 %s10, 1
      %p168 = scmp.lt.s32.totalorder %s15, 1
      %s169 = scalar_select %p168, %s15, 1
      %s170 = smul.addr %s169, 3
      %s171 = smul.addr %s170, 8
      %s172 = scalar_lea.vmem %s0, %s171
      %p173 = pneg %p36
      %p174 = pneg %p33
      %p175 = pneg %p57
      %p176 = pneg %p54
      %p177 = pneg %p78
      %p178 = pneg %p75
      %p179 = pneg %p99
      %p180 = pneg %p96
      %p181 = pneg %p125
      %p182 = pneg %p122
      %p183 = scmp.lt.s32.totalorder %s15, 1
      %s184 = scalar_select %p183, %s15, 1
      %s185 = smul.addr %s184, 2
      %s186 = smul.addr %s185, 8
      %s187 = scalar_lea.vmem %s4, %s186
      %p188 = scmp.lt.s32.totalorder %s15, 1
      %s189 = scalar_select %p188, %s15, 1
      %s190 = smul.addr %s189, 3
      %s191 = smul.addr %s190, 8
      %s192 = scalar_lea.vmem %s0, %s191
      %p193 = scmp.lt.s32.totalorder %s15, 1
      %s194 = scalar_select %p193, %s15, 1
      %s195 = smul.addr %s194, 2
      %s196 = smul.addr %s195, 8
      %s197 = scalar_lea.vmem %s4, %s196
      %v199 = vld [vmem:[%s192] sm:$0xff]
      %v200 = vld [vmem:[%s192 + $0x8] sm:$0xff]
      %v201 = vpack.c.bf16 %v200, %v199
      %v202 = vld [vmem:[%s1] sm:$0x3]
      %v203 = vld [vmem:[%s192 + $0x1] sm:$0xff]
      %v204 = vld [vmem:[%s192 + $0x9] sm:$0xff]
      %v205 = vpack.c.bf16 %v204, %v203
      %s206 = scalar_lea.vmem %s1, 2
      %v207 = vld [vmem:[%s206] sm:$0x3]
      %vm208 = vcmask 31744
      %v210 = vsel %vm208, %v205, 0
      %vm212 = vcmask 1041408
      %v214 = vsel %vm212, %v207, 0
      %216 = vmatprep.subr.bf16.mxu0 0
      %217 = vmatpush1.bf16.msra.mxu0 %v214
      %218 = vmatprep.subr.bf16.mxu0 0
      %219 = vmatpush1.bf16.msra.mxu0 0
      %220 = vmatprep.subr.bf16.mxu0 0
      %221 = vmatpush1.bf16.msra.mxu0 0
      %222 = vmatprep.subr.bf16.mxu0 0
      %223 = vmatpush1.bf16.msra.mxu0 0
      %224 = vmatprep.subr.bf16.mxu0 0
      %225 = vmatpush1.bf16.msra.mxu0 0
      %226 = vmatprep.subr.bf16.mxu0 0
      %227 = vmatpush1.bf16.msra.mxu0 0
      %228 = vmatprep.subr.bf16.mxu0 0
      %229 = vmatpush1.bf16.msra.mxu0 0
      %230 = vmatprep.subr.bf16.mxu0 0
      %231 = vmatpush1.bf16.msra.mxu0 0
      %232 = vmatprep.subr.bf16.mxu0 0
      %233 = vmatpush1.bf16.msra.mxu0 0
      %234 = vmatprep.subr.bf16.mxu0 0
      %235 = vmatpush1.bf16.msra.mxu0 0
      %236 = vmatprep.subr.bf16.mxu0 0
      %237 = vmatpush1.bf16.msra.mxu0 0
      %238 = vmatprep.subr.bf16.mxu0 0
      %239 = vmatpush1.bf16.msra.mxu0 0
      %240 = vmatprep.subr.bf16.mxu0 0
      %241 = vmatpush1.bf16.msra.mxu0 0
      %242 = vmatprep.subr.bf16.mxu0 0
      %243 = vmatpush1.bf16.msra.mxu0 0
      %244 = vmatprep.subr.bf16.mxu0 0
      %245 = vmatpush1.bf16.msra.mxu0 0
      %246 = vmatprep.subr.bf16.mxu0 0
      %247 = vmatpush1.bf16.msra.mxu0 0
      %248 = vmatprep.mubr.bf16.mxu0 0
      %249 = vmatmul.mubr.bf16.gmra.mrb[0].mxu0 %v210
      %v250 = vpop.f32.mrb[0].mxu0
      %v251 = vadd.f32 0.0, %v250
      %v252 = vpop.f32.mrb[0].mxu0
      %v253 = vpop.f32.mrb[0].mxu0
      %v254 = vadd.f32 0.0, %v253
      %v255 = vpop.f32.mrb[0].mxu0
      %256 = vdwg.mxu0
      %v258 = vsel %vm208, %v201, 0
      %v261 = vsel %vm212, %v202, 0
      %263 = vmatprep.subr.bf16.mxu0 0
      %264 = vmatpush1.bf16.msra.mxu0 %v261
      %265 = vmatprep.subr.bf16.mxu0 0
      %266 = vmatpush1.bf16.msra.mxu0 0
      %267 = vmatprep.subr.bf16.mxu0 0
      %268 = vmatpush1.bf16.msra.mxu0 0
      %269 = vmatprep.subr.bf16.mxu0 0
      %270 = vmatpush1.bf16.msra.mxu0 0
      %271 = vmatprep.subr.bf16.mxu0 0
      %272 = vmatpush1.bf16.msra.mxu0 0
      %273 = vmatprep.subr.bf16.mxu0 0
      %274 = vmatpush1.bf16.msra.mxu0 0
      %275 = vmatprep.subr.bf16.mxu0 0
      %276 = vmatpush1.bf16.msra.mxu0 0
      %277 = vmatprep.subr.bf16.mxu0 0
      %278 = vmatpush1.bf16.msra.mxu0 0
      %279 = vmatprep.subr.bf16.mxu0 0
      %280 = vmatpush1.bf16.msra.mxu0 0
      %281 = vmatprep.subr.bf16.mxu0 0
      %282 = vmatpush1.bf16.msra.mxu0 0
      %283 = vmatprep.subr.bf16.mxu0 0
      %284 = vmatpush1.bf16.msra.mxu0 0
      %285 = vmatprep.subr.bf16.mxu0 0
      %286 = vmatpush1.bf16.msra.mxu0 0
      %287 = vmatprep.subr.bf16.mxu0 0
      %288 = vmatpush1.bf16.msra.mxu0 0
      %289 = vmatprep.subr.bf16.mxu0 0
      %290 = vmatpush1.bf16.msra.mxu0 0
      %291 = vmatprep.subr.bf16.mxu0 0
      %292 = vmatpush1.bf16.msra.mxu0 0
      %293 = vmatprep.subr.bf16.mxu0 0
      %294 = vmatpush1.bf16.msra.mxu0 0
      %295 = vmatprep.mubr.bf16.mxu0 0
      %296 = vmatmul.mubr.bf16.gmra.mrb[0].mxu0 %v258
      %v297 = vpop.f32.mrb[0].mxu0
      %v298 = vadd.f32 %v251, %v297
      %v299 = vpop.f32.mrb[0].mxu0
      %v300 = vpop.f32.mrb[0].mxu0
      %v301 = vadd.f32 %v254, %v300
      %v302 = vpop.f32.mrb[0].mxu0
      %303 = vdwg.mxu0
      %v304 = vld [vmem:[%s192 + $0x2] sm:$0xff]
      %v305 = vld [vmem:[%s192 + $0xa] sm:$0xff]
      %v306 = vpack.c.bf16 %v305, %v304
      %s307 = scalar_lea.vmem %s1, 4
      %v308 = vld [vmem:[%s307] sm:$0x3]
      %v310 = vsel %vm208, %v306, 0
      %v313 = vsel %vm212, %v308, 0
      %315 = vmatprep.subr.bf16.mxu0 0
      %316 = vmatpush1.bf16.msra.mxu0 %v313
      %317 = vmatprep.subr.bf16.mxu0 0
      %318 = vmatpush1.bf16.msra.mxu0 0
      %319 = vmatprep.subr.bf16.mxu0 0
      %320 = vmatpush1.bf16.msra.mxu0 0
      %321 = vmatprep.subr.bf16.mxu0 0
      %322 = vmatpush1.bf16.msra.mxu0 0
      %323 = vmatprep.subr.bf16.mxu0 0
      %324 = vmatpush1.bf16.msra.mxu0 0
      %325 = vmatprep.subr.bf16.mxu0 0
      %326 = vmatpush1.bf16.msra.mxu0 0
      %327 = vmatprep.subr.bf16.mxu0 0
      %328 = vmatpush1.bf16.msra.mxu0 0
      %329 = vmatprep.subr.bf16.mxu0 0
      %330 = vmatpush1.bf16.msra.mxu0 0
      %331 = vmatprep.subr.bf16.mxu0 0
      %332 = vmatpush1.bf16.msra.mxu0 0
      %333 = vmatprep.subr.bf16.mxu0 0
      %334 = vmatpush1.bf16.msra.mxu0 0
      %335 = vmatprep.subr.bf16.mxu0 0
      %336 = vmatpush1.bf16.msra.mxu0 0
      %337 = vmatprep.subr.bf16.mxu0 0
      %338 = vmatpush1.bf16.msra.mxu0 0
      %339 = vmatprep.subr.bf16.mxu0 0
      %340 = vmatpush1.bf16.msra.mxu0 0
      %341 = vmatprep.subr.bf16.mxu0 0
      %342 = vmatpush1.bf16.msra.mxu0 0
      %343 = vmatprep.subr.bf16.mxu0 0
      %344 = vmatpush1.bf16.msra.mxu0 0
      %345 = vmatprep.subr.bf16.mxu0 0
      %346 = vmatpush1.bf16.msra.mxu0 0
      %347 = vmatprep.mubr.bf16.mxu0 0
      %348 = vmatmul.mubr.bf16.gmra.mrb[0].mxu0 %v310
      %v349 = vpop.f32.mrb[0].mxu0
      %v350 = vadd.f32 0.0, %v349
      %v351 = vpop.f32.mrb[0].mxu0
      %v352 = vpop.f32.mrb[0].mxu0
      %v353 = vadd.f32 0.0, %v352
      %v354 = vpop.f32.mrb[0].mxu0
      %355 = vdwg.mxu0
      %v356 = vadd.f32 %v298, %v350
      %v357 = vadd.f32 %v301, %v353
      %v358 = vld [vmem:[%s2] sm:$0x1]
      %v360 = vlaneseq
      %v361 = vshrl.u32 %v360, 7
      %v362 = vsub.s32 0, %v361
      %v363 = vrot.slane %v358, %v362
      %v365 = vmul.f32 %v356, %v363
      %v366 = vmul.f32 %v357, %v363
      %v367 = vld [vmem:[%s3] sm:$0x1]
      %v369 = vlaneseq
      %v370 = vshrl.u32 %v369, 7
      %v371 = vsub.s32 0, %v370
      %v372 = vrot.slane %v367, %v371
      %v374 = vadd.f32 %v365, %v372
      %v375 = vadd.f32 %v366, %v372
      %v376 = vmax.f32 %v374, 0.0
      %v377 = vmax.f32 %v375, 0.0
      %vm378 = vcmask 64512
      %379 = vst.msk [vmem:[%s197] sm:$0xff] %vm378, %v376
      %380 = vst.msk [vmem:[%s197 + $0x8] sm:$0xff] %vm378, %v377
      %p381 = scmp.lt.s32.totalorder %s15, 1
      %s382 = scalar_select %p381, %s15, 1
      %s383 = smul.addr %s382, 2
      %s384 = smul.addr %s383, 8
      %s385 = scalar_lea.vmem %s4, %s384
      // Predicated region
      $region37: #{resnet1d_forward.10} parent=35 // pred_check
        %p386 = pneg %p122
      $region38: #{resnet1d_forward.10} parent=35 // pred_check_branch
        %388 = sbr.rel (%p386) target = $region40
      $region39: #{resnet1d_forward.10} parent=35 // pred_region
        _
      $region40: #{resnet1d_forward.10} parent=35 // pred_fallthru
        _
    $region36: #{resnet1d_forward.10} parent=5 // pred_fallthru
      _
    %p389 = scmp.le.s32.totalorder 2, %s10
    // Predicated region
    $region41: #{resnet1d_forward.10} parent=5 // pred_check
      %p390 = pneg %p389
    $region42: #{resnet1d_forward.10} parent=5 // pred_check_branch
      %392 = sbr.rel (%p390) target = $region44
    $region43: #{resnet1d_forward.10} parent=5 // pred_region
      %s393 = ssub.s32 %s10, 2
      // Predicated region
      $region45: #{resnet1d_forward.10} parent=43 // pred_check
        %p394 = pneg %p128
      $region46: #{resnet1d_forward.10} parent=43 // pred_check_branch
        %396 = sbr.rel (%p394) target = $region48
      $region47: #{resnet1d_forward.10} parent=43 // pred_region
        %p397 = scmp.lt.s32.totalorder %s16, 1
        %s398 = scalar_select %p397, %s16, 1
        %s399 = smul.addr %s398, 2
        %s400 = smul.addr %s399, 8
        %s401 = scalar_lea.vmem %s4, %s400
      $region48: #{resnet1d_forward.10} parent=43 // pred_fallthru
        _
    $region44: #{resnet1d_forward.10} parent=5 // pred_fallthru
      _
  $region6: #{resnet1d_forward.10} parent=0 // loop_footer
    %s14 = sadd.s32 1, %s10
  $region7: #{resnet1d_forward.10} parent=0 // loop_footer_branch
    %9 = sbr.rel target = $region3
  $region8: #{resnet1d_forward.10} parent=0 // loop_exit
    _

// kernel: resnet1d_forward.13
$region0: #{resnet1d_forward.13}
  #allocation0 [shape = 'u32[]', space=smem, size = 0x4, offset = 0x4, fixed_abs, tag = 'smem constant byte address 0x4 - core index']
  #allocation1 [shape = 'u32[144,128]{1,0:T(1,128)}', space=vmem, size = 0x12000, scoped, tag = 'internal scratch']
  %s0 = inlined_call_operand.vmem [shape: f32[2,17,8], index: 0, kind: input, shape index: {}]
  %s1 = inlined_call_operand.vmem [shape: bf16[3,8,8], index: 1, kind: input, shape index: {}]
  %s2 = inlined_call_operand.vmem [shape: f32[1,8], index: 2, kind: input, shape index: {}]
  %s3 = inlined_call_operand.vmem [shape: f32[1,8], index: 3, kind: input, shape index: {}]
  %s4 = inlined_call_operand.vmem [shape: f32[1,8], index: 4, kind: input, shape index: {}]
  %s5 = inlined_call_operand.vmem [shape: f32[1,8], index: 5, kind: input, shape index: {}]
  %s6 = inlined_call_operand.vmem [shape: f32[2,8,8], index: 6, kind: output, shape index: {}]
  %s7 = sld [smem:[#allocation0]]
  $region57: #{resnet1d_forward.13} parent=0
    _
  %s9 = ssub.s32 1, %s7
  %s10 = scalar_select 0, %s9, %s7
  loop: start=0, step=1, limit=4
  $region2: #{resnet1d_forward.13} parent=0 // loop_pre_header
    _
  $region3: #{resnet1d_forward.13} parent=0 // loop_header
    %s12 = sphi 0, %s16
    %p13 = scmp.ge.s32.totalorder %s12, 4
    %s22 = sphi 0, %s24
    %s25 = sphi 0, %s22
    %s26 = sphi 0, %s25
    %s42 = sphi 0, %s26
    %s46 = sphi 0, %s46
    %s48 = sphi 0, %s46
    %s49 = sphi 0, %s48
    %s63 = sphi 0, %s49
    %s67 = sphi 0, %s67
    %s69 = sphi 0, %s67
    %s70 = sphi 0, %s69
    %s84 = sphi 0, %s70
    %s88 = sphi 0, %s88
    %s90 = sphi 0, %s88
    %s91 = sphi 0, %s90
    %s105 = sphi 0, %s91
    %s109 = sphi 0, %s109
    %s111 = sphi 0, %s109
    %s112 = sphi 0, %s111
    %s126 = sphi 0, %s112
    %s130 = sphi 0, %s130
    %s132 = sphi 0, %s130
    %s133 = sphi 0, %s132
    %s147 = sphi 0, %s133
    %s153 = sphi 0, %s155
    %s156 = sphi 0, %s153
    %s157 = sphi 0, %s156
    %s173 = sphi 0, %s157
  $region4: #{resnet1d_forward.13} parent=0 // loop_header_branch
    %15 = sbr.rel (%p13) target = $region8
  $region5: #{resnet1d_forward.13} parent=0 // loop_body
    %s17 = ssub.s32 %s12, 1
    %s18 = ssub.s32 %s12, 2
    %s19 = sadd.s32 %s12, 1
    %s20 = ssub.s32 %s12, %s19
    %p21 = scmp.eq.s32.totalorder %s20, 0
    %s23 = sadd.s32 %s22, 1
    %s24 = scalar_select %p21, %s22, %s23
    %p27 = pneg %p21
    %p28 = scmp.eq.s32.totalorder %s12, 1
    %p29 = por %p27, %p28
    %p30 = scmp.ne.s32.totalorder %s22, %s25
    %p31 = scmp.eq.s32.totalorder %s12, 0
    %p32 = por %p30, %p31
    %p33 = scmp.ne.s32.totalorder %s22, %s25
    %p34 = scmp.eq.s32.totalorder %s17, 1
    %p35 = por %p33, %p34
    %p36 = scmp.ne.s32.totalorder %s25, %s26
    %p37 = scmp.eq.s32.totalorder %s17, 0
    %p38 = por %p36, %p37
    %p39 = scmp.ne.s32.totalorder %s25, %s26
    %p40 = scmp.eq.s32.totalorder %s18, 1
    %p41 = por %p39, %p40
    %p43 = scmp.ne.s32.totalorder %s26, %s42
    %p44 = scmp.eq.s32.totalorder %s18, 0
    %p45 = por %p43, %p44
    %s47 = sadd.s32 %s46, 1
    %p50 = scmp.eq.s32.totalorder %s12, 1
    %p51 = scmp.ne.s32.totalorder %s46, %s48
    %p52 = scmp.eq.s32.totalorder %s12, 0
    %p53 = por %p51, %p52
    %p54 = scmp.ne.s32.totalorder %s46, %s48
    %p55 = scmp.eq.s32.totalorder %s17, 1
    %p56 = por %p54, %p55
    %p57 = scmp.ne.s32.totalorder %s48, %s49
    %p58 = scmp.eq.s32.totalorder %s17, 0
    %p59 = por %p57, %p58
    %p60 = scmp.ne.s32.totalorder %s48, %s49
    %p61 = scmp.eq.s32.totalorder %s18, 1
    %p62 = por %p60, %p61
    %p64 = scmp.ne.s32.totalorder %s49, %s63
    %p65 = scmp.eq.s32.totalorder %s18, 0
    %p66 = por %p64, %p65
    %s68 = sadd.s32 %s67, 1
    %p71 = scmp.eq.s32.totalorder %s12, 1
    %p72 = scmp.ne.s32.totalorder %s67, %s69
    %p73 = scmp.eq.s32.totalorder %s12, 0
    %p74 = por %p72, %p73
    %p75 = scmp.ne.s32.totalorder %s67, %s69
    %p76 = scmp.eq.s32.totalorder %s17, 1
    %p77 = por %p75, %p76
    %p78 = scmp.ne.s32.totalorder %s69, %s70
    %p79 = scmp.eq.s32.totalorder %s17, 0
    %p80 = por %p78, %p79
    %p81 = scmp.ne.s32.totalorder %s69, %s70
    %p82 = scmp.eq.s32.totalorder %s18, 1
    %p83 = por %p81, %p82
    %p85 = scmp.ne.s32.totalorder %s70, %s84
    %p86 = scmp.eq.s32.totalorder %s18, 0
    %p87 = por %p85, %p86
    %s89 = sadd.s32 %s88, 1
    %p92 = scmp.eq.s32.totalorder %s12, 1
    %p93 = scmp.ne.s32.totalorder %s88, %s90
    %p94 = scmp.eq.s32.totalorder %s12, 0
    %p95 = por %p93, %p94
    %p96 = scmp.ne.s32.totalorder %s88, %s90
    %p97 = scmp.eq.s32.totalorder %s17, 1
    %p98 = por %p96, %p97
    %p99 = scmp.ne.s32.totalorder %s90, %s91
    %p100 = scmp.eq.s32.totalorder %s17, 0
    %p101 = por %p99, %p100
    %p102 = scmp.ne.s32.totalorder %s90, %s91
    %p103 = scmp.eq.s32.totalorder %s18, 1
    %p104 = por %p102, %p103
    %p106 = scmp.ne.s32.totalorder %s91, %s105
    %p107 = scmp.eq.s32.totalorder %s18, 0
    %p108 = por %p106, %p107
    %s110 = sadd.s32 %s109, 1
    %p113 = scmp.eq.s32.totalorder %s12, 1
    %p114 = scmp.ne.s32.totalorder %s109, %s111
    %p115 = scmp.eq.s32.totalorder %s12, 0
    %p116 = por %p114, %p115
    %p117 = scmp.ne.s32.totalorder %s109, %s111
    %p118 = scmp.eq.s32.totalorder %s17, 1
    %p119 = por %p117, %p118
    %p120 = scmp.ne.s32.totalorder %s111, %s112
    %p121 = scmp.eq.s32.totalorder %s17, 0
    %p122 = por %p120, %p121
    %p123 = scmp.ne.s32.totalorder %s111, %s112
    %p124 = scmp.eq.s32.totalorder %s18, 1
    %p125 = por %p123, %p124
    %p127 = scmp.ne.s32.totalorder %s112, %s126
    %p128 = scmp.eq.s32.totalorder %s18, 0
    %p129 = por %p127, %p128
    %s131 = sadd.s32 %s130, 1
    %p134 = scmp.eq.s32.totalorder %s12, 1
    %p135 = scmp.ne.s32.totalorder %s130, %s132
    %p136 = scmp.eq.s32.totalorder %s12, 0
    %p137 = por %p135, %p136
    %p138 = scmp.ne.s32.totalorder %s130, %s132
    %p139 = scmp.eq.s32.totalorder %s17, 1
    %p140 = por %p138, %p139
    %p141 = scmp.ne.s32.totalorder %s132, %s133
    %p142 = scmp.eq.s32.totalorder %s17, 0
    %p143 = por %p141, %p142
    %p144 = scmp.ne.s32.totalorder %s132, %s133
    %p145 = scmp.eq.s32.totalorder %s18, 1
    %p146 = por %p144, %p145
    %p148 = scmp.ne.s32.totalorder %s133, %s147
    %p149 = scmp.eq.s32.totalorder %s18, 0
    %p150 = por %p148, %p149
    %s151 = ssub.s32 %s12, %s19
    %p152 = scmp.eq.s32.totalorder %s151, 0
    %s154 = sadd.s32 %s153, 1
    %s155 = scalar_select %p152, %s153, %s154
    %p158 = pneg %p152
    %p159 = scmp.eq.s32.totalorder %s12, 1
    %p160 = por %p158, %p159
    %p161 = scmp.ne.s32.totalorder %s153, %s156
    %p162 = scmp.eq.s32.totalorder %s12, 0
    %p163 = por %p161, %p162
    %p164 = scmp.ne.s32.totalorder %s153, %s156
    %p165 = scmp.eq.s32.totalorder %s17, 1
    %p166 = por %p164, %p165
    %p167 = scmp.ne.s32.totalorder %s156, %s157
    %p168 = scmp.eq.s32.totalorder %s17, 0
    %p169 = por %p167, %p168
    %p170 = scmp.ne.s32.totalorder %s156, %s157
    %p171 = scmp.eq.s32.totalorder %s18, 1
    %p172 = por %p170, %p171
    %p174 = scmp.ne.s32.totalorder %s157, %s173
    %p175 = scmp.eq.s32.totalorder %s18, 0
    %p176 = por %p174, %p175
    %p177 = scmp.le.s32.totalorder 1, %s12
    %p178 = scmp.lt.s32.totalorder %s12, 3
    %p179 = pnand %p177, %p178
    %p180 = pneg %p179
    // Predicated region
    $region9: #{resnet1d_forward.13} parent=5 // pred_check
      _
    $region10: #{resnet1d_forward.13} parent=5 // pred_check_branch
      %182 = sbr.rel (%p179) target = $region12
    $region11: #{resnet1d_forward.13} parent=5 // pred_region
      %s183 = ssub.s32 %s12, 1
      // Predicated region
      $region13: #{resnet1d_forward.13} parent=11 // pred_check
        %p184 = pneg %p59
      $region14: #{resnet1d_forward.13} parent=11 // pred_check_branch
        %186 = sbr.rel (%p184) target = $region16
      $region15: #{resnet1d_forward.13} parent=11 // pred_region
        _
      $region16: #{resnet1d_forward.13} parent=11 // pred_fallthru
        _
      // Predicated region
      $region17: #{resnet1d_forward.13} parent=11 // pred_check
        %p187 = pneg %p80
      $region18: #{resnet1d_forward.13} parent=11 // pred_check_branch
        %189 = sbr.rel (%p187) target = $region20
      $region19: #{resnet1d_forward.13} parent=11 // pred_region
        _
      $region20: #{resnet1d_forward.13} parent=11 // pred_fallthru
        _
      // Predicated region
      $region21: #{resnet1d_forward.13} parent=11 // pred_check
        %p190 = pneg %p101
      $region22: #{resnet1d_forward.13} parent=11 // pred_check_branch
        %192 = sbr.rel (%p190) target = $region24
      $region23: #{resnet1d_forward.13} parent=11 // pred_region
        _
      $region24: #{resnet1d_forward.13} parent=11 // pred_fallthru
        _
      // Predicated region
      $region25: #{resnet1d_forward.13} parent=11 // pred_check
        %p193 = pneg %p122
      $region26: #{resnet1d_forward.13} parent=11 // pred_check_branch
        %195 = sbr.rel (%p193) target = $region28
      $region27: #{resnet1d_forward.13} parent=11 // pred_region
        _
      $region28: #{resnet1d_forward.13} parent=11 // pred_fallthru
        _
      // Predicated region
      $region29: #{resnet1d_forward.13} parent=11 // pred_check
        %p196 = pneg %p143
      $region30: #{resnet1d_forward.13} parent=11 // pred_check_branch
        %198 = sbr.rel (%p196) target = $region32
      $region31: #{resnet1d_forward.13} parent=11 // pred_region
        _
      $region32: #{resnet1d_forward.13} parent=11 // pred_fallthru
        _
    $region12: #{resnet1d_forward.13} parent=5 // pred_fallthru
      _
    %p199 = scmp.lt.s32.totalorder %s12, 2
    // Predicated region
    $region33: #{resnet1d_forward.13} parent=5 // pred_check
      %p200 = pneg %p199
    $region34: #{resnet1d_forward.13} parent=5 // pred_check_branch
      %202 = sbr.rel (%p200) target = $region36
    $region35: #{resnet1d_forward.13} parent=5 // pred_region
      // Predicated region
      $region37: #{resnet1d_forward.13} parent=35 // pred_check
        %p203 = pneg %p32
      $region38: #{resnet1d_forward.13} parent=35 // pred_check_branch
        %205 = sbr.rel (%p203) target = $region40
      $region39: #{resnet1d_forward.13} parent=35 // pred_region
        %p206 = scmp.lt.s32.totalorder %s12, 1
        %s207 = scalar_select %p206, %s12, 1
        %s208 = smul.addr %s207, 3
        %s209 = smul.addr %s208, 8
        %s210 = scalar_lea.vmem %s0, %s209
      $region40: #{resnet1d_forward.13} parent=35 // pred_fallthru
        _
    $region36: #{resnet1d_forward.13} parent=5 // pred_fallthru
      _
    %p211 = scmp.le.s32.totalorder 1, %s12
    %p212 = scmp.lt.s32.totalorder %s12, 3
    %p213 = pnand %p211, %p212
    %p214 = pneg %p213
    // Predicated region
    $region41: #{resnet1d_forward.13} parent=5 // pred_check
      _
    $region42: #{resnet1d_forward.13} parent=5 // pred_check_branch
      %216 = sbr.rel (%p213) target = $region44
    $region43: #{resnet1d_forward.13} parent=5 // pred_region
      %s217 = ssub.s32 %s12, 1
      %p218 = scmp.lt.s32.totalorder %s17, 1
      %s219 = scalar_select %p218, %s17, 1
      %s220 = smul.addr %s219, 3
      %s221 = smul.addr %s220, 8
      %s222 = scalar_lea.vmem %s0, %s221
      %p223 = pneg %p38
      %p224 = pneg %p35
      %p225 = pneg %p59
      %p226 = pneg %p56
      %p227 = pneg %p80
      %p228 = pneg %p77
      %p229 = pneg %p101
      %p230 = pneg %p98
      %p231 = pneg %p122
      %p232 = pneg %p119
      %p233 = pneg %p143
      %p234 = pneg %p140
      %p235 = pneg %p169
      %p236 = pneg %p166
      %p237 = scmp.lt.s32.totalorder %s17, 1
      %s238 = scalar_select %p237, %s17, 1
      %s239 = smul.addr %s238, 8
      %s240 = scalar_lea.vmem %s6, %s239
      %p241 = scmp.lt.s32.totalorder %s17, 1
      %s242 = scalar_select %p241, %s17, 1
      %s243 = smul.addr %s242, 3
      %s244 = smul.addr %s243, 8
      %s245 = scalar_lea.vmem %s0, %s244
      %p246 = scmp.lt.s32.totalorder %s17, 1
      %s247 = scalar_select %p246, %s17, 1
      %s248 = smul.addr %s247, 8
      %s249 = scalar_lea.vmem %s6, %s248
      %v251 = vld [vmem:[%s245] ss:$2 sm:$0xff]
      %v252 = vld [vmem:[%s4] sm:$0x1]
      %v254 = vlaneseq
      %v255 = vshrl.u32 %v254, 7
      %v256 = vsub.s32 0, %v255
      %v257 = vrot.slane %v252, %v256
      %v259 = vmul.f32 %v251, %v257
      %v260 = vld [vmem:[%s5] sm:$0x1]
      %v262 = vlaneseq
      %v263 = vshrl.u32 %v262, 7
      %v264 = vsub.s32 0, %v263
      %v265 = vrot.slane %v260, %v264
      %v267 = vadd.f32 %v259, %v265
      %v268 = vmax.f32 %v267, 0.0
      %v269 = vpack.c.bf16 %v268, %v268
      %v270 = vld [vmem:[%s1] sm:$0xf]
      %s271 = scalar_lea.vmem %s245, 1
      %v272 = vld [vmem:[%s271] ss:$2 sm:$0xff]
      %v273 = vmul.f32 %v272, %v257
      %v274 = vadd.f32 %v273, %v265
      %v275 = vmax.f32 %v274, 0.0
      %v276 = vpack.c.bf16 %v275, %v275
      %s277 = scalar_lea.vmem %s1, 4
      %v278 = vld [vmem:[%s277] sm:$0xf]
      %vm279 = vcmask 64512
      %v281 = vsel %vm279, %v276, 0
      %vm283 = vcmask 1043456
      %v285 = vsel %vm283, %v278, 0
      %287 = vmatprep.subr.bf16.mxu0 0
      %288 = vmatpush1.bf16.msra.mxu0 %v285
      %289 = vmatprep.subr.bf16.mxu0 0
      %290 = vmatpush1.bf16.msra.mxu0 0
      %291 = vmatprep.subr.bf16.mxu0 0
      %292 = vmatpush1.bf16.msra.mxu0 0
      %293 = vmatprep.subr.bf16.mxu0 0
      %294 = vmatpush1.bf16.msra.mxu0 0
      %295 = vmatprep.subr.bf16.mxu0 0
      %296 = vmatpush1.bf16.msra.mxu0 0
      %297 = vmatprep.subr.bf16.mxu0 0
      %298 = vmatpush1.bf16.msra.mxu0 0
      %299 = vmatprep.subr.bf16.mxu0 0
      %300 = vmatpush1.bf16.msra.mxu0 0
      %301 = vmatprep.subr.bf16.mxu0 0
      %302 = vmatpush1.bf16.msra.mxu0 0
      %303 = vmatprep.subr.bf16.mxu0 0
      %304 = vmatpush1.bf16.msra.mxu0 0
      %305 = vmatprep.subr.bf16.mxu0 0
      %306 = vmatpush1.bf16.msra.mxu0 0
      %307 = vmatprep.subr.bf16.mxu0 0
      %308 = vmatpush1.bf16.msra.mxu0 0
      %309 = vmatprep.subr.bf16.mxu0 0
      %310 = vmatpush1.bf16.msra.mxu0 0
      %311 = vmatprep.subr.bf16.mxu0 0
      %312 = vmatpush1.bf16.msra.mxu0 0
      %313 = vmatprep.subr.bf16.mxu0 0
      %314 = vmatpush1.bf16.msra.mxu0 0
      %315 = vmatprep.subr.bf16.mxu0 0
      %316 = vmatpush1.bf16.msra.mxu0 0
      %317 = vmatprep.subr.bf16.mxu0 0
      %318 = vmatpush1.bf16.msra.mxu0 0
      %319 = vmatprep.mubr.bf16.mxu0 0
      %320 = vmatmul.mubr.bf16.gmra.mrb[0].mxu0 %v281
      %v321 = vpop.f32.mrb[0].mxu0
      %v322 = vadd.f32 0.0, %v321
      %v323 = vpop.f32.mrb[0].mxu0
      %v324 = vpop.f32.mrb[0].mxu0
      %v325 = vpop.f32.mrb[0].mxu0
      %326 = vdwg.mxu0
      %v328 = vsel %vm279, %v269, 0
      %v331 = vsel %vm283, %v270, 0
      %333 = vmatprep.subr.bf16.mxu0 0
      %334 = vmatpush1.bf16.msra.mxu0 %v331
      %335 = vmatprep.subr.bf16.mxu0 0
      %336 = vmatpush1.bf16.msra.mxu0 0
      %337 = vmatprep.subr.bf16.mxu0 0
      %338 = vmatpush1.bf16.msra.mxu0 0
      %339 = vmatprep.subr.bf16.mxu0 0
      %340 = vmatpush1.bf16.msra.mxu0 0
      %341 = vmatprep.subr.bf16.mxu0 0
      %342 = vmatpush1.bf16.msra.mxu0 0
      %343 = vmatprep.subr.bf16.mxu0 0
      %344 = vmatpush1.bf16.msra.mxu0 0
      %345 = vmatprep.subr.bf16.mxu0 0
      %346 = vmatpush1.bf16.msra.mxu0 0
      %347 = vmatprep.subr.bf16.mxu0 0
      %348 = vmatpush1.bf16.msra.mxu0 0
      %349 = vmatprep.subr.bf16.mxu0 0
      %350 = vmatpush1.bf16.msra.mxu0 0
      %351 = vmatprep.subr.bf16.mxu0 0
      %352 = vmatpush1.bf16.msra.mxu0 0
      %353 = vmatprep.subr.bf16.mxu0 0
      %354 = vmatpush1.bf16.msra.mxu0 0
      %355 = vmatprep.subr.bf16.mxu0 0
      %356 = vmatpush1.bf16.msra.mxu0 0
      %357 = vmatprep.subr.bf16.mxu0 0
      %358 = vmatpush1.bf16.msra.mxu0 0
      %359 = vmatprep.subr.bf16.mxu0 0
      %360 = vmatpush1.bf16.msra.mxu0 0
      %361 = vmatprep.subr.bf16.mxu0 0
      %362 = vmatpush1.bf16.msra.mxu0 0
      %363 = vmatprep.subr.bf16.mxu0 0
      %364 = vmatpush1.bf16.msra.mxu0 0
      %365 = vmatprep.mubr.bf16.mxu0 0
      %366 = vmatmul.mubr.bf16.gmra.mrb[0].mxu0 %v328
      %v367 = vpop.f32.mrb[0].mxu0
      %v368 = vadd.f32 %v322, %v367
      %v369 = vpop.f32.mrb[0].mxu0
      %v370 = vpop.f32.mrb[0].mxu0
      %v371 = vpop.f32.mrb[0].mxu0
      %372 = vdwg.mxu0
      %s373 = scalar_lea.vmem %s245, 2
      %v374 = vld [vmem:[%s373] ss:$2 sm:$0xff]
      %v375 = vmul.f32 %v374, %v257
      %v376 = vadd.f32 %v375, %v265
      %v377 = vmax.f32 %v376, 0.0
      %v378 = vpack.c.bf16 %v377, %v377
      %s379 = scalar_lea.vmem %s1, 8
      %v380 = vld [vmem:[%s379] sm:$0xf]
      %v382 = vsel %vm279, %v378, 0
      %v385 = vsel %vm283, %v380, 0
      %387 = vmatprep.subr.bf16.mxu0 0
      %388 = vmatpush1.bf16.msra.mxu0 %v385
      %389 = vmatprep.subr.bf16.mxu0 0
      %390 = vmatpush1.bf16.msra.mxu0 0
      %391 = vmatprep.subr.bf16.mxu0 0
      %392 = vmatpush1.bf16.msra.mxu0 0
      %393 = vmatprep.subr.bf16.mxu0 0
      %394 = vmatpush1.bf16.msra.mxu0 0
      %395 = vmatprep.subr.bf16.mxu0 0
      %396 = vmatpush1.bf16.msra.mxu0 0
      %397 = vmatprep.subr.bf16.mxu0 0
      %398 = vmatpush1.bf16.msra.mxu0 0
      %399 = vmatprep.subr.bf16.mxu0 0
      %400 = vmatpush1.bf16.msra.mxu0 0
      %401 = vmatprep.subr.bf16.mxu0 0
      %402 = vmatpush1.bf16.msra.mxu0 0
      %403 = vmatprep.subr.bf16.mxu0 0
      %404 = vmatpush1.bf16.msra.mxu0 0
      %405 = vmatprep.subr.bf16.mxu0 0
      %406 = vmatpush1.bf16.msra.mxu0 0
      %407 = vmatprep.subr.bf16.mxu0 0
      %408 = vmatpush1.bf16.msra.mxu0 0
      %409 = vmatprep.subr.bf16.mxu0 0
      %410 = vmatpush1.bf16.msra.mxu0 0
      %411 = vmatprep.subr.bf16.mxu0 0
      %412 = vmatpush1.bf16.msra.mxu0 0
      %413 = vmatprep.subr.bf16.mxu0 0
      %414 = vmatpush1.bf16.msra.mxu0 0
      %415 = vmatprep.subr.bf16.mxu0 0
      %416 = vmatpush1.bf16.msra.mxu0 0
      %417 = vmatprep.subr.bf16.mxu0 0
      %418 = vmatpush1.bf16.msra.mxu0 0
      %419 = vmatprep.mubr.bf16.mxu0 0
      %420 = vmatmul.mubr.bf16.gmra.mrb[0].mxu0 %v382
      %v421 = vpop.f32.mrb[0].mxu0
      %v422 = vadd.f32 0.0, %v421
      %v423 = vpop.f32.mrb[0].mxu0
      %v424 = vpop.f32.mrb[0].mxu0
      %v425 = vpop.f32.mrb[0].mxu0
      %426 = vdwg.mxu0
      %v427 = vadd.f32 %v368, %v422
      %v428 = vld [vmem:[%s2] sm:$0x1]
      %v430 = vlaneseq
      %v431 = vshrl.u32 %v430, 7
      %v432 = vsub.s32 0, %v431
      %v433 = vrot.slane %v428, %v432
      %v435 = vmul.f32 %v427, %v433
      %v436 = vld [vmem:[%s3] sm:$0x1]
      %v438 = vlaneseq
      %v439 = vshrl.u32 %v438, 7
      %v440 = vsub.s32 0, %v439
      %v441 = vrot.slane %v436, %v440
      %v443 = vadd.f32 %v435, %v441
      %v444 = vmax.f32 %v443, 0.0
      %445 = vst.msk [vmem:[%s249] sm:$0xff] %vm279, %v444
      %p446 = scmp.lt.s32.totalorder %s17, 1
      %s447 = scalar_select %p446, %s17, 1
      %s448 = smul.addr %s447, 8
      %s449 = scalar_lea.vmem %s6, %s448
      // Predicated region
      $region45: #{resnet1d_forward.13} parent=43 // pred_check
        %p450 = pneg %p166
      $region46: #{resnet1d_forward.13} parent=43 // pred_check_branch
        %452 = sbr.rel (%p450) target = $region48
      $region47: #{resnet1d_forward.13} parent=43 // pred_region
        _
      $region48: #{resnet1d_forward.13} parent=43 // pred_fallthru
        _
    $region44: #{resnet1d_forward.13} parent=5 // pred_fallthru
      _
    %p453 = scmp.le.s32.totalorder 2, %s12
    // Predicated region
    $region49: #{resnet1d_forward.13} parent=5 // pred_check
      %p454 = pneg %p453
    $region50: #{resnet1d_forward.13} parent=5 // pred_check_branch
      %456 = sbr.rel (%p454) target = $region52
    $region51: #{resnet1d_forward.13} parent=5 // pred_region
      %s457 = ssub.s32 %s12, 2
      // Predicated region
      $region53: #{resnet1d_forward.13} parent=51 // pred_check
        %p458 = pneg %p172
      $region54: #{resnet1d_forward.13} parent=51 // pred_check_branch
        %460 = sbr.rel (%p458) target = $region56
      $region55: #{resnet1d_forward.13} parent=51 // pred_region
        %p461 = scmp.lt.s32.totalorder %s18, 1
        %s462 = scalar_select %p461, %s18, 1
        %s463 = smul.addr %s462, 8
        %s464 = scalar_lea.vmem %s6, %s463
      $region56: #{resnet1d_forward.13} parent=51 // pred_fallthru
        _
    $region52: #{resnet1d_forward.13} parent=5 // pred_fallthru
      _
  $region6: #{resnet1d_forward.13} parent=0 // loop_footer
    %s16 = sadd.s32 1, %s12
  $region7: #{resnet1d_forward.13} parent=0 // loop_footer_branch
    %11 = sbr.rel target = $region3
  $region8: #{resnet1d_forward.13} parent=0 // loop_exit
    _

// kernel: resnet1d_forward.14
$region0: #{resnet1d_forward.14}
  #allocation0 [shape = 'u32[]', space=smem, size = 0x4, offset = 0x4, fixed_abs, tag = 'smem constant byte address 0x4 - core index']
  #allocation1 [shape = 'u32[144,128]{1,0:T(1,128)}', space=vmem, size = 0x12000, scoped, tag = 'internal scratch']
  %s0 = inlined_call_operand.vmem [shape: f32[2,10,8], index: 0, kind: input, shape index: {}]
  %s1 = inlined_call_operand.vmem [shape: bf16[3,8,8], index: 1, kind: input, shape index: {}]
  %s2 = inlined_call_operand.vmem [shape: f32[1,8], index: 2, kind: input, shape index: {}]
  %s3 = inlined_call_operand.vmem [shape: f32[1,8], index: 3, kind: input, shape index: {}]
  %s4 = inlined_call_operand.vmem [shape: f32[2,16,8], index: 4, kind: input, shape index: {}]
  %s5 = inlined_call_operand.vmem [shape: f32[2,8,8], index: 5, kind: output, shape index: {}]
  %s6 = sld [smem:[#allocation0]]
  $region53: #{resnet1d_forward.14} parent=0
    _
  %s8 = ssub.s32 1, %s6
  %s9 = scalar_select 0, %s8, %s6
  loop: start=0, step=1, limit=4
  $region2: #{resnet1d_forward.14} parent=0 // loop_pre_header
    _
  $region3: #{resnet1d_forward.14} parent=0 // loop_header
    %s11 = sphi 0, %s15
    %p12 = scmp.ge.s32.totalorder %s11, 4
    %s21 = sphi 0, %s23
    %s24 = sphi 0, %s21
    %s25 = sphi 0, %s24
    %s41 = sphi 0, %s25
    %s45 = sphi 0, %s45
    %s47 = sphi 0, %s45
    %s48 = sphi 0, %s47
    %s62 = sphi 0, %s48
    %s66 = sphi 0, %s66
    %s68 = sphi 0, %s66
    %s69 = sphi 0, %s68
    %s83 = sphi 0, %s69
    %s87 = sphi 0, %s87
    %s89 = sphi 0, %s87
    %s90 = sphi 0, %s89
    %s104 = sphi 0, %s90
    %s110 = sphi 0, %s112
    %s113 = sphi 0, %s110
    %s114 = sphi 0, %s113
    %s130 = sphi 0, %s114
    %s136 = sphi 0, %s138
    %s139 = sphi 0, %s136
    %s140 = sphi 0, %s139
    %s156 = sphi 0, %s140
  $region4: #{resnet1d_forward.14} parent=0 // loop_header_branch
    %14 = sbr.rel (%p12) target = $region8
  $region5: #{resnet1d_forward.14} parent=0 // loop_body
    %s16 = ssub.s32 %s11, 1
    %s17 = ssub.s32 %s11, 2
    %s18 = sadd.s32 %s11, 1
    %s19 = ssub.s32 %s11, %s18
    %p20 = scmp.eq.s32.totalorder %s19, 0
    %s22 = sadd.s32 %s21, 1
    %s23 = scalar_select %p20, %s21, %s22
    %p26 = pneg %p20
    %p27 = scmp.eq.s32.totalorder %s11, 1
    %p28 = por %p26, %p27
    %p29 = scmp.ne.s32.totalorder %s21, %s24
    %p30 = scmp.eq.s32.totalorder %s11, 0
    %p31 = por %p29, %p30
    %p32 = scmp.ne.s32.totalorder %s21, %s24
    %p33 = scmp.eq.s32.totalorder %s16, 1
    %p34 = por %p32, %p33
    %p35 = scmp.ne.s32.totalorder %s24, %s25
    %p36 = scmp.eq.s32.totalorder %s16, 0
    %p37 = por %p35, %p36
    %p38 = scmp.ne.s32.totalorder %s24, %s25
    %p39 = scmp.eq.s32.totalorder %s17, 1
    %p40 = por %p38, %p39
    %p42 = scmp.ne.s32.totalorder %s25, %s41
    %p43 = scmp.eq.s32.totalorder %s17, 0
    %p44 = por %p42, %p43
    %s46 = sadd.s32 %s45, 1
    %p49 = scmp.eq.s32.totalorder %s11, 1
    %p50 = scmp.ne.s32.totalorder %s45, %s47
    %p51 = scmp.eq.s32.totalorder %s11, 0
    %p52 = por %p50, %p51
    %p53 = scmp.ne.s32.totalorder %s45, %s47
    %p54 = scmp.eq.s32.totalorder %s16, 1
    %p55 = por %p53, %p54
    %p56 = scmp.ne.s32.totalorder %s47, %s48
    %p57 = scmp.eq.s32.totalorder %s16, 0
    %p58 = por %p56, %p57
    %p59 = scmp.ne.s32.totalorder %s47, %s48
    %p60 = scmp.eq.s32.totalorder %s17, 1
    %p61 = por %p59, %p60
    %p63 = scmp.ne.s32.totalorder %s48, %s62
    %p64 = scmp.eq.s32.totalorder %s17, 0
    %p65 = por %p63, %p64
    %s67 = sadd.s32 %s66, 1
    %p70 = scmp.eq.s32.totalorder %s11, 1
    %p71 = scmp.ne.s32.totalorder %s66, %s68
    %p72 = scmp.eq.s32.totalorder %s11, 0
    %p73 = por %p71, %p72
    %p74 = scmp.ne.s32.totalorder %s66, %s68
    %p75 = scmp.eq.s32.totalorder %s16, 1
    %p76 = por %p74, %p75
    %p77 = scmp.ne.s32.totalorder %s68, %s69
    %p78 = scmp.eq.s32.totalorder %s16, 0
    %p79 = por %p77, %p78
    %p80 = scmp.ne.s32.totalorder %s68, %s69
    %p81 = scmp.eq.s32.totalorder %s17, 1
    %p82 = por %p80, %p81
    %p84 = scmp.ne.s32.totalorder %s69, %s83
    %p85 = scmp.eq.s32.totalorder %s17, 0
    %p86 = por %p84, %p85
    %s88 = sadd.s32 %s87, 1
    %p91 = scmp.eq.s32.totalorder %s11, 1
    %p92 = scmp.ne.s32.totalorder %s87, %s89
    %p93 = scmp.eq.s32.totalorder %s11, 0
    %p94 = por %p92, %p93
    %p95 = scmp.ne.s32.totalorder %s87, %s89
    %p96 = scmp.eq.s32.totalorder %s16, 1
    %p97 = por %p95, %p96
    %p98 = scmp.ne.s32.totalorder %s89, %s90
    %p99 = scmp.eq.s32.totalorder %s16, 0
    %p100 = por %p98, %p99
    %p101 = scmp.ne.s32.totalorder %s89, %s90
    %p102 = scmp.eq.s32.totalorder %s17, 1
    %p103 = por %p101, %p102
    %p105 = scmp.ne.s32.totalorder %s90, %s104
    %p106 = scmp.eq.s32.totalorder %s17, 0
    %p107 = por %p105, %p106
    %s108 = ssub.s32 %s11, %s18
    %p109 = scmp.eq.s32.totalorder %s108, 0
    %s111 = sadd.s32 %s110, 1
    %s112 = scalar_select %p109, %s110, %s111
    %p115 = pneg %p109
    %p116 = scmp.eq.s32.totalorder %s11, 1
    %p117 = por %p115, %p116
    %p118 = scmp.ne.s32.totalorder %s110, %s113
    %p119 = scmp.eq.s32.totalorder %s11, 0
    %p120 = por %p118, %p119
    %p121 = scmp.ne.s32.totalorder %s110, %s113
    %p122 = scmp.eq.s32.totalorder %s16, 1
    %p123 = por %p121, %p122
    %p124 = scmp.ne.s32.totalorder %s113, %s114
    %p125 = scmp.eq.s32.totalorder %s16, 0
    %p126 = por %p124, %p125
    %p127 = scmp.ne.s32.totalorder %s113, %s114
    %p128 = scmp.eq.s32.totalorder %s17, 1
    %p129 = por %p127, %p128
    %p131 = scmp.ne.s32.totalorder %s114, %s130
    %p132 = scmp.eq.s32.totalorder %s17, 0
    %p133 = por %p131, %p132
    %s134 = ssub.s32 %s11, %s18
    %p135 = scmp.eq.s32.totalorder %s134, 0
    %s137 = sadd.s32 %s136, 1
    %s138 = scalar_select %p135, %s136, %s137
    %p141 = pneg %p135
    %p142 = scmp.eq.s32.totalorder %s11, 1
    %p143 = por %p141, %p142
    %p144 = scmp.ne.s32.totalorder %s136, %s139
    %p145 = scmp.eq.s32.totalorder %s11, 0
    %p146 = por %p144, %p145
    %p147 = scmp.ne.s32.totalorder %s136, %s139
    %p148 = scmp.eq.s32.totalorder %s16, 1
    %p149 = por %p147, %p148
    %p150 = scmp.ne.s32.totalorder %s139, %s140
    %p151 = scmp.eq.s32.totalorder %s16, 0
    %p152 = por %p150, %p151
    %p153 = scmp.ne.s32.totalorder %s139, %s140
    %p154 = scmp.eq.s32.totalorder %s17, 1
    %p155 = por %p153, %p154
    %p157 = scmp.ne.s32.totalorder %s140, %s156
    %p158 = scmp.eq.s32.totalorder %s17, 0
    %p159 = por %p157, %p158
    %p160 = scmp.le.s32.totalorder 1, %s11
    %p161 = scmp.lt.s32.totalorder %s11, 3
    %p162 = pnand %p160, %p161
    %p163 = pneg %p162
    // Predicated region
    $region9: #{resnet1d_forward.14} parent=5 // pred_check
      _
    $region10: #{resnet1d_forward.14} parent=5 // pred_check_branch
      %165 = sbr.rel (%p162) target = $region12
    $region11: #{resnet1d_forward.14} parent=5 // pred_region
      %s166 = ssub.s32 %s11, 1
      // Predicated region
      $region13: #{resnet1d_forward.14} parent=11 // pred_check
        %p167 = pneg %p58
      $region14: #{resnet1d_forward.14} parent=11 // pred_check_branch
        %169 = sbr.rel (%p167) target = $region16
      $region15: #{resnet1d_forward.14} parent=11 // pred_region
        _
      $region16: #{resnet1d_forward.14} parent=11 // pred_fallthru
        _
      // Predicated region
      $region17: #{resnet1d_forward.14} parent=11 // pred_check
        %p170 = pneg %p79
      $region18: #{resnet1d_forward.14} parent=11 // pred_check_branch
        %172 = sbr.rel (%p170) target = $region20
      $region19: #{resnet1d_forward.14} parent=11 // pred_region
        _
      $region20: #{resnet1d_forward.14} parent=11 // pred_fallthru
        _
      // Predicated region
      $region21: #{resnet1d_forward.14} parent=11 // pred_check
        %p173 = pneg %p100
      $region22: #{resnet1d_forward.14} parent=11 // pred_check_branch
        %175 = sbr.rel (%p173) target = $region24
      $region23: #{resnet1d_forward.14} parent=11 // pred_region
        _
      $region24: #{resnet1d_forward.14} parent=11 // pred_fallthru
        _
    $region12: #{resnet1d_forward.14} parent=5 // pred_fallthru
      _
    %p176 = scmp.lt.s32.totalorder %s11, 2
    // Predicated region
    $region25: #{resnet1d_forward.14} parent=5 // pred_check
      %p177 = pneg %p176
    $region26: #{resnet1d_forward.14} parent=5 // pred_check_branch
      %179 = sbr.rel (%p177) target = $region28
    $region27: #{resnet1d_forward.14} parent=5 // pred_region
      // Predicated region
      $region29: #{resnet1d_forward.14} parent=27 // pred_check
        %p180 = pneg %p31
      $region30: #{resnet1d_forward.14} parent=27 // pred_check_branch
        %182 = sbr.rel (%p180) target = $region32
      $region31: #{resnet1d_forward.14} parent=27 // pred_region
        %p183 = scmp.lt.s32.totalorder %s11, 1
        %s184 = scalar_select %p183, %s11, 1
        %s185 = smul.addr %s184, 2
        %s186 = smul.addr %s185, 8
        %s187 = scalar_lea.vmem %s0, %s186
      $region32: #{resnet1d_forward.14} parent=27 // pred_fallthru
        _
      // Predicated region
      $region33: #{resnet1d_forward.14} parent=27 // pred_check
        %p188 = pneg %p120
      $region34: #{resnet1d_forward.14} parent=27 // pred_check_branch
        %190 = sbr.rel (%p188) target = $region36
      $region35: #{resnet1d_forward.14} parent=27 // pred_region
        %p191 = scmp.lt.s32.totalorder %s11, 1
        %s192 = scalar_select %p191, %s11, 1
        %s193 = smul.addr %s192, 2
        %s194 = smul.addr %s193, 8
        %s195 = scalar_lea.vmem %s4, %s194
      $region36: #{resnet1d_forward.14} parent=27 // pred_fallthru
        _
    $region28: #{resnet1d_forward.14} parent=5 // pred_fallthru
      _
    %p196 = scmp.le.s32.totalorder 1, %s11
    %p197 = scmp.lt.s32.totalorder %s11, 3
    %p198 = pnand %p196, %p197
    %p199 = pneg %p198
    // Predicated region
    $region37: #{resnet1d_forward.14} parent=5 // pred_check
      _
    $region38: #{resnet1d_forward.14} parent=5 // pred_check_branch
      %201 = sbr.rel (%p198) target = $region40
    $region39: #{resnet1d_forward.14} parent=5 // pred_region
      %s202 = ssub.s32 %s11, 1
      %p203 = scmp.lt.s32.totalorder %s16, 1
      %s204 = scalar_select %p203, %s16, 1
      %s205 = smul.addr %s204, 2
      %s206 = smul.addr %s205, 8
      %s207 = scalar_lea.vmem %s0, %s206
      %p208 = pneg %p37
      %p209 = pneg %p34
      %p210 = pneg %p58
      %p211 = pneg %p55
      %p212 = pneg %p79
      %p213 = pneg %p76
      %p214 = pneg %p100
      %p215 = pneg %p97
      %p216 = scmp.lt.s32.totalorder %s16, 1
      %s217 = scalar_select %p216, %s16, 1
      %s218 = smul.addr %s217, 2
      %s219 = smul.addr %s218, 8
      %s220 = scalar_lea.vmem %s4, %s219
      %p221 = pneg %p126
      %p222 = pneg %p123
      %p223 = pneg %p152
      %p224 = pneg %p149
      %p225 = scmp.lt.s32.totalorder %s16, 1
      %s226 = scalar_select %p225, %s16, 1
      %s227 = smul.addr %s226, 8
      %s228 = scalar_lea.vmem %s5, %s227
      %p229 = scmp.lt.s32.totalorder %s16, 1
      %s230 = scalar_select %p229, %s16, 1
      %s231 = smul.addr %s230, 2
      %s232 = smul.addr %s231, 8
      %s233 = scalar_lea.vmem %s0, %s232
      %p234 = scmp.lt.s32.totalorder %s16, 1
      %s235 = scalar_select %p234, %s16, 1
      %s236 = smul.addr %s235, 2
      %s237 = smul.addr %s236, 8
      %s238 = scalar_lea.vmem %s4, %s237
      %p239 = scmp.lt.s32.totalorder %s16, 1
      %s240 = scalar_select %p239, %s16, 1
      %s241 = smul.addr %s240, 8
      %s242 = scalar_lea.vmem %s5, %s241
      %v244 = vld [vmem:[%s233] sm:$0xff]
      %v245 = vpack.c.bf16 %v244, %v244
      %v246 = vld [vmem:[%s1] sm:$0xf]
      %v247 = vld [vmem:[%s233 + $0x1] sm:$0xff]
      %v248 = vpack.c.bf16 %v247, %v247
      %s249 = scalar_lea.vmem %s1, 4
      %v250 = vld [vmem:[%s249] sm:$0xf]
      %vm251 = vcmask 64512
      %v253 = vsel %vm251, %v248, 0
      %vm255 = vcmask 1043456
      %v257 = vsel %vm255, %v250, 0
      %259 = vmatprep.subr.bf16.mxu0 0
      %260 = vmatpush1.bf16.msra.mxu0 %v257
      %261 = vmatprep.subr.bf16.mxu0 0
      %262 = vmatpush1.bf16.msra.mxu0 0
      %263 = vmatprep.subr.bf16.mxu0 0
      %264 = vmatpush1.bf16.msra.mxu0 0
      %265 = vmatprep.subr.bf16.mxu0 0
      %266 = vmatpush1.bf16.msra.mxu0 0
      %267 = vmatprep.subr.bf16.mxu0 0
      %268 = vmatpush1.bf16.msra.mxu0 0
      %269 = vmatprep.subr.bf16.mxu0 0
      %270 = vmatpush1.bf16.msra.mxu0 0
      %271 = vmatprep.subr.bf16.mxu0 0
      %272 = vmatpush1.bf16.msra.mxu0 0
      %273 = vmatprep.subr.bf16.mxu0 0
      %274 = vmatpush1.bf16.msra.mxu0 0
      %275 = vmatprep.subr.bf16.mxu0 0
      %276 = vmatpush1.bf16.msra.mxu0 0
      %277 = vmatprep.subr.bf16.mxu0 0
      %278 = vmatpush1.bf16.msra.mxu0 0
      %279 = vmatprep.subr.bf16.mxu0 0
      %280 = vmatpush1.bf16.msra.mxu0 0
      %281 = vmatprep.subr.bf16.mxu0 0
      %282 = vmatpush1.bf16.msra.mxu0 0
      %283 = vmatprep.subr.bf16.mxu0 0
      %284 = vmatpush1.bf16.msra.mxu0 0
      %285 = vmatprep.subr.bf16.mxu0 0
      %286 = vmatpush1.bf16.msra.mxu0 0
      %287 = vmatprep.subr.bf16.mxu0 0
      %288 = vmatpush1.bf16.msra.mxu0 0
      %289 = vmatprep.subr.bf16.mxu0 0
      %290 = vmatpush1.bf16.msra.mxu0 0
      %291 = vmatprep.mubr.bf16.mxu0 0
      %292 = vmatmul.mubr.bf16.gmra.mrb[0].mxu0 %v253
      %v293 = vpop.f32.mrb[0].mxu0
      %v294 = vadd.f32 0.0, %v293
      %v295 = vpop.f32.mrb[0].mxu0
      %v296 = vpop.f32.mrb[0].mxu0
      %v297 = vpop.f32.mrb[0].mxu0
      %298 = vdwg.mxu0
      %v300 = vsel %vm251, %v245, 0
      %v303 = vsel %vm255, %v246, 0
      %305 = vmatprep.subr.bf16.mxu0 0
      %306 = vmatpush1.bf16.msra.mxu0 %v303
      %307 = vmatprep.subr.bf16.mxu0 0
      %308 = vmatpush1.bf16.msra.mxu0 0
      %309 = vmatprep.subr.bf16.mxu0 0
      %310 = vmatpush1.bf16.msra.mxu0 0
      %311 = vmatprep.subr.bf16.mxu0 0
      %312 = vmatpush1.bf16.msra.mxu0 0
      %313 = vmatprep.subr.bf16.mxu0 0
      %314 = vmatpush1.bf16.msra.mxu0 0
      %315 = vmatprep.subr.bf16.mxu0 0
      %316 = vmatpush1.bf16.msra.mxu0 0
      %317 = vmatprep.subr.bf16.mxu0 0
      %318 = vmatpush1.bf16.msra.mxu0 0
      %319 = vmatprep.subr.bf16.mxu0 0
      %320 = vmatpush1.bf16.msra.mxu0 0
      %321 = vmatprep.subr.bf16.mxu0 0
      %322 = vmatpush1.bf16.msra.mxu0 0
      %323 = vmatprep.subr.bf16.mxu0 0
      %324 = vmatpush1.bf16.msra.mxu0 0
      %325 = vmatprep.subr.bf16.mxu0 0
      %326 = vmatpush1.bf16.msra.mxu0 0
      %327 = vmatprep.subr.bf16.mxu0 0
      %328 = vmatpush1.bf16.msra.mxu0 0
      %329 = vmatprep.subr.bf16.mxu0 0
      %330 = vmatpush1.bf16.msra.mxu0 0
      %331 = vmatprep.subr.bf16.mxu0 0
      %332 = vmatpush1.bf16.msra.mxu0 0
      %333 = vmatprep.subr.bf16.mxu0 0
      %334 = vmatpush1.bf16.msra.mxu0 0
      %335 = vmatprep.subr.bf16.mxu0 0
      %336 = vmatpush1.bf16.msra.mxu0 0
      %337 = vmatprep.mubr.bf16.mxu0 0
      %338 = vmatmul.mubr.bf16.gmra.mrb[0].mxu0 %v300
      %v339 = vpop.f32.mrb[0].mxu0
      %v340 = vadd.f32 %v294, %v339
      %v341 = vpop.f32.mrb[0].mxu0
      %v342 = vpop.f32.mrb[0].mxu0
      %v343 = vpop.f32.mrb[0].mxu0
      %344 = vdwg.mxu0
      %v345 = vld [vmem:[%s233 + $0x2] sm:$0xff]
      %v346 = vpack.c.bf16 %v345, %v345
      %s347 = scalar_lea.vmem %s1, 8
      %v348 = vld [vmem:[%s347] sm:$0xf]
      %v350 = vsel %vm251, %v346, 0
      %v353 = vsel %vm255, %v348, 0
      %355 = vmatprep.subr.bf16.mxu0 0
      %356 = vmatpush1.bf16.msra.mxu0 %v353
      %357 = vmatprep.subr.bf16.mxu0 0
      %358 = vmatpush1.bf16.msra.mxu0 0
      %359 = vmatprep.subr.bf16.mxu0 0
      %360 = vmatpush1.bf16.msra.mxu0 0
      %361 = vmatprep.subr.bf16.mxu0 0
      %362 = vmatpush1.bf16.msra.mxu0 0
      %363 = vmatprep.subr.bf16.mxu0 0
      %364 = vmatpush1.bf16.msra.mxu0 0
      %365 = vmatprep.subr.bf16.mxu0 0
      %366 = vmatpush1.bf16.msra.mxu0 0
      %367 = vmatprep.subr.bf16.mxu0 0
      %368 = vmatpush1.bf16.msra.mxu0 0
      %369 = vmatprep.subr.bf16.mxu0 0
      %370 = vmatpush1.bf16.msra.mxu0 0
      %371 = vmatprep.subr.bf16.mxu0 0
      %372 = vmatpush1.bf16.msra.mxu0 0
      %373 = vmatprep.subr.bf16.mxu0 0
      %374 = vmatpush1.bf16.msra.mxu0 0
      %375 = vmatprep.subr.bf16.mxu0 0
      %376 = vmatpush1.bf16.msra.mxu0 0
      %377 = vmatprep.subr.bf16.mxu0 0
      %378 = vmatpush1.bf16.msra.mxu0 0
      %379 = vmatprep.subr.bf16.mxu0 0
      %380 = vmatpush1.bf16.msra.mxu0 0
      %381 = vmatprep.subr.bf16.mxu0 0
      %382 = vmatpush1.bf16.msra.mxu0 0
      %383 = vmatprep.subr.bf16.mxu0 0
      %384 = vmatpush1.bf16.msra.mxu0 0
      %385 = vmatprep.subr.bf16.mxu0 0
      %386 = vmatpush1.bf16.msra.mxu0 0
      %387 = vmatprep.mubr.bf16.mxu0 0
      %388 = vmatmul.mubr.bf16.gmra.mrb[0].mxu0 %v350
      %v389 = vpop.f32.mrb[0].mxu0
      %v390 = vadd.f32 0.0, %v389
      %v391 = vpop.f32.mrb[0].mxu0
      %v392 = vpop.f32.mrb[0].mxu0
      %v393 = vpop.f32.mrb[0].mxu0
      %394 = vdwg.mxu0
      %v395 = vadd.f32 %v340, %v390
      %v396 = vld [vmem:[%s2] sm:$0x1]
      %v398 = vlaneseq
      %v399 = vshrl.u32 %v398, 7
      %v400 = vsub.s32 0, %v399
      %v401 = vrot.slane %v396, %v400
      %v403 = vmul.f32 %v395, %v401
      %v404 = vld [vmem:[%s3] sm:$0x1]
      %v406 = vlaneseq
      %v407 = vshrl.u32 %v406, 7
      %v408 = vsub.s32 0, %v407
      %v409 = vrot.slane %v404, %v408
      %v411 = vadd.f32 %v403, %v409
      %v412 = vld [vmem:[%s238] ss:$2 sm:$0xff]
      %s413 = scalar_lea.vmem %s238, 1
      %v414 = vld [vmem:[%s413] ss:$2 sm:$0xff]
      %v415 = vmax.f32 %v412, %v414
      %v416 = vadd.f32 %v411, %v415
      %417 = vst.msk [vmem:[%s242] sm:$0xff] %vm251, %v416
      %p418 = scmp.lt.s32.totalorder %s16, 1
      %s419 = scalar_select %p418, %s16, 1
      %s420 = smul.addr %s419, 8
      %s421 = scalar_lea.vmem %s5, %s420
      // Predicated region
      $region41: #{resnet1d_forward.14} parent=39 // pred_check
        %p422 = pneg %p149
      $region42: #{resnet1d_forward.14} parent=39 // pred_check_branch
        %424 = sbr.rel (%p422) target = $region44
      $region43: #{resnet1d_forward.14} parent=39 // pred_region
        _
      $region44: #{resnet1d_forward.14} parent=39 // pred_fallthru
        _
    $region40: #{resnet1d_forward.14} parent=5 // pred_fallthru
      _
    %p425 = scmp.le.s32.totalorder 2, %s11
    // Predicated region
    $region45: #{resnet1d_forward.14} parent=5 // pred_check
      %p426 = pneg %p425
    $region46: #{resnet1d_forward.14} parent=5 // pred_check_branch
      %428 = sbr.rel (%p426) target = $region48
    $region47: #{resnet1d_forward.14} parent=5 // pred_region
      %s429 = ssub.s32 %s11, 2
      // Predicated region
      $region49: #{resnet1d_forward.14} parent=47 // pred_check
        %p430 = pneg %p155
      $region50: #{resnet1d_forward.14} parent=47 // pred_check_branch
        %432 = sbr.rel (%p430) target = $region52
      $region51: #{resnet1d_forward.14} parent=47 // pred_region
        %p433 = scmp.lt.s32.totalorder %s17, 1
        %s434 = scalar_select %p433, %s17, 1
        %s435 = smul.addr %s434, 8
        %s436 = scalar_lea.vmem %s5, %s435
      $region52: #{resnet1d_forward.14} parent=47 // pred_fallthru
        _
    $region48: #{resnet1d_forward.14} parent=5 // pred_fallthru
      _
  $region6: #{resnet1d_forward.14} parent=0 // loop_footer
    %s15 = sadd.s32 1, %s11
  $region7: #{resnet1d_forward.14} parent=0 // loop_footer_branch
    %10 = sbr.rel target = $region3
  $region8: #{resnet1d_forward.14} parent=0 // loop_exit
    _

// kernel: resnet1d_forward.15
$region0: #{resnet1d_forward.15}
  #allocation0 [shape = 'u32[]', space=smem, size = 0x4, offset = 0x4, fixed_abs, tag = 'smem constant byte address 0x4 - core index']
  #allocation1 [shape = 'u32[144,128]{1,0:T(1,128)}', space=vmem, size = 0x12000, scoped, tag = 'internal scratch']
  %s0 = inlined_call_operand.vmem [shape: f32[2,10,8], index: 0, kind: input, shape index: {}]
  %s1 = inlined_call_operand.vmem [shape: bf16[3,8,16], index: 1, kind: input, shape index: {}]
  %s2 = inlined_call_operand.vmem [shape: f32[1,16], index: 2, kind: input, shape index: {}]
  %s3 = inlined_call_operand.vmem [shape: f32[1,16], index: 3, kind: input, shape index: {}]
  %s4 = inlined_call_operand.vmem [shape: f32[1,8], index: 4, kind: input, shape index: {}]
  %s5 = inlined_call_operand.vmem [shape: f32[1,8], index: 5, kind: input, shape index: {}]
  %s6 = inlined_call_operand.vmem [shape: f32[2,8,16], index: 6, kind: output, shape index: {}]
  %s7 = sld [smem:[#allocation0]]
  $region57: #{resnet1d_forward.15} parent=0
    _
  %s9 = ssub.s32 1, %s7
  %s10 = scalar_select 0, %s9, %s7
  loop: start=0, step=1, limit=4
  $region2: #{resnet1d_forward.15} parent=0 // loop_pre_header
    _
  $region3: #{resnet1d_forward.15} parent=0 // loop_header
    %s12 = sphi 0, %s16
    %p13 = scmp.ge.s32.totalorder %s12, 4
    %s22 = sphi 0, %s24
    %s25 = sphi 0, %s22
    %s26 = sphi 0, %s25
    %s42 = sphi 0, %s26
    %s46 = sphi 0, %s46
    %s48 = sphi 0, %s46
    %s49 = sphi 0, %s48
    %s63 = sphi 0, %s49
    %s67 = sphi 0, %s67
    %s69 = sphi 0, %s67
    %s70 = sphi 0, %s69
    %s84 = sphi 0, %s70
    %s88 = sphi 0, %s88
    %s90 = sphi 0, %s88
    %s91 = sphi 0, %s90
    %s105 = sphi 0, %s91
    %s109 = sphi 0, %s109
    %s111 = sphi 0, %s109
    %s112 = sphi 0, %s111
    %s126 = sphi 0, %s112
    %s130 = sphi 0, %s130
    %s132 = sphi 0, %s130
    %s133 = sphi 0, %s132
    %s147 = sphi 0, %s133
    %s153 = sphi 0, %s155
    %s156 = sphi 0, %s153
    %s157 = sphi 0, %s156
    %s173 = sphi 0, %s157
  $region4: #{resnet1d_forward.15} parent=0 // loop_header_branch
    %15 = sbr.rel (%p13) target = $region8
  $region5: #{resnet1d_forward.15} parent=0 // loop_body
    %s17 = ssub.s32 %s12, 1
    %s18 = ssub.s32 %s12, 2
    %s19 = sadd.s32 %s12, 1
    %s20 = ssub.s32 %s12, %s19
    %p21 = scmp.eq.s32.totalorder %s20, 0
    %s23 = sadd.s32 %s22, 1
    %s24 = scalar_select %p21, %s22, %s23
    %p27 = pneg %p21
    %p28 = scmp.eq.s32.totalorder %s12, 1
    %p29 = por %p27, %p28
    %p30 = scmp.ne.s32.totalorder %s22, %s25
    %p31 = scmp.eq.s32.totalorder %s12, 0
    %p32 = por %p30, %p31
    %p33 = scmp.ne.s32.totalorder %s22, %s25
    %p34 = scmp.eq.s32.totalorder %s17, 1
    %p35 = por %p33, %p34
    %p36 = scmp.ne.s32.totalorder %s25, %s26
    %p37 = scmp.eq.s32.totalorder %s17, 0
    %p38 = por %p36, %p37
    %p39 = scmp.ne.s32.totalorder %s25, %s26
    %p40 = scmp.eq.s32.totalorder %s18, 1
    %p41 = por %p39, %p40
    %p43 = scmp.ne.s32.totalorder %s26, %s42
    %p44 = scmp.eq.s32.totalorder %s18, 0
    %p45 = por %p43, %p44
    %s47 = sadd.s32 %s46, 1
    %p50 = scmp.eq.s32.totalorder %s12, 1
    %p51 = scmp.ne.s32.totalorder %s46, %s48
    %p52 = scmp.eq.s32.totalorder %s12, 0
    %p53 = por %p51, %p52
    %p54 = scmp.ne.s32.totalorder %s46, %s48
    %p55 = scmp.eq.s32.totalorder %s17, 1
    %p56 = por %p54, %p55
    %p57 = scmp.ne.s32.totalorder %s48, %s49
    %p58 = scmp.eq.s32.totalorder %s17, 0
    %p59 = por %p57, %p58
    %p60 = scmp.ne.s32.totalorder %s48, %s49
    %p61 = scmp.eq.s32.totalorder %s18, 1
    %p62 = por %p60, %p61
    %p64 = scmp.ne.s32.totalorder %s49, %s63
    %p65 = scmp.eq.s32.totalorder %s18, 0
    %p66 = por %p64, %p65
    %s68 = sadd.s32 %s67, 1
    %p71 = scmp.eq.s32.totalorder %s12, 1
    %p72 = scmp.ne.s32.totalorder %s67, %s69
    %p73 = scmp.eq.s32.totalorder %s12, 0
    %p74 = por %p72, %p73
    %p75 = scmp.ne.s32.totalorder %s67, %s69
    %p76 = scmp.eq.s32.totalorder %s17, 1
    %p77 = por %p75, %p76
    %p78 = scmp.ne.s32.totalorder %s69, %s70
    %p79 = scmp.eq.s32.totalorder %s17, 0
    %p80 = por %p78, %p79
    %p81 = scmp.ne.s32.totalorder %s69, %s70
    %p82 = scmp.eq.s32.totalorder %s18, 1
    %p83 = por %p81, %p82
    %p85 = scmp.ne.s32.totalorder %s70, %s84
    %p86 = scmp.eq.s32.totalorder %s18, 0
    %p87 = por %p85, %p86
    %s89 = sadd.s32 %s88, 1
    %p92 = scmp.eq.s32.totalorder %s12, 1
    %p93 = scmp.ne.s32.totalorder %s88, %s90
    %p94 = scmp.eq.s32.totalorder %s12, 0
    %p95 = por %p93, %p94
    %p96 = scmp.ne.s32.totalorder %s88, %s90
    %p97 = scmp.eq.s32.totalorder %s17, 1
    %p98 = por %p96, %p97
    %p99 = scmp.ne.s32.totalorder %s90, %s91
    %p100 = scmp.eq.s32.totalorder %s17, 0
    %p101 = por %p99, %p100
    %p102 = scmp.ne.s32.totalorder %s90, %s91
    %p103 = scmp.eq.s32.totalorder %s18, 1
    %p104 = por %p102, %p103
    %p106 = scmp.ne.s32.totalorder %s91, %s105
    %p107 = scmp.eq.s32.totalorder %s18, 0
    %p108 = por %p106, %p107
    %s110 = sadd.s32 %s109, 1
    %p113 = scmp.eq.s32.totalorder %s12, 1
    %p114 = scmp.ne.s32.totalorder %s109, %s111
    %p115 = scmp.eq.s32.totalorder %s12, 0
    %p116 = por %p114, %p115
    %p117 = scmp.ne.s32.totalorder %s109, %s111
    %p118 = scmp.eq.s32.totalorder %s17, 1
    %p119 = por %p117, %p118
    %p120 = scmp.ne.s32.totalorder %s111, %s112
    %p121 = scmp.eq.s32.totalorder %s17, 0
    %p122 = por %p120, %p121
    %p123 = scmp.ne.s32.totalorder %s111, %s112
    %p124 = scmp.eq.s32.totalorder %s18, 1
    %p125 = por %p123, %p124
    %p127 = scmp.ne.s32.totalorder %s112, %s126
    %p128 = scmp.eq.s32.totalorder %s18, 0
    %p129 = por %p127, %p128
    %s131 = sadd.s32 %s130, 1
    %p134 = scmp.eq.s32.totalorder %s12, 1
    %p135 = scmp.ne.s32.totalorder %s130, %s132
    %p136 = scmp.eq.s32.totalorder %s12, 0
    %p137 = por %p135, %p136
    %p138 = scmp.ne.s32.totalorder %s130, %s132
    %p139 = scmp.eq.s32.totalorder %s17, 1
    %p140 = por %p138, %p139
    %p141 = scmp.ne.s32.totalorder %s132, %s133
    %p142 = scmp.eq.s32.totalorder %s17, 0
    %p143 = por %p141, %p142
    %p144 = scmp.ne.s32.totalorder %s132, %s133
    %p145 = scmp.eq.s32.totalorder %s18, 1
    %p146 = por %p144, %p145
    %p148 = scmp.ne.s32.totalorder %s133, %s147
    %p149 = scmp.eq.s32.totalorder %s18, 0
    %p150 = por %p148, %p149
    %s151 = ssub.s32 %s12, %s19
    %p152 = scmp.eq.s32.totalorder %s151, 0
    %s154 = sadd.s32 %s153, 1
    %s155 = scalar_select %p152, %s153, %s154
    %p158 = pneg %p152
    %p159 = scmp.eq.s32.totalorder %s12, 1
    %p160 = por %p158, %p159
    %p161 = scmp.ne.s32.totalorder %s153, %s156
    %p162 = scmp.eq.s32.totalorder %s12, 0
    %p163 = por %p161, %p162
    %p164 = scmp.ne.s32.totalorder %s153, %s156
    %p165 = scmp.eq.s32.totalorder %s17, 1
    %p166 = por %p164, %p165
    %p167 = scmp.ne.s32.totalorder %s156, %s157
    %p168 = scmp.eq.s32.totalorder %s17, 0
    %p169 = por %p167, %p168
    %p170 = scmp.ne.s32.totalorder %s156, %s157
    %p171 = scmp.eq.s32.totalorder %s18, 1
    %p172 = por %p170, %p171
    %p174 = scmp.ne.s32.totalorder %s157, %s173
    %p175 = scmp.eq.s32.totalorder %s18, 0
    %p176 = por %p174, %p175
    %p177 = scmp.le.s32.totalorder 1, %s12
    %p178 = scmp.lt.s32.totalorder %s12, 3
    %p179 = pnand %p177, %p178
    %p180 = pneg %p179
    // Predicated region
    $region9: #{resnet1d_forward.15} parent=5 // pred_check
      _
    $region10: #{resnet1d_forward.15} parent=5 // pred_check_branch
      %182 = sbr.rel (%p179) target = $region12
    $region11: #{resnet1d_forward.15} parent=5 // pred_region
      %s183 = ssub.s32 %s12, 1
      // Predicated region
      $region13: #{resnet1d_forward.15} parent=11 // pred_check
        %p184 = pneg %p59
      $region14: #{resnet1d_forward.15} parent=11 // pred_check_branch
        %186 = sbr.rel (%p184) target = $region16
      $region15: #{resnet1d_forward.15} parent=11 // pred_region
        _
      $region16: #{resnet1d_forward.15} parent=11 // pred_fallthru
        _
      // Predicated region
      $region17: #{resnet1d_forward.15} parent=11 // pred_check
        %p187 = pneg %p80
      $region18: #{resnet1d_forward.15} parent=11 // pred_check_branch
        %189 = sbr.rel (%p187) target = $region20
      $region19: #{resnet1d_forward.15} parent=11 // pred_region
        _
      $region20: #{resnet1d_forward.15} parent=11 // pred_fallthru
        _
      // Predicated region
      $region21: #{resnet1d_forward.15} parent=11 // pred_check
        %p190 = pneg %p101
      $region22: #{resnet1d_forward.15} parent=11 // pred_check_branch
        %192 = sbr.rel (%p190) target = $region24
      $region23: #{resnet1d_forward.15} parent=11 // pred_region
        _
      $region24: #{resnet1d_forward.15} parent=11 // pred_fallthru
        _
      // Predicated region
      $region25: #{resnet1d_forward.15} parent=11 // pred_check
        %p193 = pneg %p122
      $region26: #{resnet1d_forward.15} parent=11 // pred_check_branch
        %195 = sbr.rel (%p193) target = $region28
      $region27: #{resnet1d_forward.15} parent=11 // pred_region
        _
      $region28: #{resnet1d_forward.15} parent=11 // pred_fallthru
        _
      // Predicated region
      $region29: #{resnet1d_forward.15} parent=11 // pred_check
        %p196 = pneg %p143
      $region30: #{resnet1d_forward.15} parent=11 // pred_check_branch
        %198 = sbr.rel (%p196) target = $region32
      $region31: #{resnet1d_forward.15} parent=11 // pred_region
        _
      $region32: #{resnet1d_forward.15} parent=11 // pred_fallthru
        _
    $region12: #{resnet1d_forward.15} parent=5 // pred_fallthru
      _
    %p199 = scmp.lt.s32.totalorder %s12, 2
    // Predicated region
    $region33: #{resnet1d_forward.15} parent=5 // pred_check
      %p200 = pneg %p199
    $region34: #{resnet1d_forward.15} parent=5 // pred_check_branch
      %202 = sbr.rel (%p200) target = $region36
    $region35: #{resnet1d_forward.15} parent=5 // pred_region
      // Predicated region
      $region37: #{resnet1d_forward.15} parent=35 // pred_check
        %p203 = pneg %p32
      $region38: #{resnet1d_forward.15} parent=35 // pred_check_branch
        %205 = sbr.rel (%p203) target = $region40
      $region39: #{resnet1d_forward.15} parent=35 // pred_region
        %p206 = scmp.lt.s32.totalorder %s12, 1
        %s207 = scalar_select %p206, %s12, 1
        %s208 = smul.addr %s207, 2
        %s209 = smul.addr %s208, 8
        %s210 = scalar_lea.vmem %s0, %s209
      $region40: #{resnet1d_forward.15} parent=35 // pred_fallthru
        _
    $region36: #{resnet1d_forward.15} parent=5 // pred_fallthru
      _
    %p211 = scmp.le.s32.totalorder 1, %s12
    %p212 = scmp.lt.s32.totalorder %s12, 3
    %p213 = pnand %p211, %p212
    %p214 = pneg %p213
    // Predicated region
    $region41: #{resnet1d_forward.15} parent=5 // pred_check
      _
    $region42: #{resnet1d_forward.15} parent=5 // pred_check_branch
      %216 = sbr.rel (%p213) target = $region44
    $region43: #{resnet1d_forward.15} parent=5 // pred_region
      %s217 = ssub.s32 %s12, 1
      %p218 = scmp.lt.s32.totalorder %s17, 1
      %s219 = scalar_select %p218, %s17, 1
      %s220 = smul.addr %s219, 2
      %s221 = smul.addr %s220, 8
      %s222 = scalar_lea.vmem %s0, %s221
      %p223 = pneg %p38
      %p224 = pneg %p35
      %p225 = pneg %p59
      %p226 = pneg %p56
      %p227 = pneg %p80
      %p228 = pneg %p77
      %p229 = pneg %p101
      %p230 = pneg %p98
      %p231 = pneg %p122
      %p232 = pneg %p119
      %p233 = pneg %p143
      %p234 = pneg %p140
      %p235 = pneg %p169
      %p236 = pneg %p166
      %p237 = scmp.lt.s32.totalorder %s17, 1
      %s238 = scalar_select %p237, %s17, 1
      %s239 = smul.addr %s238, 8
      %s240 = scalar_lea.vmem %s6, %s239
      %p241 = scmp.lt.s32.totalorder %s17, 1
      %s242 = scalar_select %p241, %s17, 1
      %s243 = smul.addr %s242, 2
      %s244 = smul.addr %s243, 8
      %s245 = scalar_lea.vmem %s0, %s244
      %p246 = scmp.lt.s32.totalorder %s17, 1
      %s247 = scalar_select %p246, %s17, 1
      %s248 = smul.addr %s247, 8
      %s249 = scalar_lea.vmem %s6, %s248
      %v251 = vld [vmem:[%s245] sm:$0xff]
      %v252 = vld [vmem:[%s4] sm:$0x1]
      %v254 = vlaneseq
      %v255 = vshrl.u32 %v254, 7
      %v256 = vsub.s32 0, %v255
      %v257 = vrot.slane %v252, %v256
      %v259 = vmul.f32 %v251, %v257
      %v260 = vld [vmem:[%s5] sm:$0x1]
      %v262 = vlaneseq
      %v263 = vshrl.u32 %v262, 7
      %v264 = vsub.s32 0, %v263
      %v265 = vrot.slane %v260, %v264
      %v267 = vadd.f32 %v259, %v265
      %v268 = vmax.f32 %v267, 0.0
      %v269 = vpack.c.bf16 %v268, %v268
      %v270 = vld [vmem:[%s1] sm:$0xf]
      %v271 = vld [vmem:[%s245 + $0x1] sm:$0xff]
      %v272 = vmul.f32 %v271, %v257
      %v273 = vadd.f32 %v272, %v265
      %v274 = vmax.f32 %v273, 0.0
      %v275 = vpack.c.bf16 %v274, %v274
      %s276 = scalar_lea.vmem %s1, 4
      %v277 = vld [vmem:[%s276] sm:$0xf]
      %vm278 = vcmask 64512
      %v280 = vsel %vm278, %v275, 0
      %vm282 = vcmask 1043456
      %v284 = vsel %vm282, %v277, 0
      %286 = vmatprep.subr.bf16.mxu0 0
      %287 = vmatpush1.bf16.msra.mxu0 %v284
      %288 = vmatprep.subr.bf16.mxu0 0
      %289 = vmatpush1.bf16.msra.mxu0 0
      %290 = vmatprep.subr.bf16.mxu0 0
      %291 = vmatpush1.bf16.msra.mxu0 0
      %292 = vmatprep.subr.bf16.mxu0 0
      %293 = vmatpush1.bf16.msra.mxu0 0
      %294 = vmatprep.subr.bf16.mxu0 0
      %295 = vmatpush1.bf16.msra.mxu0 0
      %296 = vmatprep.subr.bf16.mxu0 0
      %297 = vmatpush1.bf16.msra.mxu0 0
      %298 = vmatprep.subr.bf16.mxu0 0
      %299 = vmatpush1.bf16.msra.mxu0 0
      %300 = vmatprep.subr.bf16.mxu0 0
      %301 = vmatpush1.bf16.msra.mxu0 0
      %302 = vmatprep.subr.bf16.mxu0 0
      %303 = vmatpush1.bf16.msra.mxu0 0
      %304 = vmatprep.subr.bf16.mxu0 0
      %305 = vmatpush1.bf16.msra.mxu0 0
      %306 = vmatprep.subr.bf16.mxu0 0
      %307 = vmatpush1.bf16.msra.mxu0 0
      %308 = vmatprep.subr.bf16.mxu0 0
      %309 = vmatpush1.bf16.msra.mxu0 0
      %310 = vmatprep.subr.bf16.mxu0 0
      %311 = vmatpush1.bf16.msra.mxu0 0
      %312 = vmatprep.subr.bf16.mxu0 0
      %313 = vmatpush1.bf16.msra.mxu0 0
      %314 = vmatprep.subr.bf16.mxu0 0
      %315 = vmatpush1.bf16.msra.mxu0 0
      %316 = vmatprep.subr.bf16.mxu0 0
      %317 = vmatpush1.bf16.msra.mxu0 0
      %318 = vmatprep.mubr.bf16.mxu0 0
      %319 = vmatmul.mubr.bf16.gmra.mrb[0].mxu0 %v280
      %v320 = vpop.f32.mrb[0].mxu0
      %v321 = vadd.f32 0.0, %v320
      %v322 = vpop.f32.mrb[0].mxu0
      %v323 = vpop.f32.mrb[0].mxu0
      %v324 = vpop.f32.mrb[0].mxu0
      %325 = vdwg.mxu0
      %v327 = vsel %vm278, %v269, 0
      %v330 = vsel %vm282, %v270, 0
      %332 = vmatprep.subr.bf16.mxu0 0
      %333 = vmatpush1.bf16.msra.mxu0 %v330
      %334 = vmatprep.subr.bf16.mxu0 0
      %335 = vmatpush1.bf16.msra.mxu0 0
      %336 = vmatprep.subr.bf16.mxu0 0
      %337 = vmatpush1.bf16.msra.mxu0 0
      %338 = vmatprep.subr.bf16.mxu0 0
      %339 = vmatpush1.bf16.msra.mxu0 0
      %340 = vmatprep.subr.bf16.mxu0 0
      %341 = vmatpush1.bf16.msra.mxu0 0
      %342 = vmatprep.subr.bf16.mxu0 0
      %343 = vmatpush1.bf16.msra.mxu0 0
      %344 = vmatprep.subr.bf16.mxu0 0
      %345 = vmatpush1.bf16.msra.mxu0 0
      %346 = vmatprep.subr.bf16.mxu0 0
      %347 = vmatpush1.bf16.msra.mxu0 0
      %348 = vmatprep.subr.bf16.mxu0 0
      %349 = vmatpush1.bf16.msra.mxu0 0
      %350 = vmatprep.subr.bf16.mxu0 0
      %351 = vmatpush1.bf16.msra.mxu0 0
      %352 = vmatprep.subr.bf16.mxu0 0
      %353 = vmatpush1.bf16.msra.mxu0 0
      %354 = vmatprep.subr.bf16.mxu0 0
      %355 = vmatpush1.bf16.msra.mxu0 0
      %356 = vmatprep.subr.bf16.mxu0 0
      %357 = vmatpush1.bf16.msra.mxu0 0
      %358 = vmatprep.subr.bf16.mxu0 0
      %359 = vmatpush1.bf16.msra.mxu0 0
      %360 = vmatprep.subr.bf16.mxu0 0
      %361 = vmatpush1.bf16.msra.mxu0 0
      %362 = vmatprep.subr.bf16.mxu0 0
      %363 = vmatpush1.bf16.msra.mxu0 0
      %364 = vmatprep.mubr.bf16.mxu0 0
      %365 = vmatmul.mubr.bf16.gmra.mrb[0].mxu0 %v327
      %v366 = vpop.f32.mrb[0].mxu0
      %v367 = vadd.f32 %v321, %v366
      %v368 = vpop.f32.mrb[0].mxu0
      %v369 = vpop.f32.mrb[0].mxu0
      %v370 = vpop.f32.mrb[0].mxu0
      %371 = vdwg.mxu0
      %v372 = vld [vmem:[%s245 + $0x2] sm:$0xff]
      %v373 = vmul.f32 %v372, %v257
      %v374 = vadd.f32 %v373, %v265
      %v375 = vmax.f32 %v374, 0.0
      %v376 = vpack.c.bf16 %v375, %v375
      %s377 = scalar_lea.vmem %s1, 8
      %v378 = vld [vmem:[%s377] sm:$0xf]
      %v380 = vsel %vm278, %v376, 0
      %v383 = vsel %vm282, %v378, 0
      %385 = vmatprep.subr.bf16.mxu0 0
      %386 = vmatpush1.bf16.msra.mxu0 %v383
      %387 = vmatprep.subr.bf16.mxu0 0
      %388 = vmatpush1.bf16.msra.mxu0 0
      %389 = vmatprep.subr.bf16.mxu0 0
      %390 = vmatpush1.bf16.msra.mxu0 0
      %391 = vmatprep.subr.bf16.mxu0 0
      %392 = vmatpush1.bf16.msra.mxu0 0
      %393 = vmatprep.subr.bf16.mxu0 0
      %394 = vmatpush1.bf16.msra.mxu0 0
      %395 = vmatprep.subr.bf16.mxu0 0
      %396 = vmatpush1.bf16.msra.mxu0 0
      %397 = vmatprep.subr.bf16.mxu0 0
      %398 = vmatpush1.bf16.msra.mxu0 0
      %399 = vmatprep.subr.bf16.mxu0 0
      %400 = vmatpush1.bf16.msra.mxu0 0
      %401 = vmatprep.subr.bf16.mxu0 0
      %402 = vmatpush1.bf16.msra.mxu0 0
      %403 = vmatprep.subr.bf16.mxu0 0
      %404 = vmatpush1.bf16.msra.mxu0 0
      %405 = vmatprep.subr.bf16.mxu0 0
      %406 = vmatpush1.bf16.msra.mxu0 0
      %407 = vmatprep.subr.bf16.mxu0 0
      %408 = vmatpush1.bf16.msra.mxu0 0
      %409 = vmatprep.subr.bf16.mxu0 0
      %410 = vmatpush1.bf16.msra.mxu0 0
      %411 = vmatprep.subr.bf16.mxu0 0
      %412 = vmatpush1.bf16.msra.mxu0 0
      %413 = vmatprep.subr.bf16.mxu0 0
      %414 = vmatpush1.bf16.msra.mxu0 0
      %415 = vmatprep.subr.bf16.mxu0 0
      %416 = vmatpush1.bf16.msra.mxu0 0
      %417 = vmatprep.mubr.bf16.mxu0 0
      %418 = vmatmul.mubr.bf16.gmra.mrb[0].mxu0 %v380
      %v419 = vpop.f32.mrb[0].mxu0
      %v420 = vadd.f32 0.0, %v419
      %v421 = vpop.f32.mrb[0].mxu0
      %v422 = vpop.f32.mrb[0].mxu0
      %v423 = vpop.f32.mrb[0].mxu0
      %424 = vdwg.mxu0
      %v425 = vadd.f32 %v367, %v420
      %v426 = vld [vmem:[%s2] sm:$0x1]
      %v428 = vlaneseq
      %v429 = vshrl.u32 %v428, 7
      %v430 = vsub.s32 0, %v429
      %v431 = vrot.slane %v426, %v430
      %v433 = vmul.f32 %v425, %v431
      %v434 = vld [vmem:[%s3] sm:$0x1]
      %v436 = vlaneseq
      %v437 = vshrl.u32 %v436, 7
      %v438 = vsub.s32 0, %v437
      %v439 = vrot.slane %v434, %v438
      %v441 = vadd.f32 %v433, %v439
      %v442 = vmax.f32 %v441, 0.0
      %vm443 = vcmask 130048
      %444 = vst.msk [vmem:[%s249] sm:$0xff] %vm443, %v442
      %p445 = scmp.lt.s32.totalorder %s17, 1
      %s446 = scalar_select %p445, %s17, 1
      %s447 = smul.addr %s446, 8
      %s448 = scalar_lea.vmem %s6, %s447
      // Predicated region
      $region45: #{resnet1d_forward.15} parent=43 // pred_check
        %p449 = pneg %p166
      $region46: #{resnet1d_forward.15} parent=43 // pred_check_branch
        %451 = sbr.rel (%p449) target = $region48
      $region47: #{resnet1d_forward.15} parent=43 // pred_region
        _
      $region48: #{resnet1d_forward.15} parent=43 // pred_fallthru
        _
    $region44: #{resnet1d_forward.15} parent=5 // pred_fallthru
      _
    %p452 = scmp.le.s32.totalorder 2, %s12
    // Predicated region
    $region49: #{resnet1d_forward.15} parent=5 // pred_check
      %p453 = pneg %p452
    $region50: #{resnet1d_forward.15} parent=5 // pred_check_branch
      %455 = sbr.rel (%p453) target = $region52
    $region51: #{resnet1d_forward.15} parent=5 // pred_region
      %s456 = ssub.s32 %s12, 2
      // Predicated region
      $region53: #{resnet1d_forward.15} parent=51 // pred_check
        %p457 = pneg %p172
      $region54: #{resnet1d_forward.15} parent=51 // pred_check_branch
        %459 = sbr.rel (%p457) target = $region56
      $region55: #{resnet1d_forward.15} parent=51 // pred_region
        %p460 = scmp.lt.s32.totalorder %s18, 1
        %s461 = scalar_select %p460, %s18, 1
        %s462 = smul.addr %s461, 8
        %s463 = scalar_lea.vmem %s6, %s462
      $region56: #{resnet1d_forward.15} parent=51 // pred_fallthru
        _
    $region52: #{resnet1d_forward.15} parent=5 // pred_fallthru
      _
  $region6: #{resnet1d_forward.15} parent=0 // loop_footer
    %s16 = sadd.s32 1, %s12
  $region7: #{resnet1d_forward.15} parent=0 // loop_footer_branch
    %11 = sbr.rel target = $region3
  $region8: #{resnet1d_forward.15} parent=0 // loop_exit
    _

// kernel: resnet1d_forward.18
$region0: #{resnet1d_forward.18}
  #allocation0 [shape = 'u32[]', space=smem, size = 0x4, offset = 0x4, fixed_abs, tag = 'smem constant byte address 0x4 - core index']
  #allocation1 [shape = 'u32[144,128]{1,0:T(1,128)}', space=vmem, size = 0x12000, scoped, tag = 'internal scratch']
  %s0 = inlined_call_operand.vmem [shape: f32[2,6,16], index: 0, kind: input, shape index: {}]
  %s1 = inlined_call_operand.vmem [shape: bf16[3,16,16], index: 1, kind: input, shape index: {}]
  %s2 = inlined_call_operand.vmem [shape: f32[1,16], index: 2, kind: input, shape index: {}]
  %s3 = inlined_call_operand.vmem [shape: f32[1,16], index: 3, kind: input, shape index: {}]
  %s4 = inlined_call_operand.vmem [shape: f32[2,8,16], index: 4, kind: input, shape index: {}]
  %s5 = inlined_call_operand.vmem [shape: f32[2,4,16], index: 5, kind: output, shape index: {}]
  %s6 = sld [smem:[#allocation0]]
  $region53: #{resnet1d_forward.18} parent=0
    _
  %s8 = ssub.s32 1, %s6
  %s9 = scalar_select 0, %s8, %s6
  loop: start=0, step=1, limit=4
  $region2: #{resnet1d_forward.18} parent=0 // loop_pre_header
    _
  $region3: #{resnet1d_forward.18} parent=0 // loop_header
    %s11 = sphi 0, %s15
    %p12 = scmp.ge.s32.totalorder %s11, 4
    %s21 = sphi 0, %s23
    %s24 = sphi 0, %s21
    %s25 = sphi 0, %s24
    %s41 = sphi 0, %s25
    %s45 = sphi 0, %s45
    %s47 = sphi 0, %s45
    %s48 = sphi 0, %s47
    %s62 = sphi 0, %s48
    %s66 = sphi 0, %s66
    %s68 = sphi 0, %s66
    %s69 = sphi 0, %s68
    %s83 = sphi 0, %s69
    %s87 = sphi 0, %s87
    %s89 = sphi 0, %s87
    %s90 = sphi 0, %s89
    %s104 = sphi 0, %s90
    %s110 = sphi 0, %s112
    %s113 = sphi 0, %s110
    %s114 = sphi 0, %s113
    %s130 = sphi 0, %s114
    %s136 = sphi 0, %s138
    %s139 = sphi 0, %s136
    %s140 = sphi 0, %s139
    %s156 = sphi 0, %s140
  $region4: #{resnet1d_forward.18} parent=0 // loop_header_branch
    %14 = sbr.rel (%p12) target = $region8
  $region5: #{resnet1d_forward.18} parent=0 // loop_body
    %s16 = ssub.s32 %s11, 1
    %s17 = ssub.s32 %s11, 2
    %s18 = sadd.s32 %s11, 1
    %s19 = ssub.s32 %s11, %s18
    %p20 = scmp.eq.s32.totalorder %s19, 0
    %s22 = sadd.s32 %s21, 1
    %s23 = scalar_select %p20, %s21, %s22
    %p26 = pneg %p20
    %p27 = scmp.eq.s32.totalorder %s11, 1
    %p28 = por %p26, %p27
    %p29 = scmp.ne.s32.totalorder %s21, %s24
    %p30 = scmp.eq.s32.totalorder %s11, 0
    %p31 = por %p29, %p30
    %p32 = scmp.ne.s32.totalorder %s21, %s24
    %p33 = scmp.eq.s32.totalorder %s16, 1
    %p34 = por %p32, %p33
    %p35 = scmp.ne.s32.totalorder %s24, %s25
    %p36 = scmp.eq.s32.totalorder %s16, 0
    %p37 = por %p35, %p36
    %p38 = scmp.ne.s32.totalorder %s24, %s25
    %p39 = scmp.eq.s32.totalorder %s17, 1
    %p40 = por %p38, %p39
    %p42 = scmp.ne.s32.totalorder %s25, %s41
    %p43 = scmp.eq.s32.totalorder %s17, 0
    %p44 = por %p42, %p43
    %s46 = sadd.s32 %s45, 1
    %p49 = scmp.eq.s32.totalorder %s11, 1
    %p50 = scmp.ne.s32.totalorder %s45, %s47
    %p51 = scmp.eq.s32.totalorder %s11, 0
    %p52 = por %p50, %p51
    %p53 = scmp.ne.s32.totalorder %s45, %s47
    %p54 = scmp.eq.s32.totalorder %s16, 1
    %p55 = por %p53, %p54
    %p56 = scmp.ne.s32.totalorder %s47, %s48
    %p57 = scmp.eq.s32.totalorder %s16, 0
    %p58 = por %p56, %p57
    %p59 = scmp.ne.s32.totalorder %s47, %s48
    %p60 = scmp.eq.s32.totalorder %s17, 1
    %p61 = por %p59, %p60
    %p63 = scmp.ne.s32.totalorder %s48, %s62
    %p64 = scmp.eq.s32.totalorder %s17, 0
    %p65 = por %p63, %p64
    %s67 = sadd.s32 %s66, 1
    %p70 = scmp.eq.s32.totalorder %s11, 1
    %p71 = scmp.ne.s32.totalorder %s66, %s68
    %p72 = scmp.eq.s32.totalorder %s11, 0
    %p73 = por %p71, %p72
    %p74 = scmp.ne.s32.totalorder %s66, %s68
    %p75 = scmp.eq.s32.totalorder %s16, 1
    %p76 = por %p74, %p75
    %p77 = scmp.ne.s32.totalorder %s68, %s69
    %p78 = scmp.eq.s32.totalorder %s16, 0
    %p79 = por %p77, %p78
    %p80 = scmp.ne.s32.totalorder %s68, %s69
    %p81 = scmp.eq.s32.totalorder %s17, 1
    %p82 = por %p80, %p81
    %p84 = scmp.ne.s32.totalorder %s69, %s83
    %p85 = scmp.eq.s32.totalorder %s17, 0
    %p86 = por %p84, %p85
    %s88 = sadd.s32 %s87, 1
    %p91 = scmp.eq.s32.totalorder %s11, 1
    %p92 = scmp.ne.s32.totalorder %s87, %s89
    %p93 = scmp.eq.s32.totalorder %s11, 0
    %p94 = por %p92, %p93
    %p95 = scmp.ne.s32.totalorder %s87, %s89
    %p96 = scmp.eq.s32.totalorder %s16, 1
    %p97 = por %p95, %p96
    %p98 = scmp.ne.s32.totalorder %s89, %s90
    %p99 = scmp.eq.s32.totalorder %s16, 0
    %p100 = por %p98, %p99
    %p101 = scmp.ne.s32.totalorder %s89, %s90
    %p102 = scmp.eq.s32.totalorder %s17, 1
    %p103 = por %p101, %p102
    %p105 = scmp.ne.s32.totalorder %s90, %s104
    %p106 = scmp.eq.s32.totalorder %s17, 0
    %p107 = por %p105, %p106
    %s108 = ssub.s32 %s11, %s18
    %p109 = scmp.eq.s32.totalorder %s108, 0
    %s111 = sadd.s32 %s110, 1
    %s112 = scalar_select %p109, %s110, %s111
    %p115 = pneg %p109
    %p116 = scmp.eq.s32.totalorder %s11, 1
    %p117 = por %p115, %p116
    %p118 = scmp.ne.s32.totalorder %s110, %s113
    %p119 = scmp.eq.s32.totalorder %s11, 0
    %p120 = por %p118, %p119
    %p121 = scmp.ne.s32.totalorder %s110, %s113
    %p122 = scmp.eq.s32.totalorder %s16, 1
    %p123 = por %p121, %p122
    %p124 = scmp.ne.s32.totalorder %s113, %s114
    %p125 = scmp.eq.s32.totalorder %s16, 0
    %p126 = por %p124, %p125
    %p127 = scmp.ne.s32.totalorder %s113, %s114
    %p128 = scmp.eq.s32.totalorder %s17, 1
    %p129 = por %p127, %p128
    %p131 = scmp.ne.s32.totalorder %s114, %s130
    %p132 = scmp.eq.s32.totalorder %s17, 0
    %p133 = por %p131, %p132
    %s134 = ssub.s32 %s11, %s18
    %p135 = scmp.eq.s32.totalorder %s134, 0
    %s137 = sadd.s32 %s136, 1
    %s138 = scalar_select %p135, %s136, %s137
    %p141 = pneg %p135
    %p142 = scmp.eq.s32.totalorder %s11, 1
    %p143 = por %p141, %p142
    %p144 = scmp.ne.s32.totalorder %s136, %s139
    %p145 = scmp.eq.s32.totalorder %s11, 0
    %p146 = por %p144, %p145
    %p147 = scmp.ne.s32.totalorder %s136, %s139
    %p148 = scmp.eq.s32.totalorder %s16, 1
    %p149 = por %p147, %p148
    %p150 = scmp.ne.s32.totalorder %s139, %s140
    %p151 = scmp.eq.s32.totalorder %s16, 0
    %p152 = por %p150, %p151
    %p153 = scmp.ne.s32.totalorder %s139, %s140
    %p154 = scmp.eq.s32.totalorder %s17, 1
    %p155 = por %p153, %p154
    %p157 = scmp.ne.s32.totalorder %s140, %s156
    %p158 = scmp.eq.s32.totalorder %s17, 0
    %p159 = por %p157, %p158
    %p160 = scmp.le.s32.totalorder 1, %s11
    %p161 = scmp.lt.s32.totalorder %s11, 3
    %p162 = pnand %p160, %p161
    %p163 = pneg %p162
    // Predicated region
    $region9: #{resnet1d_forward.18} parent=5 // pred_check
      _
    $region10: #{resnet1d_forward.18} parent=5 // pred_check_branch
      %165 = sbr.rel (%p162) target = $region12
    $region11: #{resnet1d_forward.18} parent=5 // pred_region
      %s166 = ssub.s32 %s11, 1
      // Predicated region
      $region13: #{resnet1d_forward.18} parent=11 // pred_check
        %p167 = pneg %p58
      $region14: #{resnet1d_forward.18} parent=11 // pred_check_branch
        %169 = sbr.rel (%p167) target = $region16
      $region15: #{resnet1d_forward.18} parent=11 // pred_region
        _
      $region16: #{resnet1d_forward.18} parent=11 // pred_fallthru
        _
      // Predicated region
      $region17: #{resnet1d_forward.18} parent=11 // pred_check
        %p170 = pneg %p79
      $region18: #{resnet1d_forward.18} parent=11 // pred_check_branch
        %172 = sbr.rel (%p170) target = $region20
      $region19: #{resnet1d_forward.18} parent=11 // pred_region
        _
      $region20: #{resnet1d_forward.18} parent=11 // pred_fallthru
        _
      // Predicated region
      $region21: #{resnet1d_forward.18} parent=11 // pred_check
        %p173 = pneg %p100
      $region22: #{resnet1d_forward.18} parent=11 // pred_check_branch
        %175 = sbr.rel (%p173) target = $region24
      $region23: #{resnet1d_forward.18} parent=11 // pred_region
        _
      $region24: #{resnet1d_forward.18} parent=11 // pred_fallthru
        _
    $region12: #{resnet1d_forward.18} parent=5 // pred_fallthru
      _
    %p176 = scmp.lt.s32.totalorder %s11, 2
    // Predicated region
    $region25: #{resnet1d_forward.18} parent=5 // pred_check
      %p177 = pneg %p176
    $region26: #{resnet1d_forward.18} parent=5 // pred_check_branch
      %179 = sbr.rel (%p177) target = $region28
    $region27: #{resnet1d_forward.18} parent=5 // pred_region
      // Predicated region
      $region29: #{resnet1d_forward.18} parent=27 // pred_check
        %p180 = pneg %p31
      $region30: #{resnet1d_forward.18} parent=27 // pred_check_branch
        %182 = sbr.rel (%p180) target = $region32
      $region31: #{resnet1d_forward.18} parent=27 // pred_region
        %p183 = scmp.lt.s32.totalorder %s11, 1
        %s184 = scalar_select %p183, %s11, 1
        %s185 = smul.addr %s184, 8
        %s186 = scalar_lea.vmem %s0, %s185
      $region32: #{resnet1d_forward.18} parent=27 // pred_fallthru
        _
      // Predicated region
      $region33: #{resnet1d_forward.18} parent=27 // pred_check
        %p187 = pneg %p120
      $region34: #{resnet1d_forward.18} parent=27 // pred_check_branch
        %189 = sbr.rel (%p187) target = $region36
      $region35: #{resnet1d_forward.18} parent=27 // pred_region
        %p190 = scmp.lt.s32.totalorder %s11, 1
        %s191 = scalar_select %p190, %s11, 1
        %s192 = smul.addr %s191, 8
        %s193 = scalar_lea.vmem %s4, %s192
      $region36: #{resnet1d_forward.18} parent=27 // pred_fallthru
        _
    $region28: #{resnet1d_forward.18} parent=5 // pred_fallthru
      _
    %p194 = scmp.le.s32.totalorder 1, %s11
    %p195 = scmp.lt.s32.totalorder %s11, 3
    %p196 = pnand %p194, %p195
    %p197 = pneg %p196
    // Predicated region
    $region37: #{resnet1d_forward.18} parent=5 // pred_check
      _
    $region38: #{resnet1d_forward.18} parent=5 // pred_check_branch
      %199 = sbr.rel (%p196) target = $region40
    $region39: #{resnet1d_forward.18} parent=5 // pred_region
      %s200 = ssub.s32 %s11, 1
      %p201 = scmp.lt.s32.totalorder %s16, 1
      %s202 = scalar_select %p201, %s16, 1
      %s203 = smul.addr %s202, 8
      %s204 = scalar_lea.vmem %s0, %s203
      %p205 = pneg %p37
      %p206 = pneg %p34
      %p207 = pneg %p58
      %p208 = pneg %p55
      %p209 = pneg %p79
      %p210 = pneg %p76
      %p211 = pneg %p100
      %p212 = pneg %p97
      %p213 = scmp.lt.s32.totalorder %s16, 1
      %s214 = scalar_select %p213, %s16, 1
      %s215 = smul.addr %s214, 8
      %s216 = scalar_lea.vmem %s4, %s215
      %p217 = pneg %p126
      %p218 = pneg %p123
      %p219 = pneg %p152
      %p220 = pneg %p149
      %p221 = scmp.lt.s32.totalorder %s16, 1
      %s222 = scalar_select %p221, %s16, 1
      %s223 = smul.addr %s222, 4
      %s224 = scalar_lea.vmem %s5, %s223
      %p225 = scmp.lt.s32.totalorder %s16, 1
      %s226 = scalar_select %p225, %s16, 1
      %s227 = smul.addr %s226, 8
      %s228 = scalar_lea.vmem %s0, %s227
      %p229 = scmp.lt.s32.totalorder %s16, 1
      %s230 = scalar_select %p229, %s16, 1
      %s231 = smul.addr %s230, 8
      %s232 = scalar_lea.vmem %s4, %s231
      %p233 = scmp.lt.s32.totalorder %s16, 1
      %s234 = scalar_select %p233, %s16, 1
      %s235 = smul.addr %s234, 4
      %s236 = scalar_lea.vmem %s5, %s235
      %v238 = vld [vmem:[%s228] sm:$0xf]
      %v239 = vpack.c.bf16 %v238, %v238
      %v240 = vld [vmem:[%s1] sm:$0xf]
      %v241 = vld [vmem:[%s1 + $0x4] sm:$0xf]
      %v242 = vld [vmem:[%s228 + $0x1] sm:$0xf]
      %v243 = vpack.c.bf16 %v242, %v242
      %s244 = scalar_lea.vmem %s1, 8
      %v245 = vld [vmem:[%s244] sm:$0xf]
      %v246 = vld [vmem:[%s244 + $0x4] sm:$0xf]
      %v249 = vunpack.c.l.b16 %v245
      %v250 = vunpack.c.l.b16 %v246
      %v251 = vpack.c.b16 %v250, %v249
      %vm253 = vcmask 130048
      %v255 = vsel %vm253, %v243, 0
      %257 = vmatprep.subr.bf16.mxu0 0
      %258 = vmatpush1.bf16.msra.mxu0 %v251
      %259 = vmatprep.subr.bf16.mxu0 0
      %260 = vmatpush1.bf16.msra.mxu0 0
      %261 = vmatprep.subr.bf16.mxu0 0
      %262 = vmatpush1.bf16.msra.mxu0 0
      %263 = vmatprep.subr.bf16.mxu0 0
      %264 = vmatpush1.bf16.msra.mxu0 0
      %265 = vmatprep.subr.bf16.mxu0 0
      %266 = vmatpush1.bf16.msra.mxu0 0
      %267 = vmatprep.subr.bf16.mxu0 0
      %268 = vmatpush1.bf16.msra.mxu0 0
      %269 = vmatprep.subr.bf16.mxu0 0
      %270 = vmatpush1.bf16.msra.mxu0 0
      %271 = vmatprep.subr.bf16.mxu0 0
      %272 = vmatpush1.bf16.msra.mxu0 0
      %273 = vmatprep.subr.bf16.mxu0 0
      %274 = vmatpush1.bf16.msra.mxu0 0
      %275 = vmatprep.subr.bf16.mxu0 0
      %276 = vmatpush1.bf16.msra.mxu0 0
      %277 = vmatprep.subr.bf16.mxu0 0
      %278 = vmatpush1.bf16.msra.mxu0 0
      %279 = vmatprep.subr.bf16.mxu0 0
      %280 = vmatpush1.bf16.msra.mxu0 0
      %281 = vmatprep.subr.bf16.mxu0 0
      %282 = vmatpush1.bf16.msra.mxu0 0
      %283 = vmatprep.subr.bf16.mxu0 0
      %284 = vmatpush1.bf16.msra.mxu0 0
      %285 = vmatprep.subr.bf16.mxu0 0
      %286 = vmatpush1.bf16.msra.mxu0 0
      %287 = vmatprep.subr.bf16.mxu0 0
      %288 = vmatpush1.bf16.msra.mxu0 0
      %289 = vmatprep.mubr.bf16.mxu0 0
      %290 = vmatmul.mubr.bf16.gmra.mrb[0].mxu0 %v255
      %v291 = vpop.f32.mrb[0].mxu0
      %v292 = vadd.f32 0.0, %v291
      %v293 = vpop.f32.mrb[0].mxu0
      %v294 = vpop.f32.mrb[0].mxu0
      %v295 = vpop.f32.mrb[0].mxu0
      %296 = vdwg.mxu0
      %v299 = vunpack.c.l.b16 %v240
      %v300 = vunpack.c.l.b16 %v241
      %v301 = vpack.c.b16 %v300, %v299
      %v304 = vsel %vm253, %v239, 0
      %306 = vmatprep.subr.bf16.mxu0 0
      %307 = vmatpush1.bf16.msra.mxu0 %v301
      %308 = vmatprep.subr.bf16.mxu0 0
      %309 = vmatpush1.bf16.msra.mxu0 0
      %310 = vmatprep.subr.bf16.mxu0 0
      %311 = vmatpush1.bf16.msra.mxu0 0
      %312 = vmatprep.subr.bf16.mxu0 0
      %313 = vmatpush1.bf16.msra.mxu0 0
      %314 = vmatprep.subr.bf16.mxu0 0
      %315 = vmatpush1.bf16.msra.mxu0 0
      %316 = vmatprep.subr.bf16.mxu0 0
      %317 = vmatpush1.bf16.msra.mxu0 0
      %318 = vmatprep.subr.bf16.mxu0 0
      %319 = vmatpush1.bf16.msra.mxu0 0
      %320 = vmatprep.subr.bf16.mxu0 0
      %321 = vmatpush1.bf16.msra.mxu0 0
      %322 = vmatprep.subr.bf16.mxu0 0
      %323 = vmatpush1.bf16.msra.mxu0 0
      %324 = vmatprep.subr.bf16.mxu0 0
      %325 = vmatpush1.bf16.msra.mxu0 0
      %326 = vmatprep.subr.bf16.mxu0 0
      %327 = vmatpush1.bf16.msra.mxu0 0
      %328 = vmatprep.subr.bf16.mxu0 0
      %329 = vmatpush1.bf16.msra.mxu0 0
      %330 = vmatprep.subr.bf16.mxu0 0
      %331 = vmatpush1.bf16.msra.mxu0 0
      %332 = vmatprep.subr.bf16.mxu0 0
      %333 = vmatpush1.bf16.msra.mxu0 0
      %334 = vmatprep.subr.bf16.mxu0 0
      %335 = vmatpush1.bf16.msra.mxu0 0
      %336 = vmatprep.subr.bf16.mxu0 0
      %337 = vmatpush1.bf16.msra.mxu0 0
      %338 = vmatprep.mubr.bf16.mxu0 0
      %339 = vmatmul.mubr.bf16.gmra.mrb[0].mxu0 %v304
      %v340 = vpop.f32.mrb[0].mxu0
      %v341 = vadd.f32 %v292, %v340
      %v342 = vpop.f32.mrb[0].mxu0
      %v343 = vpop.f32.mrb[0].mxu0
      %v344 = vpop.f32.mrb[0].mxu0
      %345 = vdwg.mxu0
      %v346 = vld [vmem:[%s228 + $0x2] sm:$0xf]
      %v347 = vpack.c.bf16 %v346, %v346
      %s348 = scalar_lea.vmem %s1, 16
      %v349 = vld [vmem:[%s348] sm:$0xf]
      %v350 = vld [vmem:[%s348 + $0x4] sm:$0xf]
      %v353 = vunpack.c.l.b16 %v349
      %v354 = vunpack.c.l.b16 %v350
      %v355 = vpack.c.b16 %v354, %v353
      %v358 = vsel %vm253, %v347, 0
      %360 = vmatprep.subr.bf16.mxu0 0
      %361 = vmatpush1.bf16.msra.mxu0 %v355
      %362 = vmatprep.subr.bf16.mxu0 0
      %363 = vmatpush1.bf16.msra.mxu0 0
      %364 = vmatprep.subr.bf16.mxu0 0
      %365 = vmatpush1.bf16.msra.mxu0 0
      %366 = vmatprep.subr.bf16.mxu0 0
      %367 = vmatpush1.bf16.msra.mxu0 0
      %368 = vmatprep.subr.bf16.mxu0 0
      %369 = vmatpush1.bf16.msra.mxu0 0
      %370 = vmatprep.subr.bf16.mxu0 0
      %371 = vmatpush1.bf16.msra.mxu0 0
      %372 = vmatprep.subr.bf16.mxu0 0
      %373 = vmatpush1.bf16.msra.mxu0 0
      %374 = vmatprep.subr.bf16.mxu0 0
      %375 = vmatpush1.bf16.msra.mxu0 0
      %376 = vmatprep.subr.bf16.mxu0 0
      %377 = vmatpush1.bf16.msra.mxu0 0
      %378 = vmatprep.subr.bf16.mxu0 0
      %379 = vmatpush1.bf16.msra.mxu0 0
      %380 = vmatprep.subr.bf16.mxu0 0
      %381 = vmatpush1.bf16.msra.mxu0 0
      %382 = vmatprep.subr.bf16.mxu0 0
      %383 = vmatpush1.bf16.msra.mxu0 0
      %384 = vmatprep.subr.bf16.mxu0 0
      %385 = vmatpush1.bf16.msra.mxu0 0
      %386 = vmatprep.subr.bf16.mxu0 0
      %387 = vmatpush1.bf16.msra.mxu0 0
      %388 = vmatprep.subr.bf16.mxu0 0
      %389 = vmatpush1.bf16.msra.mxu0 0
      %390 = vmatprep.subr.bf16.mxu0 0
      %391 = vmatpush1.bf16.msra.mxu0 0
      %392 = vmatprep.mubr.bf16.mxu0 0
      %393 = vmatmul.mubr.bf16.gmra.mrb[0].mxu0 %v358
      %v394 = vpop.f32.mrb[0].mxu0
      %v395 = vadd.f32 0.0, %v394
      %v396 = vpop.f32.mrb[0].mxu0
      %v397 = vpop.f32.mrb[0].mxu0
      %v398 = vpop.f32.mrb[0].mxu0
      %399 = vdwg.mxu0
      %v400 = vadd.f32 %v341, %v395
      %v401 = vld [vmem:[%s2] sm:$0x1]
      %v403 = vlaneseq
      %v404 = vshrl.u32 %v403, 7
      %v405 = vsub.s32 0, %v404
      %v406 = vrot.slane %v401, %v405
      %v408 = vmul.f32 %v400, %v406
      %v409 = vld [vmem:[%s3] sm:$0x1]
      %v411 = vlaneseq
      %v412 = vshrl.u32 %v411, 7
      %v413 = vsub.s32 0, %v412
      %v414 = vrot.slane %v409, %v413
      %v416 = vadd.f32 %v408, %v414
      %v417 = vld [vmem:[%s232] ss:$2 sm:$0xf]
      %s418 = scalar_lea.vmem %s232, 1
      %v419 = vld [vmem:[%s418] ss:$2 sm:$0xf]
      %v420 = vmax.f32 %v417, %v419
      %v421 = vadd.f32 %v416, %v420
      %vm422 = vcmask 125952
      %423 = vst.msk [vmem:[%s236] sm:$0xf] %vm422, %v421
      %p424 = scmp.lt.s32.totalorder %s16, 1
      %s425 = scalar_select %p424, %s16, 1
      %s426 = smul.addr %s425, 4
      %s427 = scalar_lea.vmem %s5, %s426
      // Predicated region
      $region41: #{resnet1d_forward.18} parent=39 // pred_check
        %p428 = pneg %p149
      $region42: #{resnet1d_forward.18} parent=39 // pred_check_branch
        %430 = sbr.rel (%p428) target = $region44
      $region43: #{resnet1d_forward.18} parent=39 // pred_region
        _
      $region44: #{resnet1d_forward.18} parent=39 // pred_fallthru
        _
    $region40: #{resnet1d_forward.18} parent=5 // pred_fallthru
      _
    %p431 = scmp.le.s32.totalorder 2, %s11
    // Predicated region
    $region45: #{resnet1d_forward.18} parent=5 // pred_check
      %p432 = pneg %p431
    $region46: #{resnet1d_forward.18} parent=5 // pred_check_branch
      %434 = sbr.rel (%p432) target = $region48
    $region47: #{resnet1d_forward.18} parent=5 // pred_region
      %s435 = ssub.s32 %s11, 2
      // Predicated region
      $region49: #{resnet1d_forward.18} parent=47 // pred_check
        %p436 = pneg %p155
      $region50: #{resnet1d_forward.18} parent=47 // pred_check_branch
        %438 = sbr.rel (%p436) target = $region52
      $region51: #{resnet1d_forward.18} parent=47 // pred_region
        %p439 = scmp.lt.s32.totalorder %s17, 1
        %s440 = scalar_select %p439, %s17, 1
        %s441 = smul.addr %s440, 4
        %s442 = scalar_lea.vmem %s5, %s441
      $region52: #{resnet1d_forward.18} parent=47 // pred_fallthru
        _
    $region48: #{resnet1d_forward.18} parent=5 // pred_fallthru
      _
  $region6: #{resnet1d_forward.18} parent=0 // loop_footer
    %s15 = sadd.s32 1, %s11
  $region7: #{resnet1d_forward.18} parent=0 // loop_footer_branch
    %10 = sbr.rel target = $region3
  $region8: #{resnet1d_forward.18} parent=0 // loop_exit
    _

// kernel: resnet1d_forward.19
$region0: #{resnet1d_forward.19}
  #allocation0 [shape = 'u32[]', space=smem, size = 0x4, offset = 0x4, fixed_abs, tag = 'smem constant byte address 0x4 - core index']
  #allocation1 [shape = 'u32[144,128]{1,0:T(1,128)}', space=vmem, size = 0x12000, scoped, tag = 'internal scratch']
  %s0 = inlined_call_operand.vmem [shape: f32[2,4,16], index: 0, kind: input, shape index: {}]
  %s1 = inlined_call_operand.vmem [shape: f32[1,1,16], index: 1, kind: input, shape index: {}]
  %s2 = inlined_call_operand.vmem [shape: f32[1,1,16], index: 2, kind: input, shape index: {}]
  %s3 = inlined_call_operand.vmem [shape: f32[16,3], index: 3, kind: input, shape index: {}]
  %s4 = inlined_call_operand.vmem [shape: f32[1,3], index: 4, kind: input, shape index: {}]
  %s5 = inlined_call_operand.hbm [shape: f32[2,3], index: 5, kind: output, shape index: {}]
  %s6 = sld [smem:[#allocation0]]
  $region30: #{resnet1d_forward.19} parent=0
    _
  %s8 = ssub.s32 1, %s6
  %s9 = scalar_select 0, %s8, %s6
  $region1: #{resnet1d_forward.19} parent=0
    #allocation2 [shape = 'u8[1024]{0}', space=vmem, size = 0x400, scoped, tag = 'output window, operand 0, single buffered']
    #allocation3 [shape = 's32[1]{0}', space=sflag, size = 0x4, scoped, tag = 'scoped memory for resnet1d_forward.19']
    %10 = vsyncpa [#allocation3], 0
    // Predicated region
    $region2: #{resnet1d_forward.19} parent=1 // pred_check
      _
    $region3: #{resnet1d_forward.19} parent=1 // pred_check_branch
      %12 = sbr.rel (0) target = $region5
    $region4: #{resnet1d_forward.19} parent=1 // pred_region
      _
    $region5: #{resnet1d_forward.19} parent=1 // pred_fallthru
      _
    // Predicated region
    $region6: #{resnet1d_forward.19} parent=1 // pred_check
      _
    $region7: #{resnet1d_forward.19} parent=1 // pred_check_branch
      %14 = sbr.rel (0) target = $region9
    $region8: #{resnet1d_forward.19} parent=1 // pred_region
      _
    $region9: #{resnet1d_forward.19} parent=1 // pred_fallthru
      _
    // Predicated region
    $region10: #{resnet1d_forward.19} parent=1 // pred_check
      _
    $region11: #{resnet1d_forward.19} parent=1 // pred_check_branch
      %16 = sbr.rel (0) target = $region13
    $region12: #{resnet1d_forward.19} parent=1 // pred_region
      _
    $region13: #{resnet1d_forward.19} parent=1 // pred_fallthru
      _
    // Predicated region
    $region14: #{resnet1d_forward.19} parent=1 // pred_check
      _
    $region15: #{resnet1d_forward.19} parent=1 // pred_check_branch
      %18 = sbr.rel (0) target = $region17
    $region16: #{resnet1d_forward.19} parent=1 // pred_region
      _
    $region17: #{resnet1d_forward.19} parent=1 // pred_fallthru
      _
    // Predicated region
    $region18: #{resnet1d_forward.19} parent=1 // pred_check
      _
    $region19: #{resnet1d_forward.19} parent=1 // pred_check_branch
      %20 = sbr.rel (0) target = $region21
    $region20: #{resnet1d_forward.19} parent=1 // pred_region
      _
    $region21: #{resnet1d_forward.19} parent=1 // pred_fallthru
      _
    %v21 = vld [vmem:[%s0] sm:$0xf]
    %v22 = vld [vmem:[%s0 + $0x4] sm:$0xf]
    %v23 = vld [vmem:[%s1] sm:$0x1]
    %v25 = vlaneseq
    %v26 = vshrl.u32 %v25, 7
    %v27 = vsub.s32 0, %v26
    %v28 = vrot.slane %v23, %v27
    %v30 = vmul.f32 %v21, %v28
    %v31 = vmul.f32 %v22, %v28
    %v32 = vld [vmem:[%s2] sm:$0x1]
    %v34 = vlaneseq
    %v35 = vshrl.u32 %v34, 7
    %v36 = vsub.s32 0, %v35
    %v37 = vrot.slane %v32, %v36
    %v39 = vadd.f32 %v30, %v37
    %v40 = vadd.f32 %v31, %v37
    %v41 = vmax.f32 %v39, 0.0
    %v42 = vmax.f32 %v40, 0.0
    %vm43 = vcmask 125952
    %v44 = vsel %vm43, %v41, 0.0
    %v45 = vrot.slane %v44, 4
    %v46 = vadd.f32 %v44, %v45
    %v47 = vrot.slane %v46, 2
    %v48 = vadd.f32 %v46, %v47
    %v49 = vrot.slane %v48, 1
    %v50 = vadd.f32 %v48, %v49
    %v51 = vsel %vm43, %v42, 0.0
    %v52 = vrot.slane %v51, 4
    %v53 = vadd.f32 %v51, %v52
    %v54 = vrot.slane %v53, 2
    %v55 = vadd.f32 %v53, %v54
    %v56 = vrot.slane %v55, 1
    %v57 = vadd.f32 %v55, %v56
    %v58 = vmul.f32 %v50, 0.25
    %v59 = vmul.f32 %v57, 0.25
    %v60 = vld [vmem:[%s3] sm:$0xff]
    %v61 = vld [vmem:[%s3 + $0x8] sm:$0xff]
    %v62 = vld [vmem:[%s4] sm:$0x1]
    %v64 = vlaneseq
    %v65 = vshrl.u32 %v64, 7
    %v66 = vsub.s32 0, %v65
    %v67 = vrot.slane %v62, %v66
    %vm71 = vcmask 1041409
    %v72 = vsel %vm71, %v59, %v58
    %vm73 = vcmask 130048
    %v74 = vsel %vm73, %v72, 0
    %76 = vmatprep.subr.mxu0 0.0
    %77 = vmatpush1.msra.mxu0 %v60
    %78 = vmatprep.subr.mxu0 0.0
    %79 = vmatpush1.msra.mxu0 %v61
    %80 = vmatprep.subr.mxu0 0.0
    %81 = vmatpush1.msra.mxu0 0.0
    %82 = vmatprep.subr.mxu0 0.0
    %83 = vmatpush1.msra.mxu0 0.0
    %84 = vmatprep.subr.mxu0 0.0
    %85 = vmatpush1.msra.mxu0 0.0
    %86 = vmatprep.subr.mxu0 0.0
    %87 = vmatpush1.msra.mxu0 0.0
    %88 = vmatprep.subr.mxu0 0.0
    %89 = vmatpush1.msra.mxu0 0.0
    %90 = vmatprep.subr.mxu0 0.0
    %91 = vmatpush1.msra.mxu0 0.0
    %92 = vmatprep.subr.mxu0 0.0
    %93 = vmatpush1.msra.mxu0 0.0
    %94 = vmatprep.subr.mxu0 0.0
    %95 = vmatpush1.msra.mxu0 0.0
    %96 = vmatprep.subr.mxu0 0.0
    %97 = vmatpush1.msra.mxu0 0.0
    %98 = vmatprep.subr.mxu0 0.0
    %99 = vmatpush1.msra.mxu0 0.0
    %100 = vmatprep.subr.mxu0 0.0
    %101 = vmatpush1.msra.mxu0 0.0
    %102 = vmatprep.subr.mxu0 0.0
    %103 = vmatpush1.msra.mxu0 0.0
    %104 = vmatprep.subr.mxu0 0.0
    %105 = vmatpush1.msra.mxu0 0.0
    %106 = vmatprep.subr.mxu0 0.0
    %107 = vmatpush1.msra.mxu0 0.0
    %108 = vmatprep.subr.mxu0 0.0
    %109 = vmatpush1.msra.mxu0 0.0
    %110 = vmatprep.subr.mxu0 0.0
    %111 = vmatpush1.msra.mxu0 0.0
    %112 = vmatprep.subr.mxu0 0.0
    %113 = vmatpush1.msra.mxu0 0.0
    %114 = vmatprep.subr.mxu0 0.0
    %115 = vmatpush1.msra.mxu0 0.0
    %116 = vmatprep.subr.mxu0 0.0
    %117 = vmatpush1.msra.mxu0 0.0
    %118 = vmatprep.subr.mxu0 0.0
    %119 = vmatpush1.msra.mxu0 0.0
    %120 = vmatprep.subr.mxu0 0.0
    %121 = vmatpush1.msra.mxu0 0.0
    %122 = vmatprep.subr.mxu0 0.0
    %123 = vmatpush1.msra.mxu0 0.0
    %124 = vmatprep.subr.mxu0 0.0
    %125 = vmatpush1.msra.mxu0 0.0
    %126 = vmatprep.subr.mxu0 0.0
    %127 = vmatpush1.msra.mxu0 0.0
    %128 = vmatprep.subr.mxu0 0.0
    %129 = vmatpush1.msra.mxu0 0.0
    %130 = vmatprep.subr.mxu0 0.0
    %131 = vmatpush1.msra.mxu0 0.0
    %132 = vmatprep.subr.mxu0 0.0
    %133 = vmatpush1.msra.mxu0 0.0
    %134 = vmatprep.subr.mxu0 0.0
    %135 = vmatpush1.msra.mxu0 0.0
    %136 = vmatprep.subr.mxu0 0.0
    %137 = vmatpush1.msra.mxu0 0.0
    %138 = vmatprep.subr.mxu0 0.0
    %139 = vmatpush1.msra.mxu0 0.0
    %140 = vmatprep.mubr.f32.mxu0 0.0
    %141 = vmatmul.mubr.f32.gmra.mrb[0].mxu0 %v74
    %v142 = vpop.f32.mrb[0].mxu0
    %v143 = vadd.f32 %v67, %v142
    %v144 = vpop.f32.mrb[0].mxu0
    %145 = vdwg.mxu0
    %vm146 = vcmask 17408
    %147 = vst.msk [vmem:[#allocation2] sm:$0x3] %vm146, %v143
    // Predicated region
    $region22: #{resnet1d_forward.19} parent=1 // pred_check
      _
    $region23: #{resnet1d_forward.19} parent=1 // pred_check_branch
      %149 = sbr.rel (0) target = $region25
    $region24: #{resnet1d_forward.19} parent=1 // pred_region
      %s151 = ssub.s32 32, 32
      %152 = vsyncadd [#allocation3], %s151
      %s154 = sshll.u32 [#allocation2], 4
      %s155 = int_to_ptr.vmem [resolvable:$true] %s154
      %157 = dma.vmem_to_hbm [thread:$0]  %s155, 32, %s5, [#allocation3]
    $region25: #{resnet1d_forward.19} parent=1 // pred_fallthru
      _
    // Predicated region
    $region26: #{resnet1d_forward.19} parent=1 // pred_check
      _
    $region27: #{resnet1d_forward.19} parent=1 // pred_check_branch
      %159 = sbr.rel (0) target = $region29
    $region28: #{resnet1d_forward.19} parent=1 // pred_region
      %160 = dma.done [#allocation3], 32
    $region29: #{resnet1d_forward.19} parent=1 // pred_fallthru
      _
    %161 = vsyncpa [#allocation3], 1

// kernel: resnet1d_forward.16
$region0: #{resnet1d_forward.16}
  #allocation0 [shape = 'u32[]', space=smem, size = 0x4, offset = 0x4, fixed_abs, tag = 'smem constant byte address 0x4 - core index']
  #allocation1 [shape = 'u32[144,128]{1,0:T(1,128)}', space=vmem, size = 0x12000, scoped, tag = 'internal scratch']
  %s0 = inlined_call_operand.vmem [shape: f32[2,10,16], index: 0, kind: input, shape index: {}]
  %s1 = inlined_call_operand.vmem [shape: bf16[3,16,16], index: 1, kind: input, shape index: {}]
  %s2 = inlined_call_operand.vmem [shape: f32[1,16], index: 2, kind: input, shape index: {}]
  %s3 = inlined_call_operand.vmem [shape: f32[1,16], index: 3, kind: input, shape index: {}]
  %s4 = inlined_call_operand.vmem [shape: f32[2,8,8], index: 4, kind: input, shape index: {}]
  %s5 = inlined_call_operand.vmem [shape: f32[8,16], index: 5, kind: input, shape index: {}]
  %s6 = inlined_call_operand.vmem [shape: f32[2,8,16], index: 6, kind: output, shape index: {}]
  %s7 = sld [smem:[#allocation0]]
  $region57: #{resnet1d_forward.16} parent=0
    _
  %s9 = ssub.s32 1, %s7
  %s10 = scalar_select 0, %s9, %s7
  loop: start=0, step=1, limit=4
  $region2: #{resnet1d_forward.16} parent=0 // loop_pre_header
    _
  $region3: #{resnet1d_forward.16} parent=0 // loop_header
    %s12 = sphi 0, %s16
    %p13 = scmp.ge.s32.totalorder %s12, 4
    %s22 = sphi 0, %s24
    %s25 = sphi 0, %s22
    %s26 = sphi 0, %s25
    %s42 = sphi 0, %s26
    %s46 = sphi 0, %s46
    %s48 = sphi 0, %s46
    %s49 = sphi 0, %s48
    %s63 = sphi 0, %s49
    %s67 = sphi 0, %s67
    %s69 = sphi 0, %s67
    %s70 = sphi 0, %s69
    %s84 = sphi 0, %s70
    %s88 = sphi 0, %s88
    %s90 = sphi 0, %s88
    %s91 = sphi 0, %s90
    %s105 = sphi 0, %s91
    %s111 = sphi 0, %s113
    %s114 = sphi 0, %s111
    %s115 = sphi 0, %s114
    %s131 = sphi 0, %s115
    %s135 = sphi 0, %s135
    %s137 = sphi 0, %s135
    %s138 = sphi 0, %s137
    %s152 = sphi 0, %s138
    %s158 = sphi 0, %s160
    %s161 = sphi 0, %s158
    %s162 = sphi 0, %s161
    %s178 = sphi 0, %s162
  $region4: #{resnet1d_forward.16} parent=0 // loop_header_branch
    %15 = sbr.rel (%p13) target = $region8
  $region5: #{resnet1d_forward.16} parent=0 // loop_body
    %s17 = ssub.s32 %s12, 1
    %s18 = ssub.s32 %s12, 2
    %s19 = sadd.s32 %s12, 1
    %s20 = ssub.s32 %s12, %s19
    %p21 = scmp.eq.s32.totalorder %s20, 0
    %s23 = sadd.s32 %s22, 1
    %s24 = scalar_select %p21, %s22, %s23
    %p27 = pneg %p21
    %p28 = scmp.eq.s32.totalorder %s12, 1
    %p29 = por %p27, %p28
    %p30 = scmp.ne.s32.totalorder %s22, %s25
    %p31 = scmp.eq.s32.totalorder %s12, 0
    %p32 = por %p30, %p31
    %p33 = scmp.ne.s32.totalorder %s22, %s25
    %p34 = scmp.eq.s32.totalorder %s17, 1
    %p35 = por %p33, %p34
    %p36 = scmp.ne.s32.totalorder %s25, %s26
    %p37 = scmp.eq.s32.totalorder %s17, 0
    %p38 = por %p36, %p37
    %p39 = scmp.ne.s32.totalorder %s25, %s26
    %p40 = scmp.eq.s32.totalorder %s18, 1
    %p41 = por %p39, %p40
    %p43 = scmp.ne.s32.totalorder %s26, %s42
    %p44 = scmp.eq.s32.totalorder %s18, 0
    %p45 = por %p43, %p44
    %s47 = sadd.s32 %s46, 1
    %p50 = scmp.eq.s32.totalorder %s12, 1
    %p51 = scmp.ne.s32.totalorder %s46, %s48
    %p52 = scmp.eq.s32.totalorder %s12, 0
    %p53 = por %p51, %p52
    %p54 = scmp.ne.s32.totalorder %s46, %s48
    %p55 = scmp.eq.s32.totalorder %s17, 1
    %p56 = por %p54, %p55
    %p57 = scmp.ne.s32.totalorder %s48, %s49
    %p58 = scmp.eq.s32.totalorder %s17, 0
    %p59 = por %p57, %p58
    %p60 = scmp.ne.s32.totalorder %s48, %s49
    %p61 = scmp.eq.s32.totalorder %s18, 1
    %p62 = por %p60, %p61
    %p64 = scmp.ne.s32.totalorder %s49, %s63
    %p65 = scmp.eq.s32.totalorder %s18, 0
    %p66 = por %p64, %p65
    %s68 = sadd.s32 %s67, 1
    %p71 = scmp.eq.s32.totalorder %s12, 1
    %p72 = scmp.ne.s32.totalorder %s67, %s69
    %p73 = scmp.eq.s32.totalorder %s12, 0
    %p74 = por %p72, %p73
    %p75 = scmp.ne.s32.totalorder %s67, %s69
    %p76 = scmp.eq.s32.totalorder %s17, 1
    %p77 = por %p75, %p76
    %p78 = scmp.ne.s32.totalorder %s69, %s70
    %p79 = scmp.eq.s32.totalorder %s17, 0
    %p80 = por %p78, %p79
    %p81 = scmp.ne.s32.totalorder %s69, %s70
    %p82 = scmp.eq.s32.totalorder %s18, 1
    %p83 = por %p81, %p82
    %p85 = scmp.ne.s32.totalorder %s70, %s84
    %p86 = scmp.eq.s32.totalorder %s18, 0
    %p87 = por %p85, %p86
    %s89 = sadd.s32 %s88, 1
    %p92 = scmp.eq.s32.totalorder %s12, 1
    %p93 = scmp.ne.s32.totalorder %s88, %s90
    %p94 = scmp.eq.s32.totalorder %s12, 0
    %p95 = por %p93, %p94
    %p96 = scmp.ne.s32.totalorder %s88, %s90
    %p97 = scmp.eq.s32.totalorder %s17, 1
    %p98 = por %p96, %p97
    %p99 = scmp.ne.s32.totalorder %s90, %s91
    %p100 = scmp.eq.s32.totalorder %s17, 0
    %p101 = por %p99, %p100
    %p102 = scmp.ne.s32.totalorder %s90, %s91
    %p103 = scmp.eq.s32.totalorder %s18, 1
    %p104 = por %p102, %p103
    %p106 = scmp.ne.s32.totalorder %s91, %s105
    %p107 = scmp.eq.s32.totalorder %s18, 0
    %p108 = por %p106, %p107
    %s109 = ssub.s32 %s12, %s19
    %p110 = scmp.eq.s32.totalorder %s109, 0
    %s112 = sadd.s32 %s111, 1
    %s113 = scalar_select %p110, %s111, %s112
    %p116 = pneg %p110
    %p117 = scmp.eq.s32.totalorder %s12, 1
    %p118 = por %p116, %p117
    %p119 = scmp.ne.s32.totalorder %s111, %s114
    %p120 = scmp.eq.s32.totalorder %s12, 0
    %p121 = por %p119, %p120
    %p122 = scmp.ne.s32.totalorder %s111, %s114
    %p123 = scmp.eq.s32.totalorder %s17, 1
    %p124 = por %p122, %p123
    %p125 = scmp.ne.s32.totalorder %s114, %s115
    %p126 = scmp.eq.s32.totalorder %s17, 0
    %p127 = por %p125, %p126
    %p128 = scmp.ne.s32.totalorder %s114, %s115
    %p129 = scmp.eq.s32.totalorder %s18, 1
    %p130 = por %p128, %p129
    %p132 = scmp.ne.s32.totalorder %s115, %s131
    %p133 = scmp.eq.s32.totalorder %s18, 0
    %p134 = por %p132, %p133
    %s136 = sadd.s32 %s135, 1
    %p139 = scmp.eq.s32.totalorder %s12, 1
    %p140 = scmp.ne.s32.totalorder %s135, %s137
    %p141 = scmp.eq.s32.totalorder %s12, 0
    %p142 = por %p140, %p141
    %p143 = scmp.ne.s32.totalorder %s135, %s137
    %p144 = scmp.eq.s32.totalorder %s17, 1
    %p145 = por %p143, %p144
    %p146 = scmp.ne.s32.totalorder %s137, %s138
    %p147 = scmp.eq.s32.totalorder %s17, 0
    %p148 = por %p146, %p147
    %p149 = scmp.ne.s32.totalorder %s137, %s138
    %p150 = scmp.eq.s32.totalorder %s18, 1
    %p151 = por %p149, %p150
    %p153 = scmp.ne.s32.totalorder %s138, %s152
    %p154 = scmp.eq.s32.totalorder %s18, 0
    %p155 = por %p153, %p154
    %s156 = ssub.s32 %s12, %s19
    %p157 = scmp.eq.s32.totalorder %s156, 0
    %s159 = sadd.s32 %s158, 1
    %s160 = scalar_select %p157, %s158, %s159
    %p163 = pneg %p157
    %p164 = scmp.eq.s32.totalorder %s12, 1
    %p165 = por %p163, %p164
    %p166 = scmp.ne.s32.totalorder %s158, %s161
    %p167 = scmp.eq.s32.totalorder %s12, 0
    %p168 = por %p166, %p167
    %p169 = scmp.ne.s32.totalorder %s158, %s161
    %p170 = scmp.eq.s32.totalorder %s17, 1
    %p171 = por %p169, %p170
    %p172 = scmp.ne.s32.totalorder %s161, %s162
    %p173 = scmp.eq.s32.totalorder %s17, 0
    %p174 = por %p172, %p173
    %p175 = scmp.ne.s32.totalorder %s161, %s162
    %p176 = scmp.eq.s32.totalorder %s18, 1
    %p177 = por %p175, %p176
    %p179 = scmp.ne.s32.totalorder %s162, %s178
    %p180 = scmp.eq.s32.totalorder %s18, 0
    %p181 = por %p179, %p180
    %p182 = scmp.le.s32.totalorder 1, %s12
    %p183 = scmp.lt.s32.totalorder %s12, 3
    %p184 = pnand %p182, %p183
    %p185 = pneg %p184
    // Predicated region
    $region9: #{resnet1d_forward.16} parent=5 // pred_check
      _
    $region10: #{resnet1d_forward.16} parent=5 // pred_check_branch
      %187 = sbr.rel (%p184) target = $region12
    $region11: #{resnet1d_forward.16} parent=5 // pred_region
      %s188 = ssub.s32 %s12, 1
      // Predicated region
      $region13: #{resnet1d_forward.16} parent=11 // pred_check
        %p189 = pneg %p59
      $region14: #{resnet1d_forward.16} parent=11 // pred_check_branch
        %191 = sbr.rel (%p189) target = $region16
      $region15: #{resnet1d_forward.16} parent=11 // pred_region
        _
      $region16: #{resnet1d_forward.16} parent=11 // pred_fallthru
        _
      // Predicated region
      $region17: #{resnet1d_forward.16} parent=11 // pred_check
        %p192 = pneg %p80
      $region18: #{resnet1d_forward.16} parent=11 // pred_check_branch
        %194 = sbr.rel (%p192) target = $region20
      $region19: #{resnet1d_forward.16} parent=11 // pred_region
        _
      $region20: #{resnet1d_forward.16} parent=11 // pred_fallthru
        _
      // Predicated region
      $region21: #{resnet1d_forward.16} parent=11 // pred_check
        %p195 = pneg %p101
      $region22: #{resnet1d_forward.16} parent=11 // pred_check_branch
        %197 = sbr.rel (%p195) target = $region24
      $region23: #{resnet1d_forward.16} parent=11 // pred_region
        _
      $region24: #{resnet1d_forward.16} parent=11 // pred_fallthru
        _
      // Predicated region
      $region25: #{resnet1d_forward.16} parent=11 // pred_check
        %p198 = pneg %p148
      $region26: #{resnet1d_forward.16} parent=11 // pred_check_branch
        %200 = sbr.rel (%p198) target = $region28
      $region27: #{resnet1d_forward.16} parent=11 // pred_region
        _
      $region28: #{resnet1d_forward.16} parent=11 // pred_fallthru
        _
    $region12: #{resnet1d_forward.16} parent=5 // pred_fallthru
      _
    %p201 = scmp.lt.s32.totalorder %s12, 2
    // Predicated region
    $region29: #{resnet1d_forward.16} parent=5 // pred_check
      %p202 = pneg %p201
    $region30: #{resnet1d_forward.16} parent=5 // pred_check_branch
      %204 = sbr.rel (%p202) target = $region32
    $region31: #{resnet1d_forward.16} parent=5 // pred_region
      // Predicated region
      $region33: #{resnet1d_forward.16} parent=31 // pred_check
        %p205 = pneg %p32
      $region34: #{resnet1d_forward.16} parent=31 // pred_check_branch
        %207 = sbr.rel (%p205) target = $region36
      $region35: #{resnet1d_forward.16} parent=31 // pred_region
        %p208 = scmp.lt.s32.totalorder %s12, 1
        %s209 = scalar_select %p208, %s12, 1
        %s210 = smul.addr %s209, 2
        %s211 = smul.addr %s210, 8
        %s212 = scalar_lea.vmem %s0, %s211
      $region36: #{resnet1d_forward.16} parent=31 // pred_fallthru
        _
      // Predicated region
      $region37: #{resnet1d_forward.16} parent=31 // pred_check
        %p213 = pneg %p121
      $region38: #{resnet1d_forward.16} parent=31 // pred_check_branch
        %215 = sbr.rel (%p213) target = $region40
      $region39: #{resnet1d_forward.16} parent=31 // pred_region
        %p216 = scmp.lt.s32.totalorder %s12, 1
        %s217 = scalar_select %p216, %s12, 1
        %s218 = smul.addr %s217, 8
        %s219 = scalar_lea.vmem %s4, %s218
      $region40: #{resnet1d_forward.16} parent=31 // pred_fallthru
        _
    $region32: #{resnet1d_forward.16} parent=5 // pred_fallthru
      _
    %p220 = scmp.le.s32.totalorder 1, %s12
    %p221 = scmp.lt.s32.totalorder %s12, 3
    %p222 = pnand %p220, %p221
    %p223 = pneg %p222
    // Predicated region
    $region41: #{resnet1d_forward.16} parent=5 // pred_check
      _
    $region42: #{resnet1d_forward.16} parent=5 // pred_check_branch
      %225 = sbr.rel (%p222) target = $region44
    $region43: #{resnet1d_forward.16} parent=5 // pred_region
      %s226 = ssub.s32 %s12, 1
      %p227 = scmp.lt.s32.totalorder %s17, 1
      %s228 = scalar_select %p227, %s17, 1
      %s229 = smul.addr %s228, 2
      %s230 = smul.addr %s229, 8
      %s231 = scalar_lea.vmem %s0, %s230
      %p232 = pneg %p38
      %p233 = pneg %p35
      %p234 = pneg %p59
      %p235 = pneg %p56
      %p236 = pneg %p80
      %p237 = pneg %p77
      %p238 = pneg %p101
      %p239 = pneg %p98
      %p240 = scmp.lt.s32.totalorder %s17, 1
      %s241 = scalar_select %p240, %s17, 1
      %s242 = smul.addr %s241, 8
      %s243 = scalar_lea.vmem %s4, %s242
      %p244 = pneg %p127
      %p245 = pneg %p124
      %p246 = pneg %p148
      %p247 = pneg %p145
      %p248 = pneg %p174
      %p249 = pneg %p171
      %p250 = scmp.lt.s32.totalorder %s17, 1
      %s251 = scalar_select %p250, %s17, 1
      %s252 = smul.addr %s251, 8
      %s253 = scalar_lea.vmem %s6, %s252
      %p254 = scmp.lt.s32.totalorder %s17, 1
      %s255 = scalar_select %p254, %s17, 1
      %s256 = smul.addr %s255, 2
      %s257 = smul.addr %s256, 8
      %s258 = scalar_lea.vmem %s0, %s257
      %p259 = scmp.lt.s32.totalorder %s17, 1
      %s260 = scalar_select %p259, %s17, 1
      %s261 = smul.addr %s260, 8
      %s262 = scalar_lea.vmem %s4, %s261
      %p263 = scmp.lt.s32.totalorder %s17, 1
      %s264 = scalar_select %p263, %s17, 1
      %s265 = smul.addr %s264, 8
      %s266 = scalar_lea.vmem %s6, %s265
      %v268 = vld [vmem:[%s258] sm:$0xff]
      %v269 = vpack.c.bf16 %v268, %v268
      %v270 = vld [vmem:[%s1] sm:$0xf]
      %v271 = vld [vmem:[%s1 + $0x4] sm:$0xf]
      %v272 = vld [vmem:[%s258 + $0x1] sm:$0xff]
      %v273 = vpack.c.bf16 %v272, %v272
      %s274 = scalar_lea.vmem %s1, 8
      %v275 = vld [vmem:[%s274] sm:$0xf]
      %v276 = vld [vmem:[%s274 + $0x4] sm:$0xf]
      %v279 = vunpack.c.l.b16 %v275
      %v280 = vunpack.c.l.b16 %v276
      %v281 = vpack.c.b16 %v280, %v279
      %vm283 = vcmask 130048
      %v285 = vsel %vm283, %v273, 0
      %287 = vmatprep.subr.bf16.mxu0 0
      %288 = vmatpush1.bf16.msra.mxu0 %v281
      %289 = vmatprep.subr.bf16.mxu0 0
      %290 = vmatpush1.bf16.msra.mxu0 0
      %291 = vmatprep.subr.bf16.mxu0 0
      %292 = vmatpush1.bf16.msra.mxu0 0
      %293 = vmatprep.subr.bf16.mxu0 0
      %294 = vmatpush1.bf16.msra.mxu0 0
      %295 = vmatprep.subr.bf16.mxu0 0
      %296 = vmatpush1.bf16.msra.mxu0 0
      %297 = vmatprep.subr.bf16.mxu0 0
      %298 = vmatpush1.bf16.msra.mxu0 0
      %299 = vmatprep.subr.bf16.mxu0 0
      %300 = vmatpush1.bf16.msra.mxu0 0
      %301 = vmatprep.subr.bf16.mxu0 0
      %302 = vmatpush1.bf16.msra.mxu0 0
      %303 = vmatprep.subr.bf16.mxu0 0
      %304 = vmatpush1.bf16.msra.mxu0 0
      %305 = vmatprep.subr.bf16.mxu0 0
      %306 = vmatpush1.bf16.msra.mxu0 0
      %307 = vmatprep.subr.bf16.mxu0 0
      %308 = vmatpush1.bf16.msra.mxu0 0
      %309 = vmatprep.subr.bf16.mxu0 0
      %310 = vmatpush1.bf16.msra.mxu0 0
      %311 = vmatprep.subr.bf16.mxu0 0
      %312 = vmatpush1.bf16.msra.mxu0 0
      %313 = vmatprep.subr.bf16.mxu0 0
      %314 = vmatpush1.bf16.msra.mxu0 0
      %315 = vmatprep.subr.bf16.mxu0 0
      %316 = vmatpush1.bf16.msra.mxu0 0
      %317 = vmatprep.subr.bf16.mxu0 0
      %318 = vmatpush1.bf16.msra.mxu0 0
      %319 = vmatprep.mubr.bf16.mxu0 0
      %320 = vmatmul.mubr.bf16.gmra.mrb[0].mxu0 %v285
      %v321 = vpop.f32.mrb[0].mxu0
      %v322 = vadd.f32 0.0, %v321
      %v323 = vpop.f32.mrb[0].mxu0
      %v324 = vpop.f32.mrb[0].mxu0
      %v325 = vpop.f32.mrb[0].mxu0
      %326 = vdwg.mxu0
      %v329 = vunpack.c.l.b16 %v270
      %v330 = vunpack.c.l.b16 %v271
      %v331 = vpack.c.b16 %v330, %v329
      %v334 = vsel %vm283, %v269, 0
      %336 = vmatprep.subr.bf16.mxu0 0
      %337 = vmatpush1.bf16.msra.mxu0 %v331
      %338 = vmatprep.subr.bf16.mxu0 0
      %339 = vmatpush1.bf16.msra.mxu0 0
      %340 = vmatprep.subr.bf16.mxu0 0
      %341 = vmatpush1.bf16.msra.mxu0 0
      %342 = vmatprep.subr.bf16.mxu0 0
      %343 = vmatpush1.bf16.msra.mxu0 0
      %344 = vmatprep.subr.bf16.mxu0 0
      %345 = vmatpush1.bf16.msra.mxu0 0
      %346 = vmatprep.subr.bf16.mxu0 0
      %347 = vmatpush1.bf16.msra.mxu0 0
      %348 = vmatprep.subr.bf16.mxu0 0
      %349 = vmatpush1.bf16.msra.mxu0 0
      %350 = vmatprep.subr.bf16.mxu0 0
      %351 = vmatpush1.bf16.msra.mxu0 0
      %352 = vmatprep.subr.bf16.mxu0 0
      %353 = vmatpush1.bf16.msra.mxu0 0
      %354 = vmatprep.subr.bf16.mxu0 0
      %355 = vmatpush1.bf16.msra.mxu0 0
      %356 = vmatprep.subr.bf16.mxu0 0
      %357 = vmatpush1.bf16.msra.mxu0 0
      %358 = vmatprep.subr.bf16.mxu0 0
      %359 = vmatpush1.bf16.msra.mxu0 0
      %360 = vmatprep.subr.bf16.mxu0 0
      %361 = vmatpush1.bf16.msra.mxu0 0
      %362 = vmatprep.subr.bf16.mxu0 0
      %363 = vmatpush1.bf16.msra.mxu0 0
      %364 = vmatprep.subr.bf16.mxu0 0
      %365 = vmatpush1.bf16.msra.mxu0 0
      %366 = vmatprep.subr.bf16.mxu0 0
      %367 = vmatpush1.bf16.msra.mxu0 0
      %368 = vmatprep.mubr.bf16.mxu0 0
      %369 = vmatmul.mubr.bf16.gmra.mrb[0].mxu0 %v334
      %v370 = vpop.f32.mrb[0].mxu0
      %v371 = vadd.f32 %v322, %v370
      %v372 = vpop.f32.mrb[0].mxu0
      %v373 = vpop.f32.mrb[0].mxu0
      %v374 = vpop.f32.mrb[0].mxu0
      %375 = vdwg.mxu0
      %v376 = vld [vmem:[%s258 + $0x2] sm:$0xff]
      %v377 = vpack.c.bf16 %v376, %v376
      %s378 = scalar_lea.vmem %s1, 16
      %v379 = vld [vmem:[%s378] sm:$0xf]
      %v380 = vld [vmem:[%s378 + $0x4] sm:$0xf]
      %v383 = vunpack.c.l.b16 %v379
      %v384 = vunpack.c.l.b16 %v380
      %v385 = vpack.c.b16 %v384, %v383
      %v388 = vsel %vm283, %v377, 0
      %390 = vmatprep.subr.bf16.mxu0 0
      %391 = vmatpush1.bf16.msra.mxu0 %v385
      %392 = vmatprep.subr.bf16.mxu0 0
      %393 = vmatpush1.bf16.msra.mxu0 0
      %394 = vmatprep.subr.bf16.mxu0 0
      %395 = vmatpush1.bf16.msra.mxu0 0
      %396 = vmatprep.subr.bf16.mxu0 0
      %397 = vmatpush1.bf16.msra.mxu0 0
      %398 = vmatprep.subr.bf16.mxu0 0
      %399 = vmatpush1.bf16.msra.mxu0 0
      %400 = vmatprep.subr.bf16.mxu0 0
      %401 = vmatpush1.bf16.msra.mxu0 0
      %402 = vmatprep.subr.bf16.mxu0 0
      %403 = vmatpush1.bf16.msra.mxu0 0
      %404 = vmatprep.subr.bf16.mxu0 0
      %405 = vmatpush1.bf16.msra.mxu0 0
      %406 = vmatprep.subr.bf16.mxu0 0
      %407 = vmatpush1.bf16.msra.mxu0 0
      %408 = vmatprep.subr.bf16.mxu0 0
      %409 = vmatpush1.bf16.msra.mxu0 0
      %410 = vmatprep.subr.bf16.mxu0 0
      %411 = vmatpush1.bf16.msra.mxu0 0
      %412 = vmatprep.subr.bf16.mxu0 0
      %413 = vmatpush1.bf16.msra.mxu0 0
      %414 = vmatprep.subr.bf16.mxu0 0
      %415 = vmatpush1.bf16.msra.mxu0 0
      %416 = vmatprep.subr.bf16.mxu0 0
      %417 = vmatpush1.bf16.msra.mxu0 0
      %418 = vmatprep.subr.bf16.mxu0 0
      %419 = vmatpush1.bf16.msra.mxu0 0
      %420 = vmatprep.subr.bf16.mxu0 0
      %421 = vmatpush1.bf16.msra.mxu0 0
      %422 = vmatprep.mubr.bf16.mxu0 0
      %423 = vmatmul.mubr.bf16.gmra.mrb[0].mxu0 %v388
      %v424 = vpop.f32.mrb[0].mxu0
      %v425 = vadd.f32 0.0, %v424
      %v426 = vpop.f32.mrb[0].mxu0
      %v427 = vpop.f32.mrb[0].mxu0
      %v428 = vpop.f32.mrb[0].mxu0
      %429 = vdwg.mxu0
      %v430 = vadd.f32 %v371, %v425
      %v431 = vld [vmem:[%s2] sm:$0x1]
      %v433 = vlaneseq
      %v434 = vshrl.u32 %v433, 7
      %v435 = vsub.s32 0, %v434
      %v436 = vrot.slane %v431, %v435
      %v438 = vmul.f32 %v430, %v436
      %v439 = vld [vmem:[%s3] sm:$0x1]
      %v441 = vlaneseq
      %v442 = vshrl.u32 %v441, 7
      %v443 = vsub.s32 0, %v442
      %v444 = vrot.slane %v439, %v443
      %v446 = vadd.f32 %v438, %v444
      %v447 = vld [vmem:[%s262] sm:$0xff]
      %v448 = vld [vmem:[%s5] sm:$0xff]
      %vm449 = vcmask 64512
      %v451 = vsel %vm449, %v447, 0
      %453 = vmatprep.subr.mxu0 0.0
      %454 = vmatpush1.msra.mxu0 %v448
      %455 = vmatprep.subr.mxu0 0.0
      %456 = vmatpush1.msra.mxu0 0.0
      %457 = vmatprep.subr.mxu0 0.0
      %458 = vmatpush1.msra.mxu0 0.0
      %459 = vmatprep.subr.mxu0 0.0
      %460 = vmatpush1.msra.mxu0 0.0
      %461 = vmatprep.subr.mxu0 0.0
      %462 = vmatpush1.msra.mxu0 0.0
      %463 = vmatprep.subr.mxu0 0.0
      %464 = vmatpush1.msra.mxu0 0.0
      %465 = vmatprep.subr.mxu0 0.0
      %466 = vmatpush1.msra.mxu0 0.0
      %467 = vmatprep.subr.mxu0 0.0
      %468 = vmatpush1.msra.mxu0 0.0
      %469 = vmatprep.subr.mxu0 0.0
      %470 = vmatpush1.msra.mxu0 0.0
      %471 = vmatprep.subr.mxu0 0.0
      %472 = vmatpush1.msra.mxu0 0.0
      %473 = vmatprep.subr.mxu0 0.0
      %474 = vmatpush1.msra.mxu0 0.0
      %475 = vmatprep.subr.mxu0 0.0
      %476 = vmatpush1.msra.mxu0 0.0
      %477 = vmatprep.subr.mxu0 0.0
      %478 = vmatpush1.msra.mxu0 0.0
      %479 = vmatprep.subr.mxu0 0.0
      %480 = vmatpush1.msra.mxu0 0.0
      %481 = vmatprep.subr.mxu0 0.0
      %482 = vmatpush1.msra.mxu0 0.0
      %483 = vmatprep.subr.mxu0 0.0
      %484 = vmatpush1.msra.mxu0 0.0
      %485 = vmatprep.subr.mxu0 0.0
      %486 = vmatpush1.msra.mxu0 0.0
      %487 = vmatprep.subr.mxu0 0.0
      %488 = vmatpush1.msra.mxu0 0.0
      %489 = vmatprep.subr.mxu0 0.0
      %490 = vmatpush1.msra.mxu0 0.0
      %491 = vmatprep.subr.mxu0 0.0
      %492 = vmatpush1.msra.mxu0 0.0
      %493 = vmatprep.subr.mxu0 0.0
      %494 = vmatpush1.msra.mxu0 0.0
      %495 = vmatprep.subr.mxu0 0.0
      %496 = vmatpush1.msra.mxu0 0.0
      %497 = vmatprep.subr.mxu0 0.0
      %498 = vmatpush1.msra.mxu0 0.0
      %499 = vmatprep.subr.mxu0 0.0
      %500 = vmatpush1.msra.mxu0 0.0
      %501 = vmatprep.subr.mxu0 0.0
      %502 = vmatpush1.msra.mxu0 0.0
      %503 = vmatprep.subr.mxu0 0.0
      %504 = vmatpush1.msra.mxu0 0.0
      %505 = vmatprep.subr.mxu0 0.0
      %506 = vmatpush1.msra.mxu0 0.0
      %507 = vmatprep.subr.mxu0 0.0
      %508 = vmatpush1.msra.mxu0 0.0
      %509 = vmatprep.subr.mxu0 0.0
      %510 = vmatpush1.msra.mxu0 0.0
      %511 = vmatprep.subr.mxu0 0.0
      %512 = vmatpush1.msra.mxu0 0.0
      %513 = vmatprep.subr.mxu0 0.0
      %514 = vmatpush1.msra.mxu0 0.0
      %515 = vmatprep.subr.mxu0 0.0
      %516 = vmatpush1.msra.mxu0 0.0
      %517 = vmatprep.mubr.f32.mxu0 0.0
      %518 = vmatmul.mubr.f32.gmra.mrb[0].mxu0 %v451
      %v519 = vpop.f32.mrb[0].mxu0
      %v520 = vadd.f32 0.0, %v519
      %v521 = vpop.f32.mrb[0].mxu0
      %522 = vdwg.mxu0
      %v523 = vadd.f32 %v446, %v520
      %524 = vst.msk [vmem:[%s266] sm:$0xff] %vm283, %v523
      %p525 = scmp.lt.s32.totalorder %s17, 1
      %s526 = scalar_select %p525, %s17, 1
      %s527 = smul.addr %s526, 8
      %s528 = scalar_lea.vmem %s6, %s527
      // Predicated region
      $region45: #{resnet1d_forward.16} parent=43 // pred_check
        %p529 = pneg %p171
      $region46: #{resnet1d_forward.16} parent=43 // pred_check_branch
        %531 = sbr.rel (%p529) target = $region48
      $region47: #{resnet1d_forward.16} parent=43 // pred_region
        _
      $region48: #{resnet1d_forward.16} parent=43 // pred_fallthru
        _
    $region44: #{resnet1d_forward.16} parent=5 // pred_fallthru
      _
    %p532 = scmp.le.s32.totalorder 2, %s12
    // Predicated region
    $region49: #{resnet1d_forward.16} parent=5 // pred_check
      %p533 = pneg %p532
    $region50: #{resnet1d_forward.16} parent=5 // pred_check_branch
      %535 = sbr.rel (%p533) target = $region52
    $region51: #{resnet1d_forward.16} parent=5 // pred_region
      %s536 = ssub.s32 %s12, 2
      // Predicated region
      $region53: #{resnet1d_forward.16} parent=51 // pred_check
        %p537 = pneg %p177
      $region54: #{resnet1d_forward.16} parent=51 // pred_check_branch
        %539 = sbr.rel (%p537) target = $region56
      $region55: #{resnet1d_forward.16} parent=51 // pred_region
        %p540 = scmp.lt.s32.totalorder %s18, 1
        %s541 = scalar_select %p540, %s18, 1
        %s542 = smul.addr %s541, 8
        %s543 = scalar_lea.vmem %s6, %s542
      $region56: #{resnet1d_forward.16} parent=51 // pred_fallthru
        _
    $region52: #{resnet1d_forward.16} parent=5 // pred_fallthru
      _
  $region6: #{resnet1d_forward.16} parent=0 // loop_footer
    %s16 = sadd.s32 1, %s12
  $region7: #{resnet1d_forward.16} parent=0 // loop_footer_branch
    %11 = sbr.rel target = $region3
  $region8: #{resnet1d_forward.16} parent=0 // loop_exit
    _

// kernel: resnet1d_forward.17
$region0: #{resnet1d_forward.17}
  #allocation0 [shape = 'u32[]', space=smem, size = 0x4, offset = 0x4, fixed_abs, tag = 'smem constant byte address 0x4 - core index']
  #allocation1 [shape = 'u32[144,128]{1,0:T(1,128)}', space=vmem, size = 0x12000, scoped, tag = 'internal scratch']
  %s0 = inlined_call_operand.vmem [shape: f32[2,9,16], index: 0, kind: input, shape index: {}]
  %s1 = inlined_call_operand.vmem [shape: bf16[3,16,16], index: 1, kind: input, shape index: {}]
  %s2 = inlined_call_operand.vmem [shape: f32[1,16], index: 2, kind: input, shape index: {}]
  %s3 = inlined_call_operand.vmem [shape: f32[1,16], index: 3, kind: input, shape index: {}]
  %s4 = inlined_call_operand.vmem [shape: f32[1,16], index: 4, kind: input, shape index: {}]
  %s5 = inlined_call_operand.vmem [shape: f32[1,16], index: 5, kind: input, shape index: {}]
  %s6 = inlined_call_operand.vmem [shape: f32[2,4,16], index: 6, kind: output, shape index: {}]
  %s7 = sld [smem:[#allocation0]]
  $region57: #{resnet1d_forward.17} parent=0
    _
  %s9 = ssub.s32 1, %s7
  %s10 = scalar_select 0, %s9, %s7
  loop: start=0, step=1, limit=4
  $region2: #{resnet1d_forward.17} parent=0 // loop_pre_header
    _
  $region3: #{resnet1d_forward.17} parent=0 // loop_header
    %s12 = sphi 0, %s16
    %p13 = scmp.ge.s32.totalorder %s12, 4
    %s22 = sphi 0, %s24
    %s25 = sphi 0, %s22
    %s26 = sphi 0, %s25
    %s42 = sphi 0, %s26
    %s46 = sphi 0, %s46
    %s48 = sphi 0, %s46
    %s49 = sphi 0, %s48
    %s63 = sphi 0, %s49
    %s67 = sphi 0, %s67
    %s69 = sphi 0, %s67
    %s70 = sphi 0, %s69
    %s84 = sphi 0, %s70
    %s88 = sphi 0, %s88
    %s90 = sphi 0, %s88
    %s91 = sphi 0, %s90
    %s105 = sphi 0, %s91
    %s109 = sphi 0, %s109
    %s111 = sphi 0, %s109
    %s112 = sphi 0, %s111
    %s126 = sphi 0, %s112
    %s130 = sphi 0, %s130
    %s132 = sphi 0, %s130
    %s133 = sphi 0, %s132
    %s147 = sphi 0, %s133
    %s153 = sphi 0, %s155
    %s156 = sphi 0, %s153
    %s157 = sphi 0, %s156
    %s173 = sphi 0, %s157
  $region4: #{resnet1d_forward.17} parent=0 // loop_header_branch
    %15 = sbr.rel (%p13) target = $region8
  $region5: #{resnet1d_forward.17} parent=0 // loop_body
    %s17 = ssub.s32 %s12, 1
    %s18 = ssub.s32 %s12, 2
    %s19 = sadd.s32 %s12, 1
    %s20 = ssub.s32 %s12, %s19
    %p21 = scmp.eq.s32.totalorder %s20, 0
    %s23 = sadd.s32 %s22, 1
    %s24 = scalar_select %p21, %s22, %s23
    %p27 = pneg %p21
    %p28 = scmp.eq.s32.totalorder %s12, 1
    %p29 = por %p27, %p28
    %p30 = scmp.ne.s32.totalorder %s22, %s25
    %p31 = scmp.eq.s32.totalorder %s12, 0
    %p32 = por %p30, %p31
    %p33 = scmp.ne.s32.totalorder %s22, %s25
    %p34 = scmp.eq.s32.totalorder %s17, 1
    %p35 = por %p33, %p34
    %p36 = scmp.ne.s32.totalorder %s25, %s26
    %p37 = scmp.eq.s32.totalorder %s17, 0
    %p38 = por %p36, %p37
    %p39 = scmp.ne.s32.totalorder %s25, %s26
    %p40 = scmp.eq.s32.totalorder %s18, 1
    %p41 = por %p39, %p40
    %p43 = scmp.ne.s32.totalorder %s26, %s42
    %p44 = scmp.eq.s32.totalorder %s18, 0
    %p45 = por %p43, %p44
    %s47 = sadd.s32 %s46, 1
    %p50 = scmp.eq.s32.totalorder %s12, 1
    %p51 = scmp.ne.s32.totalorder %s46, %s48
    %p52 = scmp.eq.s32.totalorder %s12, 0
    %p53 = por %p51, %p52
    %p54 = scmp.ne.s32.totalorder %s46, %s48
    %p55 = scmp.eq.s32.totalorder %s17, 1
    %p56 = por %p54, %p55
    %p57 = scmp.ne.s32.totalorder %s48, %s49
    %p58 = scmp.eq.s32.totalorder %s17, 0
    %p59 = por %p57, %p58
    %p60 = scmp.ne.s32.totalorder %s48, %s49
    %p61 = scmp.eq.s32.totalorder %s18, 1
    %p62 = por %p60, %p61
    %p64 = scmp.ne.s32.totalorder %s49, %s63
    %p65 = scmp.eq.s32.totalorder %s18, 0
    %p66 = por %p64, %p65
    %s68 = sadd.s32 %s67, 1
    %p71 = scmp.eq.s32.totalorder %s12, 1
    %p72 = scmp.ne.s32.totalorder %s67, %s69
    %p73 = scmp.eq.s32.totalorder %s12, 0
    %p74 = por %p72, %p73
    %p75 = scmp.ne.s32.totalorder %s67, %s69
    %p76 = scmp.eq.s32.totalorder %s17, 1
    %p77 = por %p75, %p76
    %p78 = scmp.ne.s32.totalorder %s69, %s70
    %p79 = scmp.eq.s32.totalorder %s17, 0
    %p80 = por %p78, %p79
    %p81 = scmp.ne.s32.totalorder %s69, %s70
    %p82 = scmp.eq.s32.totalorder %s18, 1
    %p83 = por %p81, %p82
    %p85 = scmp.ne.s32.totalorder %s70, %s84
    %p86 = scmp.eq.s32.totalorder %s18, 0
    %p87 = por %p85, %p86
    %s89 = sadd.s32 %s88, 1
    %p92 = scmp.eq.s32.totalorder %s12, 1
    %p93 = scmp.ne.s32.totalorder %s88, %s90
    %p94 = scmp.eq.s32.totalorder %s12, 0
    %p95 = por %p93, %p94
    %p96 = scmp.ne.s32.totalorder %s88, %s90
    %p97 = scmp.eq.s32.totalorder %s17, 1
    %p98 = por %p96, %p97
    %p99 = scmp.ne.s32.totalorder %s90, %s91
    %p100 = scmp.eq.s32.totalorder %s17, 0
    %p101 = por %p99, %p100
    %p102 = scmp.ne.s32.totalorder %s90, %s91
    %p103 = scmp.eq.s32.totalorder %s18, 1
    %p104 = por %p102, %p103
    %p106 = scmp.ne.s32.totalorder %s91, %s105
    %p107 = scmp.eq.s32.totalorder %s18, 0
    %p108 = por %p106, %p107
    %s110 = sadd.s32 %s109, 1
    %p113 = scmp.eq.s32.totalorder %s12, 1
    %p114 = scmp.ne.s32.totalorder %s109, %s111
    %p115 = scmp.eq.s32.totalorder %s12, 0
    %p116 = por %p114, %p115
    %p117 = scmp.ne.s32.totalorder %s109, %s111
    %p118 = scmp.eq.s32.totalorder %s17, 1
    %p119 = por %p117, %p118
    %p120 = scmp.ne.s32.totalorder %s111, %s112
    %p121 = scmp.eq.s32.totalorder %s17, 0
    %p122 = por %p120, %p121
    %p123 = scmp.ne.s32.totalorder %s111, %s112
    %p124 = scmp.eq.s32.totalorder %s18, 1
    %p125 = por %p123, %p124
    %p127 = scmp.ne.s32.totalorder %s112, %s126
    %p128 = scmp.eq.s32.totalorder %s18, 0
    %p129 = por %p127, %p128
    %s131 = sadd.s32 %s130, 1
    %p134 = scmp.eq.s32.totalorder %s12, 1
    %p135 = scmp.ne.s32.totalorder %s130, %s132
    %p136 = scmp.eq.s32.totalorder %s12, 0
    %p137 = por %p135, %p136
    %p138 = scmp.ne.s32.totalorder %s130, %s132
    %p139 = scmp.eq.s32.totalorder %s17, 1
    %p140 = por %p138, %p139
    %p141 = scmp.ne.s32.totalorder %s132, %s133
    %p142 = scmp.eq.s32.totalorder %s17, 0
    %p143 = por %p141, %p142
    %p144 = scmp.ne.s32.totalorder %s132, %s133
    %p145 = scmp.eq.s32.totalorder %s18, 1
    %p146 = por %p144, %p145
    %p148 = scmp.ne.s32.totalorder %s133, %s147
    %p149 = scmp.eq.s32.totalorder %s18, 0
    %p150 = por %p148, %p149
    %s151 = ssub.s32 %s12, %s19
    %p152 = scmp.eq.s32.totalorder %s151, 0
    %s154 = sadd.s32 %s153, 1
    %s155 = scalar_select %p152, %s153, %s154
    %p158 = pneg %p152
    %p159 = scmp.eq.s32.totalorder %s12, 1
    %p160 = por %p158, %p159
    %p161 = scmp.ne.s32.totalorder %s153, %s156
    %p162 = scmp.eq.s32.totalorder %s12, 0
    %p163 = por %p161, %p162
    %p164 = scmp.ne.s32.totalorder %s153, %s156
    %p165 = scmp.eq.s32.totalorder %s17, 1
    %p166 = por %p164, %p165
    %p167 = scmp.ne.s32.totalorder %s156, %s157
    %p168 = scmp.eq.s32.totalorder %s17, 0
    %p169 = por %p167, %p168
    %p170 = scmp.ne.s32.totalorder %s156, %s157
    %p171 = scmp.eq.s32.totalorder %s18, 1
    %p172 = por %p170, %p171
    %p174 = scmp.ne.s32.totalorder %s157, %s173
    %p175 = scmp.eq.s32.totalorder %s18, 0
    %p176 = por %p174, %p175
    %p177 = scmp.le.s32.totalorder 1, %s12
    %p178 = scmp.lt.s32.totalorder %s12, 3
    %p179 = pnand %p177, %p178
    %p180 = pneg %p179
    // Predicated region
    $region9: #{resnet1d_forward.17} parent=5 // pred_check
      _
    $region10: #{resnet1d_forward.17} parent=5 // pred_check_branch
      %182 = sbr.rel (%p179) target = $region12
    $region11: #{resnet1d_forward.17} parent=5 // pred_region
      %s183 = ssub.s32 %s12, 1
      // Predicated region
      $region13: #{resnet1d_forward.17} parent=11 // pred_check
        %p184 = pneg %p59
      $region14: #{resnet1d_forward.17} parent=11 // pred_check_branch
        %186 = sbr.rel (%p184) target = $region16
      $region15: #{resnet1d_forward.17} parent=11 // pred_region
        _
      $region16: #{resnet1d_forward.17} parent=11 // pred_fallthru
        _
      // Predicated region
      $region17: #{resnet1d_forward.17} parent=11 // pred_check
        %p187 = pneg %p80
      $region18: #{resnet1d_forward.17} parent=11 // pred_check_branch
        %189 = sbr.rel (%p187) target = $region20
      $region19: #{resnet1d_forward.17} parent=11 // pred_region
        _
      $region20: #{resnet1d_forward.17} parent=11 // pred_fallthru
        _
      // Predicated region
      $region21: #{resnet1d_forward.17} parent=11 // pred_check
        %p190 = pneg %p101
      $region22: #{resnet1d_forward.17} parent=11 // pred_check_branch
        %192 = sbr.rel (%p190) target = $region24
      $region23: #{resnet1d_forward.17} parent=11 // pred_region
        _
      $region24: #{resnet1d_forward.17} parent=11 // pred_fallthru
        _
      // Predicated region
      $region25: #{resnet1d_forward.17} parent=11 // pred_check
        %p193 = pneg %p122
      $region26: #{resnet1d_forward.17} parent=11 // pred_check_branch
        %195 = sbr.rel (%p193) target = $region28
      $region27: #{resnet1d_forward.17} parent=11 // pred_region
        _
      $region28: #{resnet1d_forward.17} parent=11 // pred_fallthru
        _
      // Predicated region
      $region29: #{resnet1d_forward.17} parent=11 // pred_check
        %p196 = pneg %p143
      $region30: #{resnet1d_forward.17} parent=11 // pred_check_branch
        %198 = sbr.rel (%p196) target = $region32
      $region31: #{resnet1d_forward.17} parent=11 // pred_region
        _
      $region32: #{resnet1d_forward.17} parent=11 // pred_fallthru
        _
    $region12: #{resnet1d_forward.17} parent=5 // pred_fallthru
      _
    %p199 = scmp.lt.s32.totalorder %s12, 2
    // Predicated region
    $region33: #{resnet1d_forward.17} parent=5 // pred_check
      %p200 = pneg %p199
    $region34: #{resnet1d_forward.17} parent=5 // pred_check_branch
      %202 = sbr.rel (%p200) target = $region36
    $region35: #{resnet1d_forward.17} parent=5 // pred_region
      // Predicated region
      $region37: #{resnet1d_forward.17} parent=35 // pred_check
        %p203 = pneg %p32
      $region38: #{resnet1d_forward.17} parent=35 // pred_check_branch
        %205 = sbr.rel (%p203) target = $region40
      $region39: #{resnet1d_forward.17} parent=35 // pred_region
        %p206 = scmp.lt.s32.totalorder %s12, 1
        %s207 = scalar_select %p206, %s12, 1
        %s208 = smul.addr %s207, 2
        %s209 = smul.addr %s208, 8
        %s210 = scalar_lea.vmem %s0, %s209
      $region40: #{resnet1d_forward.17} parent=35 // pred_fallthru
        _
    $region36: #{resnet1d_forward.17} parent=5 // pred_fallthru
      _
    %p211 = scmp.le.s32.totalorder 1, %s12
    %p212 = scmp.lt.s32.totalorder %s12, 3
    %p213 = pnand %p211, %p212
    %p214 = pneg %p213
    // Predicated region
    $region41: #{resnet1d_forward.17} parent=5 // pred_check
      _
    $region42: #{resnet1d_forward.17} parent=5 // pred_check_branch
      %216 = sbr.rel (%p213) target = $region44
    $region43: #{resnet1d_forward.17} parent=5 // pred_region
      %s217 = ssub.s32 %s12, 1
      %p218 = scmp.lt.s32.totalorder %s17, 1
      %s219 = scalar_select %p218, %s17, 1
      %s220 = smul.addr %s219, 2
      %s221 = smul.addr %s220, 8
      %s222 = scalar_lea.vmem %s0, %s221
      %p223 = pneg %p38
      %p224 = pneg %p35
      %p225 = pneg %p59
      %p226 = pneg %p56
      %p227 = pneg %p80
      %p228 = pneg %p77
      %p229 = pneg %p101
      %p230 = pneg %p98
      %p231 = pneg %p122
      %p232 = pneg %p119
      %p233 = pneg %p143
      %p234 = pneg %p140
      %p235 = pneg %p169
      %p236 = pneg %p166
      %p237 = scmp.lt.s32.totalorder %s17, 1
      %s238 = scalar_select %p237, %s17, 1
      %s239 = smul.addr %s238, 4
      %s240 = scalar_lea.vmem %s6, %s239
      %p241 = scmp.lt.s32.totalorder %s17, 1
      %s242 = scalar_select %p241, %s17, 1
      %s243 = smul.addr %s242, 2
      %s244 = smul.addr %s243, 8
      %s245 = scalar_lea.vmem %s0, %s244
      %p246 = scmp.lt.s32.totalorder %s17, 1
      %s247 = scalar_select %p246, %s17, 1
      %s248 = smul.addr %s247, 4
      %s249 = scalar_lea.vmem %s6, %s248
      %v251 = vld [vmem:[%s245] ss:$2 sm:$0xf]
      %v252 = vld [vmem:[%s4] sm:$0x1]
      %v254 = vlaneseq
      %v255 = vshrl.u32 %v254, 7
      %v256 = vsub.s32 0, %v255
      %v257 = vrot.slane %v252, %v256
      %v259 = vmul.f32 %v251, %v257
      %v260 = vld [vmem:[%s5] sm:$0x1]
      %v262 = vlaneseq
      %v263 = vshrl.u32 %v262, 7
      %v264 = vsub.s32 0, %v263
      %v265 = vrot.slane %v260, %v264
      %v267 = vadd.f32 %v259, %v265
      %v268 = vmax.f32 %v267, 0.0
      %v269 = vpack.c.bf16 %v268, %v268
      %v270 = vld [vmem:[%s1] sm:$0xf]
      %v271 = vld [vmem:[%s1 + $0x4] sm:$0xf]
      %s272 = scalar_lea.vmem %s245, 1
      %v273 = vld [vmem:[%s272] ss:$2 sm:$0xf]
      %v274 = vmul.f32 %v273, %v257
      %v275 = vadd.f32 %v274, %v265
      %v276 = vmax.f32 %v275, 0.0
      %v277 = vpack.c.bf16 %v276, %v276
      %s278 = scalar_lea.vmem %s1, 8
      %v279 = vld [vmem:[%s278] sm:$0xf]
      %v280 = vld [vmem:[%s278 + $0x4] sm:$0xf]
      %v283 = vunpack.c.l.b16 %v279
      %v284 = vunpack.c.l.b16 %v280
      %v285 = vpack.c.b16 %v284, %v283
      %vm287 = vcmask 130048
      %v289 = vsel %vm287, %v277, 0
      %291 = vmatprep.subr.bf16.mxu0 0
      %292 = vmatpush1.bf16.msra.mxu0 %v285
      %293 = vmatprep.subr.bf16.mxu0 0
      %294 = vmatpush1.bf16.msra.mxu0 0
      %295 = vmatprep.subr.bf16.mxu0 0
      %296 = vmatpush1.bf16.msra.mxu0 0
      %297 = vmatprep.subr.bf16.mxu0 0
      %298 = vmatpush1.bf16.msra.mxu0 0
      %299 = vmatprep.subr.bf16.mxu0 0
      %300 = vmatpush1.bf16.msra.mxu0 0
      %301 = vmatprep.subr.bf16.mxu0 0
      %302 = vmatpush1.bf16.msra.mxu0 0
      %303 = vmatprep.subr.bf16.mxu0 0
      %304 = vmatpush1.bf16.msra.mxu0 0
      %305 = vmatprep.subr.bf16.mxu0 0
      %306 = vmatpush1.bf16.msra.mxu0 0
      %307 = vmatprep.subr.bf16.mxu0 0
      %308 = vmatpush1.bf16.msra.mxu0 0
      %309 = vmatprep.subr.bf16.mxu0 0
      %310 = vmatpush1.bf16.msra.mxu0 0
      %311 = vmatprep.subr.bf16.mxu0 0
      %312 = vmatpush1.bf16.msra.mxu0 0
      %313 = vmatprep.subr.bf16.mxu0 0
      %314 = vmatpush1.bf16.msra.mxu0 0
      %315 = vmatprep.subr.bf16.mxu0 0
      %316 = vmatpush1.bf16.msra.mxu0 0
      %317 = vmatprep.subr.bf16.mxu0 0
      %318 = vmatpush1.bf16.msra.mxu0 0
      %319 = vmatprep.subr.bf16.mxu0 0
      %320 = vmatpush1.bf16.msra.mxu0 0
      %321 = vmatprep.subr.bf16.mxu0 0
      %322 = vmatpush1.bf16.msra.mxu0 0
      %323 = vmatprep.mubr.bf16.mxu0 0
      %324 = vmatmul.mubr.bf16.gmra.mrb[0].mxu0 %v289
      %v325 = vpop.f32.mrb[0].mxu0
      %v326 = vadd.f32 0.0, %v325
      %v327 = vpop.f32.mrb[0].mxu0
      %v328 = vpop.f32.mrb[0].mxu0
      %v329 = vpop.f32.mrb[0].mxu0
      %330 = vdwg.mxu0
      %v333 = vunpack.c.l.b16 %v270
      %v334 = vunpack.c.l.b16 %v271
      %v335 = vpack.c.b16 %v334, %v333
      %v338 = vsel %vm287, %v269, 0
      %340 = vmatprep.subr.bf16.mxu0 0
      %341 = vmatpush1.bf16.msra.mxu0 %v335
      %342 = vmatprep.subr.bf16.mxu0 0
      %343 = vmatpush1.bf16.msra.mxu0 0
      %344 = vmatprep.subr.bf16.mxu0 0
      %345 = vmatpush1.bf16.msra.mxu0 0
      %346 = vmatprep.subr.bf16.mxu0 0
      %347 = vmatpush1.bf16.msra.mxu0 0
      %348 = vmatprep.subr.bf16.mxu0 0
      %349 = vmatpush1.bf16.msra.mxu0 0
      %350 = vmatprep.subr.bf16.mxu0 0
      %351 = vmatpush1.bf16.msra.mxu0 0
      %352 = vmatprep.subr.bf16.mxu0 0
      %353 = vmatpush1.bf16.msra.mxu0 0
      %354 = vmatprep.subr.bf16.mxu0 0
      %355 = vmatpush1.bf16.msra.mxu0 0
      %356 = vmatprep.subr.bf16.mxu0 0
      %357 = vmatpush1.bf16.msra.mxu0 0
      %358 = vmatprep.subr.bf16.mxu0 0
      %359 = vmatpush1.bf16.msra.mxu0 0
      %360 = vmatprep.subr.bf16.mxu0 0
      %361 = vmatpush1.bf16.msra.mxu0 0
      %362 = vmatprep.subr.bf16.mxu0 0
      %363 = vmatpush1.bf16.msra.mxu0 0
      %364 = vmatprep.subr.bf16.mxu0 0
      %365 = vmatpush1.bf16.msra.mxu0 0
      %366 = vmatprep.subr.bf16.mxu0 0
      %367 = vmatpush1.bf16.msra.mxu0 0
      %368 = vmatprep.subr.bf16.mxu0 0
      %369 = vmatpush1.bf16.msra.mxu0 0
      %370 = vmatprep.subr.bf16.mxu0 0
      %371 = vmatpush1.bf16.msra.mxu0 0
      %372 = vmatprep.mubr.bf16.mxu0 0
      %373 = vmatmul.mubr.bf16.gmra.mrb[0].mxu0 %v338
      %v374 = vpop.f32.mrb[0].mxu0
      %v375 = vadd.f32 %v326, %v374
      %v376 = vpop.f32.mrb[0].mxu0
      %v377 = vpop.f32.mrb[0].mxu0
      %v378 = vpop.f32.mrb[0].mxu0
      %379 = vdwg.mxu0
      %s380 = scalar_lea.vmem %s245, 2
      %v381 = vld [vmem:[%s380] ss:$2 sm:$0xf]
      %v382 = vmul.f32 %v381, %v257
      %v383 = vadd.f32 %v382, %v265
      %v384 = vmax.f32 %v383, 0.0
      %v385 = vpack.c.bf16 %v384, %v384
      %s386 = scalar_lea.vmem %s1, 16
      %v387 = vld [vmem:[%s386] sm:$0xf]
      %v388 = vld [vmem:[%s386 + $0x4] sm:$0xf]
      %v391 = vunpack.c.l.b16 %v387
      %v392 = vunpack.c.l.b16 %v388
      %v393 = vpack.c.b16 %v392, %v391
      %v396 = vsel %vm287, %v385, 0
      %398 = vmatprep.subr.bf16.mxu0 0
      %399 = vmatpush1.bf16.msra.mxu0 %v393
      %400 = vmatprep.subr.bf16.mxu0 0
      %401 = vmatpush1.bf16.msra.mxu0 0
      %402 = vmatprep.subr.bf16.mxu0 0
      %403 = vmatpush1.bf16.msra.mxu0 0
      %404 = vmatprep.subr.bf16.mxu0 0
      %405 = vmatpush1.bf16.msra.mxu0 0
      %406 = vmatprep.subr.bf16.mxu0 0
      %407 = vmatpush1.bf16.msra.mxu0 0
      %408 = vmatprep.subr.bf16.mxu0 0
      %409 = vmatpush1.bf16.msra.mxu0 0
      %410 = vmatprep.subr.bf16.mxu0 0
      %411 = vmatpush1.bf16.msra.mxu0 0
      %412 = vmatprep.subr.bf16.mxu0 0
      %413 = vmatpush1.bf16.msra.mxu0 0
      %414 = vmatprep.subr.bf16.mxu0 0
      %415 = vmatpush1.bf16.msra.mxu0 0
      %416 = vmatprep.subr.bf16.mxu0 0
      %417 = vmatpush1.bf16.msra.mxu0 0
      %418 = vmatprep.subr.bf16.mxu0 0
      %419 = vmatpush1.bf16.msra.mxu0 0
      %420 = vmatprep.subr.bf16.mxu0 0
      %421 = vmatpush1.bf16.msra.mxu0 0
      %422 = vmatprep.subr.bf16.mxu0 0
      %423 = vmatpush1.bf16.msra.mxu0 0
      %424 = vmatprep.subr.bf16.mxu0 0
      %425 = vmatpush1.bf16.msra.mxu0 0
      %426 = vmatprep.subr.bf16.mxu0 0
      %427 = vmatpush1.bf16.msra.mxu0 0
      %428 = vmatprep.subr.bf16.mxu0 0
      %429 = vmatpush1.bf16.msra.mxu0 0
      %430 = vmatprep.mubr.bf16.mxu0 0
      %431 = vmatmul.mubr.bf16.gmra.mrb[0].mxu0 %v396
      %v432 = vpop.f32.mrb[0].mxu0
      %v433 = vadd.f32 0.0, %v432
      %v434 = vpop.f32.mrb[0].mxu0
      %v435 = vpop.f32.mrb[0].mxu0
      %v436 = vpop.f32.mrb[0].mxu0
      %437 = vdwg.mxu0
      %v438 = vadd.f32 %v375, %v433
      %v439 = vld [vmem:[%s2] sm:$0x1]
      %v441 = vlaneseq
      %v442 = vshrl.u32 %v441, 7
      %v443 = vsub.s32 0, %v442
      %v444 = vrot.slane %v439, %v443
      %v446 = vmul.f32 %v438, %v444
      %v447 = vld [vmem:[%s3] sm:$0x1]
      %v449 = vlaneseq
      %v450 = vshrl.u32 %v449, 7
      %v451 = vsub.s32 0, %v450
      %v452 = vrot.slane %v447, %v451
      %v454 = vadd.f32 %v446, %v452
      %v455 = vmax.f32 %v454, 0.0
      %vm456 = vcmask 125952
      %457 = vst.msk [vmem:[%s249] sm:$0xf] %vm456, %v455
      %p458 = scmp.lt.s32.totalorder %s17, 1
      %s459 = scalar_select %p458, %s17, 1
      %s460 = smul.addr %s459, 4
      %s461 = scalar_lea.vmem %s6, %s460
      // Predicated region
      $region45: #{resnet1d_forward.17} parent=43 // pred_check
        %p462 = pneg %p166
      $region46: #{resnet1d_forward.17} parent=43 // pred_check_branch
        %464 = sbr.rel (%p462) target = $region48
      $region47: #{resnet1d_forward.17} parent=43 // pred_region
        _
      $region48: #{resnet1d_forward.17} parent=43 // pred_fallthru
        _
    $region44: #{resnet1d_forward.17} parent=5 // pred_fallthru
      _
    %p465 = scmp.le.s32.totalorder 2, %s12
    // Predicated region
    $region49: #{resnet1d_forward.17} parent=5 // pred_check
      %p466 = pneg %p465
    $region50: #{resnet1d_forward.17} parent=5 // pred_check_branch
      %468 = sbr.rel (%p466) target = $region52
    $region51: #{resnet1d_forward.17} parent=5 // pred_region
      %s469 = ssub.s32 %s12, 2
      // Predicated region
      $region53: #{resnet1d_forward.17} parent=51 // pred_check
        %p470 = pneg %p172
      $region54: #{resnet1d_forward.17} parent=51 // pred_check_branch
        %472 = sbr.rel (%p470) target = $region56
      $region55: #{resnet1d_forward.17} parent=51 // pred_region
        %p473 = scmp.lt.s32.totalorder %s18, 1
        %s474 = scalar_select %p473, %s18, 1
        %s475 = smul.addr %s474, 4
        %s476 = scalar_lea.vmem %s6, %s475
      $region56: #{resnet1d_forward.17} parent=51 // pred_fallthru
        _
    $region52: #{resnet1d_forward.17} parent=5 // pred_fallthru
      _
  $region6: #{resnet1d_forward.17} parent=0 // loop_footer
    %s16 = sadd.s32 1, %s12
  $region7: #{resnet1d_forward.17} parent=0 // loop_footer_branch
    %11 = sbr.rel target = $region3
  $region8: #{resnet1d_forward.17} parent=0 // loop_exit
    _

</llo_original>
